<compile_context>
chip_gen: v6e
topology: v6e:2x2x1
jax: 0.10.0
libtpu: 0.0.40
codegen_flags: <defaults>
</compile_context>

<pallas_src>
import jax
import jax.numpy as jnp
from jax.experimental import pallas as pl
from jax.experimental.pallas import tpu as pltpu

NEG_INF = -1e9
EPS = 1e-12


# --------------------------------------------------------------------------
# Fused kernel: 7 x (GSE3Res + GNormSE3)  +  GConvSE3 + GMaxPooling + FC block.
# One graph per grid step; all weights resident in VMEM via constant index maps.
# --------------------------------------------------------------------------
def _se3_fused_kernel(h0_ref, edge_ref, mask_ref,
                      wnode_ref, wekT_ref, wev_ref, nw_ref, nb_ref,
                      wc_ref, w1_ref, b1_ref, w2_ref, b2_ref,
                      out_ref):
    L, d, _ = wnode_ref.shape          # [L, d, 4d]
    E = wev_ref.shape[1]               # [L, E, d]
    N = h0_ref.shape[1]

    h = h0_ref[0]                      # [N, d]
    edge_t = edge_ref[0]               # [E, N, N]
    mask = mask_ref[0]                 # [N, N]
    mask_bias = jnp.where(mask > 0.0, 0.0, NEG_INF)
    inv_sqrt_d = jnp.float32(1.0) / jnp.sqrt(jnp.float32(d))

    # ---- 7 fused attention + norm layers (static unroll, tiny per-layer work) ----
    for l in range(L):
        # Single lane-dense projection: [N, d] @ [d, 4d] -> q | k | v | self
        proj = jnp.dot(h, wnode_ref[l], preferred_element_type=jnp.float32)   # [N, 4d]
        q = proj[:, 0:d]
        k = proj[:, d:2 * d]
        v = proj[:, 2 * d:3 * d]
        h_self = proj[:, 3 * d:4 * d]

        # Attention logits: node term on MXU, radial/edge term via (q @ Wek^T).e_ij
        qe = jnp.dot(q, wekT_ref[l], preferred_element_type=jnp.float32)      # [N, E]
        logits = jnp.dot(q, k.T, preferred_element_type=jnp.float32)          # [N, N]
        for e_idx in range(E):
            logits = logits + qe[:, e_idx:e_idx + 1] * edge_t[e_idx]
        logits = logits * inv_sqrt_d + mask_bias

        # Masked softmax over neighbors j
        logits = logits - jnp.max(logits, axis=-1, keepdims=True)
        p = jnp.exp(logits) * mask
        attn = p * pl.reciprocal(jnp.sum(p, axis=-1, keepdims=True) + EPS,
                                 approx=True)

        # Message aggregation: node values on MXU, edge values as E rank-1 updates
        msg = jnp.dot(attn, v, preferred_element_type=jnp.float32)            # [N, d]
        wev_l = wev_ref[l]                                                    # [E, d]
        for e_idx in range(E):
            ae = jnp.sum(attn * edge_t[e_idx], axis=-1, keepdims=True)        # [N, 1]
            msg = msg + ae * wev_l[e_idx:e_idx + 1, :]

        h_new = msg + h_self                                                  # GSum residual

        # GNormSE3 (degree-0, num_nlayers=0): sign(h) * ReLU(|h|*w + b)
        sign = jnp.where(h_new > 0.0, 1.0, jnp.where(h_new < 0.0, -1.0, 0.0))
        h = sign * jnp.maximum(jnp.abs(h_new) * nw_ref[l] + nb_ref[l], 0.0)

    # ---- readout epilogue: GConvSE3 (d -> out_dim, self-interaction) + max pool + FC ----
    deg = jnp.sum(mask, axis=-1, keepdims=True)                               # [N, 1]
    nbr = jnp.dot(mask, h, preferred_element_type=jnp.float32)
    nbr = nbr * pl.reciprocal(deg + EPS, approx=True)                         # mean neighbor
    feat = (jnp.dot(h, wc_ref[0:d, :], preferred_element_type=jnp.float32)
            + jnp.dot(nbr, wc_ref[d:2 * d, :], preferred_element_type=jnp.float32))  # [N, 128]

    pooled = jnp.max(feat, axis=0, keepdims=True)                             # GMaxPooling [1, 128]

    hid = jnp.maximum(
        jnp.dot(pooled, w1_ref[...], preferred_element_type=jnp.float32) + b1_ref[...],
        0.0)                                                                  # [1, 128]
    out_ref[0] = (jnp.dot(hid, w2_ref[...], preferred_element_type=jnp.float32)
                  + b2_ref[...])                                              # [1, 1]


def se3_transformer_pallas(h0_pad, edge_t, mask, params):
    B, N, d = h0_pad.shape
    E = edge_t.shape[1]
    L = params['wnode'].shape[0]
    out_dim = params['w1'].shape[0]

    def const_spec(shape):
        return pl.BlockSpec(shape, lambda b, _s=shape: (0,) * len(_s))

    out = pl.pallas_call(
        _se3_fused_kernel,
        out_shape=jax.ShapeDtypeStruct((B, 1, 1), jnp.float32),
        grid=(B,),
        in_specs=[
            pl.BlockSpec((1, N, d), lambda b: (b, 0, 0)),        # h0 (padded)
            pl.BlockSpec((1, E, N, N), lambda b: (b, 0, 0, 0)),  # edge scalars [E,N,N]
            pl.BlockSpec((1, N, N), lambda b: (b, 0, 0)),        # mask
            const_spec((L, d, 4 * d)),                           # Wq|Wk|Wv|Wself stacked
            const_spec((L, d, E)),                               # Wek^T
            const_spec((L, E, d)),                               # Wev
            const_spec((L, 1, d)),                               # norm scale
            const_spec((L, 1, d)),                               # norm bias
            const_spec((2 * d, out_dim)),                        # GConv self | neighbor
            const_spec((out_dim, out_dim)),                      # FC1 weight
            const_spec((1, out_dim)),                            # FC1 bias
            const_spec((out_dim, 1)),                            # FC2 weight
            const_spec((1, 1)),                                  # FC2 bias
        ],
        out_specs=pl.BlockSpec((1, 1, 1), lambda b: (b, 0, 0)),
        compiler_params=pltpu.CompilerParams(
            dimension_semantics=("parallel",)),
    )(h0_pad, edge_t, mask,
      params['wnode'], params['wekT'], params['wev'], params['nw'], params['nb'],
      params['wc'], params['w1'], params['b1'], params['w2'], params['b2'])
    return out.reshape(B, 1)


# --------------------------------------------------------------------------
# Parameter construction (deterministic) and full forward pass.
# --------------------------------------------------------------------------
def _dense(key, shape):
    return (jax.random.normal(key, shape, dtype=jnp.float32)
            / jnp.sqrt(jnp.float32(shape[0])))


def init_params(key, atom_feature_size, num_channels, num_layers,
                num_degrees, edge_dim):
    d = num_channels
    E = edge_dim + 1
    out_dim = num_degrees * num_channels

    wnode, wekT, wev, nw, nb = [], [], [], [], []
    cin = atom_feature_size
    for _ in range(num_layers):
        key, *ks = jax.random.split(key, 7)
        wq = _dense(ks[0], (cin, d))
        wk = _dense(ks[1], (cin, d))
        wv = _dense(ks[2], (cin, d))
        wek = _dense(ks[3], (E, d))
        wev_l = _dense(ks[4], (E, d))
        wself = _dense(ks[5], (cin, d))
        w_cat = jnp.concatenate([wq, wk, wv, wself], axis=1)     # [cin, 4d]
        if cin < d:                                              # zero-pad layer-0 rows -> [d, 4d]
            w_cat = jnp.pad(w_cat, ((0, d - cin), (0, 0)))
        wnode.append(w_cat)
        wekT.append(wek.T)
        wev.append(wev_l)
        nw.append(jnp.ones((1, d), jnp.float32))
        nb.append(jnp.zeros((1, d), jnp.float32))
        cin = d

    key, *ks = jax.random.split(key, 5)
    return {
        'wnode': jnp.stack(wnode),                               # [L, d, 4d]
        'wekT': jnp.stack(wekT),                                 # [L, d, E]
        'wev': jnp.stack(wev),                                   # [L, E, d]
        'nw': jnp.stack(nw),                                     # [L, 1, d]
        'nb': jnp.stack(nb),                                     # [L, 1, d]
        'wc': jnp.concatenate([_dense(ks[0], (d, out_dim)),      # GConv self-interaction
                               _dense(ks[1], (d, out_dim))],     # GConv neighbor term
                              axis=0),                           # [2d, out_dim]
        'w1': _dense(ks[2], (out_dim, out_dim)),
        'b1': jnp.zeros((1, out_dim), jnp.float32),
        'w2': _dense(ks[3], (out_dim, 1)),
        'b2': jnp.zeros((1, 1), jnp.float32),
    }


def se3_transformer_forward(h0, coords, edge_feat, params):
    """h0: [B,N,F_in] node scalar features; coords: [B,N,3]; edge_feat: [B,N,N,edge_dim]."""
    B, N, f_in = h0.shape
    d = params['wnode'].shape[1]

    # get_basis_and_r: only the radial part r is reproducible without the
    # equivariant basis.  TODO(synk): spherical-harmonic basis omitted.
    rel = coords[:, None, :, :] - coords[:, :, None, :]                    # [B,N,N,3]
    r = jnp.sqrt(jnp.sum(rel * rel, axis=-1, keepdims=True) + EPS)         # [B,N,N,1]
    edge_scalar = jnp.concatenate([edge_feat, r], axis=-1)                 # [B,N,N,E]
    edge_t = jnp.transpose(edge_scalar, (0, 3, 1, 2)).astype(jnp.float32)  # [B,E,N,N]

    mask = jnp.tile((1.0 - jnp.eye(N, dtype=jnp.float32))[None], (B, 1, 1))  # no self-edges

    h0 = h0.astype(jnp.float32)
    if f_in < d:                                                           # pad channels to d
        h0 = jnp.pad(h0, ((0, 0), (0, 0), (0, d - f_in)))

    return se3_transformer_pallas(h0, edge_t, mask, params)


if __name__ == "__main__":
    # Hyperparameters matching the module defaults.
    num_channels = 32
    num_degrees = 4
    num_layers = 7
    edge_dim = 4
    atom_feature_size = 16

    B, N = 2, 8  # 2 small random graphs with 8 nodes each

    key = jax.random.PRNGKey(0)
    kp, kh, kx, ke = jax.random.split(key, 4)

    params = init_params(kp, atom_feature_size, num_channels, num_layers,
                         num_degrees, edge_dim)

    h0 = jax.random.normal(kh, (B, N, atom_feature_size), dtype=jnp.float32)
    coords = jax.random.normal(kx, (B, N, 3), dtype=jnp.float32)
    edge_feat = jax.random.normal(ke, (B, N, N, edge_dim), dtype=jnp.float32)

    fwd = jax.jit(se3_transformer_forward)
    out = fwd(h0, coords, edge_feat, params)
    out = jax.block_until_ready(out)
    assert out.shape == (B, 1) and out.dtype == jnp.float32
    print("KERNEL_OK")
</pallas_src>

<mosaic_0001>
module attributes {stable_mosaic.version = 11 : i64} {
  func.func @_se3_fused_kernel(%arg0: i32, %arg1: memref<1x8x32xf32, #tpu.memory_space<vmem>>, %arg2: memref<1x5x8x8xf32, #tpu.memory_space<vmem>>, %arg3: memref<1x8x8xf32, #tpu.memory_space<vmem>>, %arg4: memref<7x32x128xf32, #tpu.memory_space<vmem>>, %arg5: memref<7x32x5xf32, #tpu.memory_space<vmem>>, %arg6: memref<7x5x32xf32, #tpu.memory_space<vmem>>, %arg7: memref<7x1x32xf32, #tpu.memory_space<vmem>>, %arg8: memref<7x1x32xf32, #tpu.memory_space<vmem>>, %arg9: memref<64x128xf32, #tpu.memory_space<vmem>>, %arg10: memref<128x128xf32, #tpu.memory_space<vmem>>, %arg11: memref<1x128xf32, #tpu.memory_space<vmem>>, %arg12: memref<128x1xf32, #tpu.memory_space<vmem>>, %arg13: memref<1x1xf32, #tpu.memory_space<vmem>>, %arg14: memref<1x1x1xf32, #tpu.memory_space<vmem>>) attributes {dimension_semantics = [#tpu.dimension_semantics<parallel>], iteration_bounds = array<i64: 2>, scalar_prefetch = 0 : i64, scratch_operands = 0 : i64, tpu.core_type = #tpu.core_type<tc>, window_params = [{transform_indices = @transform_0, window_bounds = array<i64: 1, 8, 32>}, {transform_indices = @transform_1, window_bounds = array<i64: 1, 5, 8, 8>}, {transform_indices = @transform_2, window_bounds = array<i64: 1, 8, 8>}, {pipeline_mode = #tpu.pipeline_mode<synchronous>, transform_indices = @transform_3, window_bounds = array<i64: 7, 32, 128>}, {pipeline_mode = #tpu.pipeline_mode<synchronous>, transform_indices = @transform_4, window_bounds = array<i64: 7, 32, 5>}, {pipeline_mode = #tpu.pipeline_mode<synchronous>, transform_indices = @transform_5, window_bounds = array<i64: 7, 5, 32>}, {pipeline_mode = #tpu.pipeline_mode<synchronous>, transform_indices = @transform_6, window_bounds = array<i64: 7, 1, 32>}, {pipeline_mode = #tpu.pipeline_mode<synchronous>, transform_indices = @transform_7, window_bounds = array<i64: 7, 1, 32>}, {pipeline_mode = #tpu.pipeline_mode<synchronous>, transform_indices = @transform_8, window_bounds = array<i64: 64, 128>}, {pipeline_mode = #tpu.pipeline_mode<synchronous>, transform_indices = @transform_9, window_bounds = array<i64: 128, 128>}, {pipeline_mode = #tpu.pipeline_mode<synchronous>, transform_indices = @transform_10, window_bounds = array<i64: 1, 128>}, {pipeline_mode = #tpu.pipeline_mode<synchronous>, transform_indices = @transform_11, window_bounds = array<i64: 128, 1>}, {pipeline_mode = #tpu.pipeline_mode<synchronous>, transform_indices = @transform_12, window_bounds = array<i64: 1, 1>}, {transform_indices = @transform_13, window_bounds = array<i64: 1, 1, 1>}]} {
    %c0 = arith.constant 0 : index
    %c0_0 = arith.constant 0 : index
    %c0_1 = arith.constant 0 : index
    %0 = vector.load %arg1[%c0, %c0_0, %c0_1] : memref<1x8x32xf32, #tpu.memory_space<vmem>>, vector<1x8x32xf32>
    %1 = vector.shape_cast %0 : vector<1x8x32xf32> to vector<8x32xf32>
    %c0_2 = arith.constant 0 : index
    %c0_3 = arith.constant 0 : index
    %c0_4 = arith.constant 0 : index
    %c0_5 = arith.constant 0 : index
    %2 = vector.load %arg2[%c0_2, %c0_3, %c0_4, %c0_5] : memref<1x5x8x8xf32, #tpu.memory_space<vmem>>, vector<1x5x8x8xf32>
    %3 = vector.shape_cast %2 : vector<1x5x8x8xf32> to vector<5x8x8xf32>
    %c0_6 = arith.constant 0 : index
    %c0_7 = arith.constant 0 : index
    %c0_8 = arith.constant 0 : index
    %4 = vector.load %arg3[%c0_6, %c0_7, %c0_8] : memref<1x8x8xf32, #tpu.memory_space<vmem>>, vector<1x8x8xf32>
    %5 = vector.shape_cast %4 : vector<1x8x8xf32> to vector<8x8xf32>
    %cst = arith.constant 0.000000e+00 : f32
    %6 = vector.broadcast %cst : f32 to vector<8x8xf32>
    %7 = arith.cmpf ogt, %5, %6 : vector<8x8xf32>
    %cst_9 = arith.constant 0.000000e+00 : f32
    %cst_10 = arith.constant -1.000000e+09 : f32
    %8 = vector.broadcast %cst_9 : f32 to vector<8x8xf32>
    %9 = vector.broadcast %cst_10 : f32 to vector<8x8xf32>
    %10 = arith.select %7, %8, %9 : vector<8x8xi1>, vector<8x8xf32>
    %cst_11 = arith.constant 3.200000e+01 : f32
    %11 = math.sqrt %cst_11 : f32
    %cst_12 = arith.constant 1.000000e+00 : f32
    %12 = arith.divf %cst_12, %11 : f32
    %c0_13 = arith.constant 0 : index
    %c0_14 = arith.constant 0 : index
    %c0_15 = arith.constant 0 : index
    %13 = vector.load %arg4[%c0_13, %c0_14, %c0_15] : memref<7x32x128xf32, #tpu.memory_space<vmem>>, vector<1x32x128xf32>
    %14 = vector.shape_cast %13 : vector<1x32x128xf32> to vector<32x128xf32>
    %cst_16 = arith.constant dense<0.000000e+00> : vector<8x128xf32>
    %15 = tpu.matmul %1, %14, %cst_16 {dimension_numbers = #tpu.dot_dimension_numbers<[1], [0], [0], [1], [0, 0, 1, 1], [], []>} : vector<8x32xf32>, vector<32x128xf32>, vector<8x128xf32> -> vector<8x128xf32>
    %16 = vector.extract_strided_slice %15 {offsets = [0, 0], sizes = [8, 32], strides = [1, 1]} : vector<8x128xf32> to vector<8x32xf32>
    %17 = vector.extract_strided_slice %15 {offsets = [0, 32], sizes = [8, 32], strides = [1, 1]} : vector<8x128xf32> to vector<8x32xf32>
    %18 = vector.extract_strided_slice %15 {offsets = [0, 64], sizes = [8, 32], strides = [1, 1]} : vector<8x128xf32> to vector<8x32xf32>
    %19 = vector.extract_strided_slice %15 {offsets = [0, 96], sizes = [8, 32], strides = [1, 1]} : vector<8x128xf32> to vector<8x32xf32>
    %c0_17 = arith.constant 0 : index
    %c0_18 = arith.constant 0 : index
    %c0_19 = arith.constant 0 : index
    %20 = vector.load %arg5[%c0_17, %c0_18, %c0_19] : memref<7x32x5xf32, #tpu.memory_space<vmem>>, vector<1x32x5xf32>
    %21 = vector.shape_cast %20 : vector<1x32x5xf32> to vector<32x5xf32>
    %cst_20 = arith.constant dense<0.000000e+00> : vector<8x5xf32>
    %22 = tpu.matmul %16, %21, %cst_20 {dimension_numbers = #tpu.dot_dimension_numbers<[1], [0], [0], [1], [0, 0, 1, 1], [], []>} : vector<8x32xf32>, vector<32x5xf32>, vector<8x5xf32> -> vector<8x5xf32>
    %23 = tpu.transpose %17, [1, 0] : vector<8x32xf32> -> vector<32x8xf32>
    %cst_21 = arith.constant dense<0.000000e+00> : vector<8x8xf32>
    %24 = tpu.matmul %16, %23, %cst_21 {dimension_numbers = #tpu.dot_dimension_numbers<[1], [0], [0], [1], [0, 0, 1, 1], [], []>} : vector<8x32xf32>, vector<32x8xf32>, vector<8x8xf32> -> vector<8x8xf32>
    %25 = vector.extract_strided_slice %22 {offsets = [0, 0], sizes = [8, 1], strides = [1, 1]} : vector<8x5xf32> to vector<8x1xf32>
    %26 = vector.extract_strided_slice %3 {offsets = [0, 0, 0], sizes = [1, 8, 8], strides = [1, 1, 1]} : vector<5x8x8xf32> to vector<1x8x8xf32>
    %27 = vector.shape_cast %26 : vector<1x8x8xf32> to vector<8x8xf32>
    %28 = vector.broadcast %25 : vector<8x1xf32> to vector<8x8xf32>
    %29 = arith.mulf %28, %27 : vector<8x8xf32>
    %30 = arith.addf %24, %29 : vector<8x8xf32>
    %31 = vector.extract_strided_slice %22 {offsets = [0, 1], sizes = [8, 1], strides = [1, 1]} : vector<8x5xf32> to vector<8x1xf32>
    %32 = vector.extract_strided_slice %3 {offsets = [1, 0, 0], sizes = [1, 8, 8], strides = [1, 1, 1]} : vector<5x8x8xf32> to vector<1x8x8xf32>
    %33 = vector.shape_cast %32 : vector<1x8x8xf32> to vector<8x8xf32>
    %34 = vector.broadcast %31 : vector<8x1xf32> to vector<8x8xf32>
    %35 = arith.mulf %34, %33 : vector<8x8xf32>
    %36 = arith.addf %30, %35 : vector<8x8xf32>
    %37 = vector.extract_strided_slice %22 {offsets = [0, 2], sizes = [8, 1], strides = [1, 1]} : vector<8x5xf32> to vector<8x1xf32>
    %38 = vector.extract_strided_slice %3 {offsets = [2, 0, 0], sizes = [1, 8, 8], strides = [1, 1, 1]} : vector<5x8x8xf32> to vector<1x8x8xf32>
    %39 = vector.shape_cast %38 : vector<1x8x8xf32> to vector<8x8xf32>
    %40 = vector.broadcast %37 : vector<8x1xf32> to vector<8x8xf32>
    %41 = arith.mulf %40, %39 : vector<8x8xf32>
    %42 = arith.addf %36, %41 : vector<8x8xf32>
    %43 = vector.extract_strided_slice %22 {offsets = [0, 3], sizes = [8, 1], strides = [1, 1]} : vector<8x5xf32> to vector<8x1xf32>
    %44 = vector.extract_strided_slice %3 {offsets = [3, 0, 0], sizes = [1, 8, 8], strides = [1, 1, 1]} : vector<5x8x8xf32> to vector<1x8x8xf32>
    %45 = vector.shape_cast %44 : vector<1x8x8xf32> to vector<8x8xf32>
    %46 = vector.broadcast %43 : vector<8x1xf32> to vector<8x8xf32>
    %47 = arith.mulf %46, %45 : vector<8x8xf32>
    %48 = arith.addf %42, %47 : vector<8x8xf32>
    %49 = vector.extract_strided_slice %22 {offsets = [0, 4], sizes = [8, 1], strides = [1, 1]} : vector<8x5xf32> to vector<8x1xf32>
    %50 = vector.extract_strided_slice %3 {offsets = [4, 0, 0], sizes = [1, 8, 8], strides = [1, 1, 1]} : vector<5x8x8xf32> to vector<1x8x8xf32>
    %51 = vector.shape_cast %50 : vector<1x8x8xf32> to vector<8x8xf32>
    %52 = vector.broadcast %49 : vector<8x1xf32> to vector<8x8xf32>
    %53 = arith.mulf %52, %51 : vector<8x8xf32>
    %54 = arith.addf %48, %53 : vector<8x8xf32>
    %55 = vector.broadcast %12 : f32 to vector<8x8xf32>
    %56 = arith.mulf %54, %55 : vector<8x8xf32>
    %57 = arith.addf %56, %10 : vector<8x8xf32>
    %cst_22 = arith.constant dense<0xFF800000> : vector<8xf32>
    %58 = vector.multi_reduction <maximumf>, %57, %cst_22 [1] : vector<8x8xf32> to vector<8xf32>
    %59 = vector.shape_cast %58 : vector<8xf32> to vector<8x1xf32>
    %60 = vector.broadcast %59 : vector<8x1xf32> to vector<8x8xf32>
    %61 = arith.subf %57, %60 : vector<8x8xf32>
    %62 = math.exp %61 : vector<8x8xf32>
    %63 = arith.mulf %62, %5 : vector<8x8xf32>
    %cst_23 = arith.constant dense<0.000000e+00> : vector<8xf32>
    %64 = vector.multi_reduction <add>, %63, %cst_23 [1] : vector<8x8xf32> to vector<8xf32>
    %65 = vector.shape_cast %64 : vector<8xf32> to vector<8x1xf32>
    %cst_24 = arith.constant 9.99999996E-13 : f32
    %66 = vector.broadcast %cst_24 : f32 to vector<8x1xf32>
    %67 = arith.addf %65, %66 : vector<8x1xf32>
    %68 = tpu.reciprocal %67 {approx = true} : vector<8x1xf32> -> vector<8x1xf32>
    %69 = vector.broadcast %68 : vector<8x1xf32> to vector<8x8xf32>
    %70 = arith.mulf %63, %69 : vector<8x8xf32>
    %cst_25 = arith.constant dense<0.000000e+00> : vector<8x32xf32>
    %71 = tpu.matmul %70, %18, %cst_25 {dimension_numbers = #tpu.dot_dimension_numbers<[1], [0], [0], [1], [0, 0, 1, 1], [], []>} : vector<8x8xf32>, vector<8x32xf32>, vector<8x32xf32> -> vector<8x32xf32>
    %c0_26 = arith.constant 0 : index
    %c0_27 = arith.constant 0 : index
    %c0_28 = arith.constant 0 : index
    %72 = vector.load %arg6[%c0_26, %c0_27, %c0_28] : memref<7x5x32xf32, #tpu.memory_space<vmem>>, vector<1x5x32xf32>
    %73 = vector.shape_cast %72 : vector<1x5x32xf32> to vector<5x32xf32>
    %74 = vector.extract_strided_slice %3 {offsets = [0, 0, 0], sizes = [1, 8, 8], strides = [1, 1, 1]} : vector<5x8x8xf32> to vector<1x8x8xf32>
    %75 = vector.shape_cast %74 : vector<1x8x8xf32> to vector<8x8xf32>
    %76 = arith.mulf %70, %75 : vector<8x8xf32>
    %cst_29 = arith.constant dense<0.000000e+00> : vector<8xf32>
    %77 = vector.multi_reduction <add>, %76, %cst_29 [1] : vector<8x8xf32> to vector<8xf32>
    %78 = vector.shape_cast %77 : vector<8xf32> to vector<8x1xf32>
    %79 = vector.extract_strided_slice %73 {offsets = [0, 0], sizes = [1, 32], strides = [1, 1]} : vector<5x32xf32> to vector<1x32xf32>
    %80 = vector.broadcast %78 : vector<8x1xf32> to vector<8x32xf32>
    %81 = vector.broadcast %79 : vector<1x32xf32> to vector<8x32xf32>
    %82 = arith.mulf %80, %81 : vector<8x32xf32>
    %83 = arith.addf %71, %82 : vector<8x32xf32>
    %84 = vector.extract_strided_slice %3 {offsets = [1, 0, 0], sizes = [1, 8, 8], strides = [1, 1, 1]} : vector<5x8x8xf32> to vector<1x8x8xf32>
    %85 = vector.shape_cast %84 : vector<1x8x8xf32> to vector<8x8xf32>
    %86 = arith.mulf %70, %85 : vector<8x8xf32>
    %cst_30 = arith.constant dense<0.000000e+00> : vector<8xf32>
    %87 = vector.multi_reduction <add>, %86, %cst_30 [1] : vector<8x8xf32> to vector<8xf32>
    %88 = vector.shape_cast %87 : vector<8xf32> to vector<8x1xf32>
    %89 = vector.extract_strided_slice %73 {offsets = [1, 0], sizes = [1, 32], strides = [1, 1]} : vector<5x32xf32> to vector<1x32xf32>
    %90 = vector.broadcast %88 : vector<8x1xf32> to vector<8x32xf32>
    %91 = vector.broadcast %89 : vector<1x32xf32> to vector<8x32xf32>
    %92 = arith.mulf %90, %91 : vector<8x32xf32>
    %93 = arith.addf %83, %92 : vector<8x32xf32>
    %94 = vector.extract_strided_slice %3 {offsets = [2, 0, 0], sizes = [1, 8, 8], strides = [1, 1, 1]} : vector<5x8x8xf32> to vector<1x8x8xf32>
    %95 = vector.shape_cast %94 : vector<1x8x8xf32> to vector<8x8xf32>
    %96 = arith.mulf %70, %95 : vector<8x8xf32>
    %cst_31 = arith.constant dense<0.000000e+00> : vector<8xf32>
    %97 = vector.multi_reduction <add>, %96, %cst_31 [1] : vector<8x8xf32> to vector<8xf32>
    %98 = vector.shape_cast %97 : vector<8xf32> to vector<8x1xf32>
    %99 = vector.extract_strided_slice %73 {offsets = [2, 0], sizes = [1, 32], strides = [1, 1]} : vector<5x32xf32> to vector<1x32xf32>
    %100 = vector.broadcast %98 : vector<8x1xf32> to vector<8x32xf32>
    %101 = vector.broadcast %99 : vector<1x32xf32> to vector<8x32xf32>
    %102 = arith.mulf %100, %101 : vector<8x32xf32>
    %103 = arith.addf %93, %102 : vector<8x32xf32>
    %104 = vector.extract_strided_slice %3 {offsets = [3, 0, 0], sizes = [1, 8, 8], strides = [1, 1, 1]} : vector<5x8x8xf32> to vector<1x8x8xf32>
    %105 = vector.shape_cast %104 : vector<1x8x8xf32> to vector<8x8xf32>
    %106 = arith.mulf %70, %105 : vector<8x8xf32>
    %cst_32 = arith.constant dense<0.000000e+00> : vector<8xf32>
    %107 = vector.multi_reduction <add>, %106, %cst_32 [1] : vector<8x8xf32> to vector<8xf32>
    %108 = vector.shape_cast %107 : vector<8xf32> to vector<8x1xf32>
    %109 = vector.extract_strided_slice %73 {offsets = [3, 0], sizes = [1, 32], strides = [1, 1]} : vector<5x32xf32> to vector<1x32xf32>
    %110 = vector.broadcast %108 : vector<8x1xf32> to vector<8x32xf32>
    %111 = vector.broadcast %109 : vector<1x32xf32> to vector<8x32xf32>
    %112 = arith.mulf %110, %111 : vector<8x32xf32>
    %113 = arith.addf %103, %112 : vector<8x32xf32>
    %114 = vector.extract_strided_slice %3 {offsets = [4, 0, 0], sizes = [1, 8, 8], strides = [1, 1, 1]} : vector<5x8x8xf32> to vector<1x8x8xf32>
    %115 = vector.shape_cast %114 : vector<1x8x8xf32> to vector<8x8xf32>
    %116 = arith.mulf %70, %115 : vector<8x8xf32>
    %cst_33 = arith.constant dense<0.000000e+00> : vector<8xf32>
    %117 = vector.multi_reduction <add>, %116, %cst_33 [1] : vector<8x8xf32> to vector<8xf32>
    %118 = vector.shape_cast %117 : vector<8xf32> to vector<8x1xf32>
    %119 = vector.extract_strided_slice %73 {offsets = [4, 0], sizes = [1, 32], strides = [1, 1]} : vector<5x32xf32> to vector<1x32xf32>
    %120 = vector.broadcast %118 : vector<8x1xf32> to vector<8x32xf32>
    %121 = vector.broadcast %119 : vector<1x32xf32> to vector<8x32xf32>
    %122 = arith.mulf %120, %121 : vector<8x32xf32>
    %123 = arith.addf %113, %122 : vector<8x32xf32>
    %124 = arith.addf %123, %19 : vector<8x32xf32>
    %cst_34 = arith.constant 0.000000e+00 : f32
    %125 = vector.broadcast %cst_34 : f32 to vector<8x32xf32>
    %126 = arith.cmpf ogt, %124, %125 : vector<8x32xf32>
    %cst_35 = arith.constant 0.000000e+00 : f32
    %127 = vector.broadcast %cst_35 : f32 to vector<8x32xf32>
    %128 = arith.cmpf olt, %124, %127 : vector<8x32xf32>
    %cst_36 = arith.constant -1.000000e+00 : f32
    %cst_37 = arith.constant 0.000000e+00 : f32
    %129 = vector.broadcast %cst_36 : f32 to vector<8x32xf32>
    %130 = vector.broadcast %cst_37 : f32 to vector<8x32xf32>
    %131 = arith.select %128, %129, %130 : vector<8x32xi1>, vector<8x32xf32>
    %cst_38 = arith.constant 1.000000e+00 : f32
    %132 = vector.broadcast %cst_38 : f32 to vector<8x32xf32>
    %133 = arith.select %126, %132, %131 : vector<8x32xi1>, vector<8x32xf32>
    %134 = math.absf %124 : vector<8x32xf32>
    %c0_39 = arith.constant 0 : index
    %c0_40 = arith.constant 0 : index
    %c0_41 = arith.constant 0 : index
    %135 = vector.load %arg7[%c0_39, %c0_40, %c0_41] : memref<7x1x32xf32, #tpu.memory_space<vmem>>, vector<1x1x32xf32>
    %136 = vector.shape_cast %135 : vector<1x1x32xf32> to vector<1x32xf32>
    %137 = vector.broadcast %136 : vector<1x32xf32> to vector<8x32xf32>
    %138 = arith.mulf %134, %137 : vector<8x32xf32>
    %c0_42 = arith.constant 0 : index
    %c0_43 = arith.constant 0 : index
    %c0_44 = arith.constant 0 : index
    %139 = vector.load %arg8[%c0_42, %c0_43, %c0_44] : memref<7x1x32xf32, #tpu.memory_space<vmem>>, vector<1x1x32xf32>
    %140 = vector.shape_cast %139 : vector<1x1x32xf32> to vector<1x32xf32>
    %141 = vector.broadcast %140 : vector<1x32xf32> to vector<8x32xf32>
    %142 = arith.addf %138, %141 : vector<8x32xf32>
    %cst_45 = arith.constant 0.000000e+00 : f32
    %143 = vector.broadcast %cst_45 : f32 to vector<8x32xf32>
    %144 = arith.maximumf %142, %143 : vector<8x32xf32>
    %145 = arith.mulf %133, %144 : vector<8x32xf32>
    %c1 = arith.constant 1 : index
    %c0_46 = arith.constant 0 : index
    %c0_47 = arith.constant 0 : index
    %146 = vector.load %arg4[%c1, %c0_46, %c0_47] : memref<7x32x128xf32, #tpu.memory_space<vmem>>, vector<1x32x128xf32>
    %147 = vector.shape_cast %146 : vector<1x32x128xf32> to vector<32x128xf32>
    %cst_48 = arith.constant dense<0.000000e+00> : vector<8x128xf32>
    %148 = tpu.matmul %145, %147, %cst_48 {dimension_numbers = #tpu.dot_dimension_numbers<[1], [0], [0], [1], [0, 0, 1, 1], [], []>} : vector<8x32xf32>, vector<32x128xf32>, vector<8x128xf32> -> vector<8x128xf32>
    %149 = vector.extract_strided_slice %148 {offsets = [0, 0], sizes = [8, 32], strides = [1, 1]} : vector<8x128xf32> to vector<8x32xf32>
    %150 = vector.extract_strided_slice %148 {offsets = [0, 32], sizes = [8, 32], strides = [1, 1]} : vector<8x128xf32> to vector<8x32xf32>
    %151 = vector.extract_strided_slice %148 {offsets = [0, 64], sizes = [8, 32], strides = [1, 1]} : vector<8x128xf32> to vector<8x32xf32>
    %152 = vector.extract_strided_slice %148 {offsets = [0, 96], sizes = [8, 32], strides = [1, 1]} : vector<8x128xf32> to vector<8x32xf32>
    %c1_49 = arith.constant 1 : index
    %c0_50 = arith.constant 0 : index
    %c0_51 = arith.constant 0 : index
    %153 = vector.load %arg5[%c1_49, %c0_50, %c0_51] : memref<7x32x5xf32, #tpu.memory_space<vmem>>, vector<1x32x5xf32>
    %154 = vector.shape_cast %153 : vector<1x32x5xf32> to vector<32x5xf32>
    %cst_52 = arith.constant dense<0.000000e+00> : vector<8x5xf32>
    %155 = tpu.matmul %149, %154, %cst_52 {dimension_numbers = #tpu.dot_dimension_numbers<[1], [0], [0], [1], [0, 0, 1, 1], [], []>} : vector<8x32xf32>, vector<32x5xf32>, vector<8x5xf32> -> vector<8x5xf32>
    %156 = tpu.transpose %150, [1, 0] : vector<8x32xf32> -> vector<32x8xf32>
    %cst_53 = arith.constant dense<0.000000e+00> : vector<8x8xf32>
    %157 = tpu.matmul %149, %156, %cst_53 {dimension_numbers = #tpu.dot_dimension_numbers<[1], [0], [0], [1], [0, 0, 1, 1], [], []>} : vector<8x32xf32>, vector<32x8xf32>, vector<8x8xf32> -> vector<8x8xf32>
    %158 = vector.extract_strided_slice %155 {offsets = [0, 0], sizes = [8, 1], strides = [1, 1]} : vector<8x5xf32> to vector<8x1xf32>
    %159 = vector.extract_strided_slice %3 {offsets = [0, 0, 0], sizes = [1, 8, 8], strides = [1, 1, 1]} : vector<5x8x8xf32> to vector<1x8x8xf32>
    %160 = vector.shape_cast %159 : vector<1x8x8xf32> to vector<8x8xf32>
    %161 = vector.broadcast %158 : vector<8x1xf32> to vector<8x8xf32>
    %162 = arith.mulf %161, %160 : vector<8x8xf32>
    %163 = arith.addf %157, %162 : vector<8x8xf32>
    %164 = vector.extract_strided_slice %155 {offsets = [0, 1], sizes = [8, 1], strides = [1, 1]} : vector<8x5xf32> to vector<8x1xf32>
    %165 = vector.extract_strided_slice %3 {offsets = [1, 0, 0], sizes = [1, 8, 8], strides = [1, 1, 1]} : vector<5x8x8xf32> to vector<1x8x8xf32>
    %166 = vector.shape_cast %165 : vector<1x8x8xf32> to vector<8x8xf32>
    %167 = vector.broadcast %164 : vector<8x1xf32> to vector<8x8xf32>
    %168 = arith.mulf %167, %166 : vector<8x8xf32>
    %169 = arith.addf %163, %168 : vector<8x8xf32>
    %170 = vector.extract_strided_slice %155 {offsets = [0, 2], sizes = [8, 1], strides = [1, 1]} : vector<8x5xf32> to vector<8x1xf32>
    %171 = vector.extract_strided_slice %3 {offsets = [2, 0, 0], sizes = [1, 8, 8], strides = [1, 1, 1]} : vector<5x8x8xf32> to vector<1x8x8xf32>
    %172 = vector.shape_cast %171 : vector<1x8x8xf32> to vector<8x8xf32>
    %173 = vector.broadcast %170 : vector<8x1xf32> to vector<8x8xf32>
    %174 = arith.mulf %173, %172 : vector<8x8xf32>
    %175 = arith.addf %169, %174 : vector<8x8xf32>
    %176 = vector.extract_strided_slice %155 {offsets = [0, 3], sizes = [8, 1], strides = [1, 1]} : vector<8x5xf32> to vector<8x1xf32>
    %177 = vector.extract_strided_slice %3 {offsets = [3, 0, 0], sizes = [1, 8, 8], strides = [1, 1, 1]} : vector<5x8x8xf32> to vector<1x8x8xf32>
    %178 = vector.shape_cast %177 : vector<1x8x8xf32> to vector<8x8xf32>
    %179 = vector.broadcast %176 : vector<8x1xf32> to vector<8x8xf32>
    %180 = arith.mulf %179, %178 : vector<8x8xf32>
    %181 = arith.addf %175, %180 : vector<8x8xf32>
    %182 = vector.extract_strided_slice %155 {offsets = [0, 4], sizes = [8, 1], strides = [1, 1]} : vector<8x5xf32> to vector<8x1xf32>
    %183 = vector.extract_strided_slice %3 {offsets = [4, 0, 0], sizes = [1, 8, 8], strides = [1, 1, 1]} : vector<5x8x8xf32> to vector<1x8x8xf32>
    %184 = vector.shape_cast %183 : vector<1x8x8xf32> to vector<8x8xf32>
    %185 = vector.broadcast %182 : vector<8x1xf32> to vector<8x8xf32>
    %186 = arith.mulf %185, %184 : vector<8x8xf32>
    %187 = arith.addf %181, %186 : vector<8x8xf32>
    %188 = vector.broadcast %12 : f32 to vector<8x8xf32>
    %189 = arith.mulf %187, %188 : vector<8x8xf32>
    %190 = arith.addf %189, %10 : vector<8x8xf32>
    %cst_54 = arith.constant dense<0xFF800000> : vector<8xf32>
    %191 = vector.multi_reduction <maximumf>, %190, %cst_54 [1] : vector<8x8xf32> to vector<8xf32>
    %192 = vector.shape_cast %191 : vector<8xf32> to vector<8x1xf32>
    %193 = vector.broadcast %192 : vector<8x1xf32> to vector<8x8xf32>
    %194 = arith.subf %190, %193 : vector<8x8xf32>
    %195 = math.exp %194 : vector<8x8xf32>
    %196 = arith.mulf %195, %5 : vector<8x8xf32>
    %cst_55 = arith.constant dense<0.000000e+00> : vector<8xf32>
    %197 = vector.multi_reduction <add>, %196, %cst_55 [1] : vector<8x8xf32> to vector<8xf32>
    %198 = vector.shape_cast %197 : vector<8xf32> to vector<8x1xf32>
    %cst_56 = arith.constant 9.99999996E-13 : f32
    %199 = vector.broadcast %cst_56 : f32 to vector<8x1xf32>
    %200 = arith.addf %198, %199 : vector<8x1xf32>
    %201 = tpu.reciprocal %200 {approx = true} : vector<8x1xf32> -> vector<8x1xf32>
    %202 = vector.broadcast %201 : vector<8x1xf32> to vector<8x8xf32>
    %203 = arith.mulf %196, %202 : vector<8x8xf32>
    %cst_57 = arith.constant dense<0.000000e+00> : vector<8x32xf32>
    %204 = tpu.matmul %203, %151, %cst_57 {dimension_numbers = #tpu.dot_dimension_numbers<[1], [0], [0], [1], [0, 0, 1, 1], [], []>} : vector<8x8xf32>, vector<8x32xf32>, vector<8x32xf32> -> vector<8x32xf32>
    %c1_58 = arith.constant 1 : index
    %c0_59 = arith.constant 0 : index
    %c0_60 = arith.constant 0 : index
    %205 = vector.load %arg6[%c1_58, %c0_59, %c0_60] : memref<7x5x32xf32, #tpu.memory_space<vmem>>, vector<1x5x32xf32>
    %206 = vector.shape_cast %205 : vector<1x5x32xf32> to vector<5x32xf32>
    %207 = vector.extract_strided_slice %3 {offsets = [0, 0, 0], sizes = [1, 8, 8], strides = [1, 1, 1]} : vector<5x8x8xf32> to vector<1x8x8xf32>
    %208 = vector.shape_cast %207 : vector<1x8x8xf32> to vector<8x8xf32>
    %209 = arith.mulf %203, %208 : vector<8x8xf32>
    %cst_61 = arith.constant dense<0.000000e+00> : vector<8xf32>
    %210 = vector.multi_reduction <add>, %209, %cst_61 [1] : vector<8x8xf32> to vector<8xf32>
    %211 = vector.shape_cast %210 : vector<8xf32> to vector<8x1xf32>
    %212 = vector.extract_strided_slice %206 {offsets = [0, 0], sizes = [1, 32], strides = [1, 1]} : vector<5x32xf32> to vector<1x32xf32>
    %213 = vector.broadcast %211 : vector<8x1xf32> to vector<8x32xf32>
    %214 = vector.broadcast %212 : vector<1x32xf32> to vector<8x32xf32>
    %215 = arith.mulf %213, %214 : vector<8x32xf32>
    %216 = arith.addf %204, %215 : vector<8x32xf32>
    %217 = vector.extract_strided_slice %3 {offsets = [1, 0, 0], sizes = [1, 8, 8], strides = [1, 1, 1]} : vector<5x8x8xf32> to vector<1x8x8xf32>
    %218 = vector.shape_cast %217 : vector<1x8x8xf32> to vector<8x8xf32>
    %219 = arith.mulf %203, %218 : vector<8x8xf32>
    %cst_62 = arith.constant dense<0.000000e+00> : vector<8xf32>
    %220 = vector.multi_reduction <add>, %219, %cst_62 [1] : vector<8x8xf32> to vector<8xf32>
    %221 = vector.shape_cast %220 : vector<8xf32> to vector<8x1xf32>
    %222 = vector.extract_strided_slice %206 {offsets = [1, 0], sizes = [1, 32], strides = [1, 1]} : vector<5x32xf32> to vector<1x32xf32>
    %223 = vector.broadcast %221 : vector<8x1xf32> to vector<8x32xf32>
    %224 = vector.broadcast %222 : vector<1x32xf32> to vector<8x32xf32>
    %225 = arith.mulf %223, %224 : vector<8x32xf32>
    %226 = arith.addf %216, %225 : vector<8x32xf32>
    %227 = vector.extract_strided_slice %3 {offsets = [2, 0, 0], sizes = [1, 8, 8], strides = [1, 1, 1]} : vector<5x8x8xf32> to vector<1x8x8xf32>
    %228 = vector.shape_cast %227 : vector<1x8x8xf32> to vector<8x8xf32>
    %229 = arith.mulf %203, %228 : vector<8x8xf32>
    %cst_63 = arith.constant dense<0.000000e+00> : vector<8xf32>
    %230 = vector.multi_reduction <add>, %229, %cst_63 [1] : vector<8x8xf32> to vector<8xf32>
    %231 = vector.shape_cast %230 : vector<8xf32> to vector<8x1xf32>
    %232 = vector.extract_strided_slice %206 {offsets = [2, 0], sizes = [1, 32], strides = [1, 1]} : vector<5x32xf32> to vector<1x32xf32>
    %233 = vector.broadcast %231 : vector<8x1xf32> to vector<8x32xf32>
    %234 = vector.broadcast %232 : vector<1x32xf32> to vector<8x32xf32>
    %235 = arith.mulf %233, %234 : vector<8x32xf32>
    %236 = arith.addf %226, %235 : vector<8x32xf32>
    %237 = vector.extract_strided_slice %3 {offsets = [3, 0, 0], sizes = [1, 8, 8], strides = [1, 1, 1]} : vector<5x8x8xf32> to vector<1x8x8xf32>
    %238 = vector.shape_cast %237 : vector<1x8x8xf32> to vector<8x8xf32>
    %239 = arith.mulf %203, %238 : vector<8x8xf32>
    %cst_64 = arith.constant dense<0.000000e+00> : vector<8xf32>
    %240 = vector.multi_reduction <add>, %239, %cst_64 [1] : vector<8x8xf32> to vector<8xf32>
    %241 = vector.shape_cast %240 : vector<8xf32> to vector<8x1xf32>
    %242 = vector.extract_strided_slice %206 {offsets = [3, 0], sizes = [1, 32], strides = [1, 1]} : vector<5x32xf32> to vector<1x32xf32>
    %243 = vector.broadcast %241 : vector<8x1xf32> to vector<8x32xf32>
    %244 = vector.broadcast %242 : vector<1x32xf32> to vector<8x32xf32>
    %245 = arith.mulf %243, %244 : vector<8x32xf32>
    %246 = arith.addf %236, %245 : vector<8x32xf32>
    %247 = vector.extract_strided_slice %3 {offsets = [4, 0, 0], sizes = [1, 8, 8], strides = [1, 1, 1]} : vector<5x8x8xf32> to vector<1x8x8xf32>
    %248 = vector.shape_cast %247 : vector<1x8x8xf32> to vector<8x8xf32>
    %249 = arith.mulf %203, %248 : vector<8x8xf32>
    %cst_65 = arith.constant dense<0.000000e+00> : vector<8xf32>
    %250 = vector.multi_reduction <add>, %249, %cst_65 [1] : vector<8x8xf32> to vector<8xf32>
    %251 = vector.shape_cast %250 : vector<8xf32> to vector<8x1xf32>
    %252 = vector.extract_strided_slice %206 {offsets = [4, 0], sizes = [1, 32], strides = [1, 1]} : vector<5x32xf32> to vector<1x32xf32>
    %253 = vector.broadcast %251 : vector<8x1xf32> to vector<8x32xf32>
    %254 = vector.broadcast %252 : vector<1x32xf32> to vector<8x32xf32>
    %255 = arith.mulf %253, %254 : vector<8x32xf32>
    %256 = arith.addf %246, %255 : vector<8x32xf32>
    %257 = arith.addf %256, %152 : vector<8x32xf32>
    %cst_66 = arith.constant 0.000000e+00 : f32
    %258 = vector.broadcast %cst_66 : f32 to vector<8x32xf32>
    %259 = arith.cmpf ogt, %257, %258 : vector<8x32xf32>
    %cst_67 = arith.constant 0.000000e+00 : f32
    %260 = vector.broadcast %cst_67 : f32 to vector<8x32xf32>
    %261 = arith.cmpf olt, %257, %260 : vector<8x32xf32>
    %cst_68 = arith.constant -1.000000e+00 : f32
    %cst_69 = arith.constant 0.000000e+00 : f32
    %262 = vector.broadcast %cst_68 : f32 to vector<8x32xf32>
    %263 = vector.broadcast %cst_69 : f32 to vector<8x32xf32>
    %264 = arith.select %261, %262, %263 : vector<8x32xi1>, vector<8x32xf32>
    %cst_70 = arith.constant 1.000000e+00 : f32
    %265 = vector.broadcast %cst_70 : f32 to vector<8x32xf32>
    %266 = arith.select %259, %265, %264 : vector<8x32xi1>, vector<8x32xf32>
    %267 = math.absf %257 : vector<8x32xf32>
    %c1_71 = arith.constant 1 : index
    %c0_72 = arith.constant 0 : index
    %c0_73 = arith.constant 0 : index
    %268 = vector.load %arg7[%c1_71, %c0_72, %c0_73] : memref<7x1x32xf32, #tpu.memory_space<vmem>>, vector<1x1x32xf32>
    %269 = vector.shape_cast %268 : vector<1x1x32xf32> to vector<1x32xf32>
    %270 = vector.broadcast %269 : vector<1x32xf32> to vector<8x32xf32>
    %271 = arith.mulf %267, %270 : vector<8x32xf32>
    %c1_74 = arith.constant 1 : index
    %c0_75 = arith.constant 0 : index
    %c0_76 = arith.constant 0 : index
    %272 = vector.load %arg8[%c1_74, %c0_75, %c0_76] : memref<7x1x32xf32, #tpu.memory_space<vmem>>, vector<1x1x32xf32>
    %273 = vector.shape_cast %272 : vector<1x1x32xf32> to vector<1x32xf32>
    %274 = vector.broadcast %273 : vector<1x32xf32> to vector<8x32xf32>
    %275 = arith.addf %271, %274 : vector<8x32xf32>
    %cst_77 = arith.constant 0.000000e+00 : f32
    %276 = vector.broadcast %cst_77 : f32 to vector<8x32xf32>
    %277 = arith.maximumf %275, %276 : vector<8x32xf32>
    %278 = arith.mulf %266, %277 : vector<8x32xf32>
    %c2 = arith.constant 2 : index
    %c0_78 = arith.constant 0 : index
    %c0_79 = arith.constant 0 : index
    %279 = vector.load %arg4[%c2, %c0_78, %c0_79] : memref<7x32x128xf32, #tpu.memory_space<vmem>>, vector<1x32x128xf32>
    %280 = vector.shape_cast %279 : vector<1x32x128xf32> to vector<32x128xf32>
    %cst_80 = arith.constant dense<0.000000e+00> : vector<8x128xf32>
    %281 = tpu.matmul %278, %280, %cst_80 {dimension_numbers = #tpu.dot_dimension_numbers<[1], [0], [0], [1], [0, 0, 1, 1], [], []>} : vector<8x32xf32>, vector<32x128xf32>, vector<8x128xf32> -> vector<8x128xf32>
    %282 = vector.extract_strided_slice %281 {offsets = [0, 0], sizes = [8, 32], strides = [1, 1]} : vector<8x128xf32> to vector<8x32xf32>
    %283 = vector.extract_strided_slice %281 {offsets = [0, 32], sizes = [8, 32], strides = [1, 1]} : vector<8x128xf32> to vector<8x32xf32>
    %284 = vector.extract_strided_slice %281 {offsets = [0, 64], sizes = [8, 32], strides = [1, 1]} : vector<8x128xf32> to vector<8x32xf32>
    %285 = vector.extract_strided_slice %281 {offsets = [0, 96], sizes = [8, 32], strides = [1, 1]} : vector<8x128xf32> to vector<8x32xf32>
    %c2_81 = arith.constant 2 : index
    %c0_82 = arith.constant 0 : index
    %c0_83 = arith.constant 0 : index
    %286 = vector.load %arg5[%c2_81, %c0_82, %c0_83] : memref<7x32x5xf32, #tpu.memory_space<vmem>>, vector<1x32x5xf32>
    %287 = vector.shape_cast %286 : vector<1x32x5xf32> to vector<32x5xf32>
    %cst_84 = arith.constant dense<0.000000e+00> : vector<8x5xf32>
    %288 = tpu.matmul %282, %287, %cst_84 {dimension_numbers = #tpu.dot_dimension_numbers<[1], [0], [0], [1], [0, 0, 1, 1], [], []>} : vector<8x32xf32>, vector<32x5xf32>, vector<8x5xf32> -> vector<8x5xf32>
    %289 = tpu.transpose %283, [1, 0] : vector<8x32xf32> -> vector<32x8xf32>
    %cst_85 = arith.constant dense<0.000000e+00> : vector<8x8xf32>
    %290 = tpu.matmul %282, %289, %cst_85 {dimension_numbers = #tpu.dot_dimension_numbers<[1], [0], [0], [1], [0, 0, 1, 1], [], []>} : vector<8x32xf32>, vector<32x8xf32>, vector<8x8xf32> -> vector<8x8xf32>
    %291 = vector.extract_strided_slice %288 {offsets = [0, 0], sizes = [8, 1], strides = [1, 1]} : vector<8x5xf32> to vector<8x1xf32>
    %292 = vector.extract_strided_slice %3 {offsets = [0, 0, 0], sizes = [1, 8, 8], strides = [1, 1, 1]} : vector<5x8x8xf32> to vector<1x8x8xf32>
    %293 = vector.shape_cast %292 : vector<1x8x8xf32> to vector<8x8xf32>
    %294 = vector.broadcast %291 : vector<8x1xf32> to vector<8x8xf32>
    %295 = arith.mulf %294, %293 : vector<8x8xf32>
    %296 = arith.addf %290, %295 : vector<8x8xf32>
    %297 = vector.extract_strided_slice %288 {offsets = [0, 1], sizes = [8, 1], strides = [1, 1]} : vector<8x5xf32> to vector<8x1xf32>
    %298 = vector.extract_strided_slice %3 {offsets = [1, 0, 0], sizes = [1, 8, 8], strides = [1, 1, 1]} : vector<5x8x8xf32> to vector<1x8x8xf32>
    %299 = vector.shape_cast %298 : vector<1x8x8xf32> to vector<8x8xf32>
    %300 = vector.broadcast %297 : vector<8x1xf32> to vector<8x8xf32>
    %301 = arith.mulf %300, %299 : vector<8x8xf32>
    %302 = arith.addf %296, %301 : vector<8x8xf32>
    %303 = vector.extract_strided_slice %288 {offsets = [0, 2], sizes = [8, 1], strides = [1, 1]} : vector<8x5xf32> to vector<8x1xf32>
    %304 = vector.extract_strided_slice %3 {offsets = [2, 0, 0], sizes = [1, 8, 8], strides = [1, 1, 1]} : vector<5x8x8xf32> to vector<1x8x8xf32>
    %305 = vector.shape_cast %304 : vector<1x8x8xf32> to vector<8x8xf32>
    %306 = vector.broadcast %303 : vector<8x1xf32> to vector<8x8xf32>
    %307 = arith.mulf %306, %305 : vector<8x8xf32>
    %308 = arith.addf %302, %307 : vector<8x8xf32>
    %309 = vector.extract_strided_slice %288 {offsets = [0, 3], sizes = [8, 1], strides = [1, 1]} : vector<8x5xf32> to vector<8x1xf32>
    %310 = vector.extract_strided_slice %3 {offsets = [3, 0, 0], sizes = [1, 8, 8], strides = [1, 1, 1]} : vector<5x8x8xf32> to vector<1x8x8xf32>
    %311 = vector.shape_cast %310 : vector<1x8x8xf32> to vector<8x8xf32>
    %312 = vector.broadcast %309 : vector<8x1xf32> to vector<8x8xf32>
    %313 = arith.mulf %312, %311 : vector<8x8xf32>
    %314 = arith.addf %308, %313 : vector<8x8xf32>
    %315 = vector.extract_strided_slice %288 {offsets = [0, 4], sizes = [8, 1], strides = [1, 1]} : vector<8x5xf32> to vector<8x1xf32>
    %316 = vector.extract_strided_slice %3 {offsets = [4, 0, 0], sizes = [1, 8, 8], strides = [1, 1, 1]} : vector<5x8x8xf32> to vector<1x8x8xf32>
    %317 = vector.shape_cast %316 : vector<1x8x8xf32> to vector<8x8xf32>
    %318 = vector.broadcast %315 : vector<8x1xf32> to vector<8x8xf32>
    %319 = arith.mulf %318, %317 : vector<8x8xf32>
    %320 = arith.addf %314, %319 : vector<8x8xf32>
    %321 = vector.broadcast %12 : f32 to vector<8x8xf32>
    %322 = arith.mulf %320, %321 : vector<8x8xf32>
    %323 = arith.addf %322, %10 : vector<8x8xf32>
    %cst_86 = arith.constant dense<0xFF800000> : vector<8xf32>
    %324 = vector.multi_reduction <maximumf>, %323, %cst_86 [1] : vector<8x8xf32> to vector<8xf32>
    %325 = vector.shape_cast %324 : vector<8xf32> to vector<8x1xf32>
    %326 = vector.broadcast %325 : vector<8x1xf32> to vector<8x8xf32>
    %327 = arith.subf %323, %326 : vector<8x8xf32>
    %328 = math.exp %327 : vector<8x8xf32>
    %329 = arith.mulf %328, %5 : vector<8x8xf32>
    %cst_87 = arith.constant dense<0.000000e+00> : vector<8xf32>
    %330 = vector.multi_reduction <add>, %329, %cst_87 [1] : vector<8x8xf32> to vector<8xf32>
    %331 = vector.shape_cast %330 : vector<8xf32> to vector<8x1xf32>
    %cst_88 = arith.constant 9.99999996E-13 : f32
    %332 = vector.broadcast %cst_88 : f32 to vector<8x1xf32>
    %333 = arith.addf %331, %332 : vector<8x1xf32>
    %334 = tpu.reciprocal %333 {approx = true} : vector<8x1xf32> -> vector<8x1xf32>
    %335 = vector.broadcast %334 : vector<8x1xf32> to vector<8x8xf32>
    %336 = arith.mulf %329, %335 : vector<8x8xf32>
    %cst_89 = arith.constant dense<0.000000e+00> : vector<8x32xf32>
    %337 = tpu.matmul %336, %284, %cst_89 {dimension_numbers = #tpu.dot_dimension_numbers<[1], [0], [0], [1], [0, 0, 1, 1], [], []>} : vector<8x8xf32>, vector<8x32xf32>, vector<8x32xf32> -> vector<8x32xf32>
    %c2_90 = arith.constant 2 : index
    %c0_91 = arith.constant 0 : index
    %c0_92 = arith.constant 0 : index
    %338 = vector.load %arg6[%c2_90, %c0_91, %c0_92] : memref<7x5x32xf32, #tpu.memory_space<vmem>>, vector<1x5x32xf32>
    %339 = vector.shape_cast %338 : vector<1x5x32xf32> to vector<5x32xf32>
    %340 = vector.extract_strided_slice %3 {offsets = [0, 0, 0], sizes = [1, 8, 8], strides = [1, 1, 1]} : vector<5x8x8xf32> to vector<1x8x8xf32>
    %341 = vector.shape_cast %340 : vector<1x8x8xf32> to vector<8x8xf32>
    %342 = arith.mulf %336, %341 : vector<8x8xf32>
    %cst_93 = arith.constant dense<0.000000e+00> : vector<8xf32>
    %343 = vector.multi_reduction <add>, %342, %cst_93 [1] : vector<8x8xf32> to vector<8xf32>
    %344 = vector.shape_cast %343 : vector<8xf32> to vector<8x1xf32>
    %345 = vector.extract_strided_slice %339 {offsets = [0, 0], sizes = [1, 32], strides = [1, 1]} : vector<5x32xf32> to vector<1x32xf32>
    %346 = vector.broadcast %344 : vector<8x1xf32> to vector<8x32xf32>
    %347 = vector.broadcast %345 : vector<1x32xf32> to vector<8x32xf32>
    %348 = arith.mulf %346, %347 : vector<8x32xf32>
    %349 = arith.addf %337, %348 : vector<8x32xf32>
    %350 = vector.extract_strided_slice %3 {offsets = [1, 0, 0], sizes = [1, 8, 8], strides = [1, 1, 1]} : vector<5x8x8xf32> to vector<1x8x8xf32>
    %351 = vector.shape_cast %350 : vector<1x8x8xf32> to vector<8x8xf32>
    %352 = arith.mulf %336, %351 : vector<8x8xf32>
    %cst_94 = arith.constant dense<0.000000e+00> : vector<8xf32>
    %353 = vector.multi_reduction <add>, %352, %cst_94 [1] : vector<8x8xf32> to vector<8xf32>
    %354 = vector.shape_cast %353 : vector<8xf32> to vector<8x1xf32>
    %355 = vector.extract_strided_slice %339 {offsets = [1, 0], sizes = [1, 32], strides = [1, 1]} : vector<5x32xf32> to vector<1x32xf32>
    %356 = vector.broadcast %354 : vector<8x1xf32> to vector<8x32xf32>
    %357 = vector.broadcast %355 : vector<1x32xf32> to vector<8x32xf32>
    %358 = arith.mulf %356, %357 : vector<8x32xf32>
    %359 = arith.addf %349, %358 : vector<8x32xf32>
    %360 = vector.extract_strided_slice %3 {offsets = [2, 0, 0], sizes = [1, 8, 8], strides = [1, 1, 1]} : vector<5x8x8xf32> to vector<1x8x8xf32>
    %361 = vector.shape_cast %360 : vector<1x8x8xf32> to vector<8x8xf32>
    %362 = arith.mulf %336, %361 : vector<8x8xf32>
    %cst_95 = arith.constant dense<0.000000e+00> : vector<8xf32>
    %363 = vector.multi_reduction <add>, %362, %cst_95 [1] : vector<8x8xf32> to vector<8xf32>
    %364 = vector.shape_cast %363 : vector<8xf32> to vector<8x1xf32>
    %365 = vector.extract_strided_slice %339 {offsets = [2, 0], sizes = [1, 32], strides = [1, 1]} : vector<5x32xf32> to vector<1x32xf32>
    %366 = vector.broadcast %364 : vector<8x1xf32> to vector<8x32xf32>
    %367 = vector.broadcast %365 : vector<1x32xf32> to vector<8x32xf32>
    %368 = arith.mulf %366, %367 : vector<8x32xf32>
    %369 = arith.addf %359, %368 : vector<8x32xf32>
    %370 = vector.extract_strided_slice %3 {offsets = [3, 0, 0], sizes = [1, 8, 8], strides = [1, 1, 1]} : vector<5x8x8xf32> to vector<1x8x8xf32>
    %371 = vector.shape_cast %370 : vector<1x8x8xf32> to vector<8x8xf32>
    %372 = arith.mulf %336, %371 : vector<8x8xf32>
    %cst_96 = arith.constant dense<0.000000e+00> : vector<8xf32>
    %373 = vector.multi_reduction <add>, %372, %cst_96 [1] : vector<8x8xf32> to vector<8xf32>
    %374 = vector.shape_cast %373 : vector<8xf32> to vector<8x1xf32>
    %375 = vector.extract_strided_slice %339 {offsets = [3, 0], sizes = [1, 32], strides = [1, 1]} : vector<5x32xf32> to vector<1x32xf32>
    %376 = vector.broadcast %374 : vector<8x1xf32> to vector<8x32xf32>
    %377 = vector.broadcast %375 : vector<1x32xf32> to vector<8x32xf32>
    %378 = arith.mulf %376, %377 : vector<8x32xf32>
    %379 = arith.addf %369, %378 : vector<8x32xf32>
    %380 = vector.extract_strided_slice %3 {offsets = [4, 0, 0], sizes = [1, 8, 8], strides = [1, 1, 1]} : vector<5x8x8xf32> to vector<1x8x8xf32>
    %381 = vector.shape_cast %380 : vector<1x8x8xf32> to vector<8x8xf32>
    %382 = arith.mulf %336, %381 : vector<8x8xf32>
    %cst_97 = arith.constant dense<0.000000e+00> : vector<8xf32>
    %383 = vector.multi_reduction <add>, %382, %cst_97 [1] : vector<8x8xf32> to vector<8xf32>
    %384 = vector.shape_cast %383 : vector<8xf32> to vector<8x1xf32>
    %385 = vector.extract_strided_slice %339 {offsets = [4, 0], sizes = [1, 32], strides = [1, 1]} : vector<5x32xf32> to vector<1x32xf32>
    %386 = vector.broadcast %384 : vector<8x1xf32> to vector<8x32xf32>
    %387 = vector.broadcast %385 : vector<1x32xf32> to vector<8x32xf32>
    %388 = arith.mulf %386, %387 : vector<8x32xf32>
    %389 = arith.addf %379, %388 : vector<8x32xf32>
    %390 = arith.addf %389, %285 : vector<8x32xf32>
    %cst_98 = arith.constant 0.000000e+00 : f32
    %391 = vector.broadcast %cst_98 : f32 to vector<8x32xf32>
    %392 = arith.cmpf ogt, %390, %391 : vector<8x32xf32>
    %cst_99 = arith.constant 0.000000e+00 : f32
    %393 = vector.broadcast %cst_99 : f32 to vector<8x32xf32>
    %394 = arith.cmpf olt, %390, %393 : vector<8x32xf32>
    %cst_100 = arith.constant -1.000000e+00 : f32
    %cst_101 = arith.constant 0.000000e+00 : f32
    %395 = vector.broadcast %cst_100 : f32 to vector<8x32xf32>
    %396 = vector.broadcast %cst_101 : f32 to vector<8x32xf32>
    %397 = arith.select %394, %395, %396 : vector<8x32xi1>, vector<8x32xf32>
    %cst_102 = arith.constant 1.000000e+00 : f32
    %398 = vector.broadcast %cst_102 : f32 to vector<8x32xf32>
    %399 = arith.select %392, %398, %397 : vector<8x32xi1>, vector<8x32xf32>
    %400 = math.absf %390 : vector<8x32xf32>
    %c2_103 = arith.constant 2 : index
    %c0_104 = arith.constant 0 : index
    %c0_105 = arith.constant 0 : index
    %401 = vector.load %arg7[%c2_103, %c0_104, %c0_105] : memref<7x1x32xf32, #tpu.memory_space<vmem>>, vector<1x1x32xf32>
    %402 = vector.shape_cast %401 : vector<1x1x32xf32> to vector<1x32xf32>
    %403 = vector.broadcast %402 : vector<1x32xf32> to vector<8x32xf32>
    %404 = arith.mulf %400, %403 : vector<8x32xf32>
    %c2_106 = arith.constant 2 : index
    %c0_107 = arith.constant 0 : index
    %c0_108 = arith.constant 0 : index
    %405 = vector.load %arg8[%c2_106, %c0_107, %c0_108] : memref<7x1x32xf32, #tpu.memory_space<vmem>>, vector<1x1x32xf32>
    %406 = vector.shape_cast %405 : vector<1x1x32xf32> to vector<1x32xf32>
    %407 = vector.broadcast %406 : vector<1x32xf32> to vector<8x32xf32>
    %408 = arith.addf %404, %407 : vector<8x32xf32>
    %cst_109 = arith.constant 0.000000e+00 : f32
    %409 = vector.broadcast %cst_109 : f32 to vector<8x32xf32>
    %410 = arith.maximumf %408, %409 : vector<8x32xf32>
    %411 = arith.mulf %399, %410 : vector<8x32xf32>
    %c3 = arith.constant 3 : index
    %c0_110 = arith.constant 0 : index
    %c0_111 = arith.constant 0 : index
    %412 = vector.load %arg4[%c3, %c0_110, %c0_111] : memref<7x32x128xf32, #tpu.memory_space<vmem>>, vector<1x32x128xf32>
    %413 = vector.shape_cast %412 : vector<1x32x128xf32> to vector<32x128xf32>
    %cst_112 = arith.constant dense<0.000000e+00> : vector<8x128xf32>
    %414 = tpu.matmul %411, %413, %cst_112 {dimension_numbers = #tpu.dot_dimension_numbers<[1], [0], [0], [1], [0, 0, 1, 1], [], []>} : vector<8x32xf32>, vector<32x128xf32>, vector<8x128xf32> -> vector<8x128xf32>
    %415 = vector.extract_strided_slice %414 {offsets = [0, 0], sizes = [8, 32], strides = [1, 1]} : vector<8x128xf32> to vector<8x32xf32>
    %416 = vector.extract_strided_slice %414 {offsets = [0, 32], sizes = [8, 32], strides = [1, 1]} : vector<8x128xf32> to vector<8x32xf32>
    %417 = vector.extract_strided_slice %414 {offsets = [0, 64], sizes = [8, 32], strides = [1, 1]} : vector<8x128xf32> to vector<8x32xf32>
    %418 = vector.extract_strided_slice %414 {offsets = [0, 96], sizes = [8, 32], strides = [1, 1]} : vector<8x128xf32> to vector<8x32xf32>
    %c3_113 = arith.constant 3 : index
    %c0_114 = arith.constant 0 : index
    %c0_115 = arith.constant 0 : index
    %419 = vector.load %arg5[%c3_113, %c0_114, %c0_115] : memref<7x32x5xf32, #tpu.memory_space<vmem>>, vector<1x32x5xf32>
    %420 = vector.shape_cast %419 : vector<1x32x5xf32> to vector<32x5xf32>
    %cst_116 = arith.constant dense<0.000000e+00> : vector<8x5xf32>
    %421 = tpu.matmul %415, %420, %cst_116 {dimension_numbers = #tpu.dot_dimension_numbers<[1], [0], [0], [1], [0, 0, 1, 1], [], []>} : vector<8x32xf32>, vector<32x5xf32>, vector<8x5xf32> -> vector<8x5xf32>
    %422 = tpu.transpose %416, [1, 0] : vector<8x32xf32> -> vector<32x8xf32>
    %cst_117 = arith.constant dense<0.000000e+00> : vector<8x8xf32>
    %423 = tpu.matmul %415, %422, %cst_117 {dimension_numbers = #tpu.dot_dimension_numbers<[1], [0], [0], [1], [0, 0, 1, 1], [], []>} : vector<8x32xf32>, vector<32x8xf32>, vector<8x8xf32> -> vector<8x8xf32>
    %424 = vector.extract_strided_slice %421 {offsets = [0, 0], sizes = [8, 1], strides = [1, 1]} : vector<8x5xf32> to vector<8x1xf32>
    %425 = vector.extract_strided_slice %3 {offsets = [0, 0, 0], sizes = [1, 8, 8], strides = [1, 1, 1]} : vector<5x8x8xf32> to vector<1x8x8xf32>
    %426 = vector.shape_cast %425 : vector<1x8x8xf32> to vector<8x8xf32>
    %427 = vector.broadcast %424 : vector<8x1xf32> to vector<8x8xf32>
    %428 = arith.mulf %427, %426 : vector<8x8xf32>
    %429 = arith.addf %423, %428 : vector<8x8xf32>
    %430 = vector.extract_strided_slice %421 {offsets = [0, 1], sizes = [8, 1], strides = [1, 1]} : vector<8x5xf32> to vector<8x1xf32>
    %431 = vector.extract_strided_slice %3 {offsets = [1, 0, 0], sizes = [1, 8, 8], strides = [1, 1, 1]} : vector<5x8x8xf32> to vector<1x8x8xf32>
    %432 = vector.shape_cast %431 : vector<1x8x8xf32> to vector<8x8xf32>
    %433 = vector.broadcast %430 : vector<8x1xf32> to vector<8x8xf32>
    %434 = arith.mulf %433, %432 : vector<8x8xf32>
    %435 = arith.addf %429, %434 : vector<8x8xf32>
    %436 = vector.extract_strided_slice %421 {offsets = [0, 2], sizes = [8, 1], strides = [1, 1]} : vector<8x5xf32> to vector<8x1xf32>
    %437 = vector.extract_strided_slice %3 {offsets = [2, 0, 0], sizes = [1, 8, 8], strides = [1, 1, 1]} : vector<5x8x8xf32> to vector<1x8x8xf32>
    %438 = vector.shape_cast %437 : vector<1x8x8xf32> to vector<8x8xf32>
    %439 = vector.broadcast %436 : vector<8x1xf32> to vector<8x8xf32>
    %440 = arith.mulf %439, %438 : vector<8x8xf32>
    %441 = arith.addf %435, %440 : vector<8x8xf32>
    %442 = vector.extract_strided_slice %421 {offsets = [0, 3], sizes = [8, 1], strides = [1, 1]} : vector<8x5xf32> to vector<8x1xf32>
    %443 = vector.extract_strided_slice %3 {offsets = [3, 0, 0], sizes = [1, 8, 8], strides = [1, 1, 1]} : vector<5x8x8xf32> to vector<1x8x8xf32>
    %444 = vector.shape_cast %443 : vector<1x8x8xf32> to vector<8x8xf32>
    %445 = vector.broadcast %442 : vector<8x1xf32> to vector<8x8xf32>
    %446 = arith.mulf %445, %444 : vector<8x8xf32>
    %447 = arith.addf %441, %446 : vector<8x8xf32>
    %448 = vector.extract_strided_slice %421 {offsets = [0, 4], sizes = [8, 1], strides = [1, 1]} : vector<8x5xf32> to vector<8x1xf32>
    %449 = vector.extract_strided_slice %3 {offsets = [4, 0, 0], sizes = [1, 8, 8], strides = [1, 1, 1]} : vector<5x8x8xf32> to vector<1x8x8xf32>
    %450 = vector.shape_cast %449 : vector<1x8x8xf32> to vector<8x8xf32>
    %451 = vector.broadcast %448 : vector<8x1xf32> to vector<8x8xf32>
    %452 = arith.mulf %451, %450 : vector<8x8xf32>
    %453 = arith.addf %447, %452 : vector<8x8xf32>
    %454 = vector.broadcast %12 : f32 to vector<8x8xf32>
    %455 = arith.mulf %453, %454 : vector<8x8xf32>
    %456 = arith.addf %455, %10 : vector<8x8xf32>
    %cst_118 = arith.constant dense<0xFF800000> : vector<8xf32>
    %457 = vector.multi_reduction <maximumf>, %456, %cst_118 [1] : vector<8x8xf32> to vector<8xf32>
    %458 = vector.shape_cast %457 : vector<8xf32> to vector<8x1xf32>
    %459 = vector.broadcast %458 : vector<8x1xf32> to vector<8x8xf32>
    %460 = arith.subf %456, %459 : vector<8x8xf32>
    %461 = math.exp %460 : vector<8x8xf32>
    %462 = arith.mulf %461, %5 : vector<8x8xf32>
    %cst_119 = arith.constant dense<0.000000e+00> : vector<8xf32>
    %463 = vector.multi_reduction <add>, %462, %cst_119 [1] : vector<8x8xf32> to vector<8xf32>
    %464 = vector.shape_cast %463 : vector<8xf32> to vector<8x1xf32>
    %cst_120 = arith.constant 9.99999996E-13 : f32
    %465 = vector.broadcast %cst_120 : f32 to vector<8x1xf32>
    %466 = arith.addf %464, %465 : vector<8x1xf32>
    %467 = tpu.reciprocal %466 {approx = true} : vector<8x1xf32> -> vector<8x1xf32>
    %468 = vector.broadcast %467 : vector<8x1xf32> to vector<8x8xf32>
    %469 = arith.mulf %462, %468 : vector<8x8xf32>
    %cst_121 = arith.constant dense<0.000000e+00> : vector<8x32xf32>
    %470 = tpu.matmul %469, %417, %cst_121 {dimension_numbers = #tpu.dot_dimension_numbers<[1], [0], [0], [1], [0, 0, 1, 1], [], []>} : vector<8x8xf32>, vector<8x32xf32>, vector<8x32xf32> -> vector<8x32xf32>
    %c3_122 = arith.constant 3 : index
    %c0_123 = arith.constant 0 : index
    %c0_124 = arith.constant 0 : index
    %471 = vector.load %arg6[%c3_122, %c0_123, %c0_124] : memref<7x5x32xf32, #tpu.memory_space<vmem>>, vector<1x5x32xf32>
    %472 = vector.shape_cast %471 : vector<1x5x32xf32> to vector<5x32xf32>
    %473 = vector.extract_strided_slice %3 {offsets = [0, 0, 0], sizes = [1, 8, 8], strides = [1, 1, 1]} : vector<5x8x8xf32> to vector<1x8x8xf32>
    %474 = vector.shape_cast %473 : vector<1x8x8xf32> to vector<8x8xf32>
    %475 = arith.mulf %469, %474 : vector<8x8xf32>
    %cst_125 = arith.constant dense<0.000000e+00> : vector<8xf32>
    %476 = vector.multi_reduction <add>, %475, %cst_125 [1] : vector<8x8xf32> to vector<8xf32>
    %477 = vector.shape_cast %476 : vector<8xf32> to vector<8x1xf32>
    %478 = vector.extract_strided_slice %472 {offsets = [0, 0], sizes = [1, 32], strides = [1, 1]} : vector<5x32xf32> to vector<1x32xf32>
    %479 = vector.broadcast %477 : vector<8x1xf32> to vector<8x32xf32>
    %480 = vector.broadcast %478 : vector<1x32xf32> to vector<8x32xf32>
    %481 = arith.mulf %479, %480 : vector<8x32xf32>
    %482 = arith.addf %470, %481 : vector<8x32xf32>
    %483 = vector.extract_strided_slice %3 {offsets = [1, 0, 0], sizes = [1, 8, 8], strides = [1, 1, 1]} : vector<5x8x8xf32> to vector<1x8x8xf32>
    %484 = vector.shape_cast %483 : vector<1x8x8xf32> to vector<8x8xf32>
    %485 = arith.mulf %469, %484 : vector<8x8xf32>
    %cst_126 = arith.constant dense<0.000000e+00> : vector<8xf32>
    %486 = vector.multi_reduction <add>, %485, %cst_126 [1] : vector<8x8xf32> to vector<8xf32>
    %487 = vector.shape_cast %486 : vector<8xf32> to vector<8x1xf32>
    %488 = vector.extract_strided_slice %472 {offsets = [1, 0], sizes = [1, 32], strides = [1, 1]} : vector<5x32xf32> to vector<1x32xf32>
    %489 = vector.broadcast %487 : vector<8x1xf32> to vector<8x32xf32>
    %490 = vector.broadcast %488 : vector<1x32xf32> to vector<8x32xf32>
    %491 = arith.mulf %489, %490 : vector<8x32xf32>
    %492 = arith.addf %482, %491 : vector<8x32xf32>
    %493 = vector.extract_strided_slice %3 {offsets = [2, 0, 0], sizes = [1, 8, 8], strides = [1, 1, 1]} : vector<5x8x8xf32> to vector<1x8x8xf32>
    %494 = vector.shape_cast %493 : vector<1x8x8xf32> to vector<8x8xf32>
    %495 = arith.mulf %469, %494 : vector<8x8xf32>
    %cst_127 = arith.constant dense<0.000000e+00> : vector<8xf32>
    %496 = vector.multi_reduction <add>, %495, %cst_127 [1] : vector<8x8xf32> to vector<8xf32>
    %497 = vector.shape_cast %496 : vector<8xf32> to vector<8x1xf32>
    %498 = vector.extract_strided_slice %472 {offsets = [2, 0], sizes = [1, 32], strides = [1, 1]} : vector<5x32xf32> to vector<1x32xf32>
    %499 = vector.broadcast %497 : vector<8x1xf32> to vector<8x32xf32>
    %500 = vector.broadcast %498 : vector<1x32xf32> to vector<8x32xf32>
    %501 = arith.mulf %499, %500 : vector<8x32xf32>
    %502 = arith.addf %492, %501 : vector<8x32xf32>
    %503 = vector.extract_strided_slice %3 {offsets = [3, 0, 0], sizes = [1, 8, 8], strides = [1, 1, 1]} : vector<5x8x8xf32> to vector<1x8x8xf32>
    %504 = vector.shape_cast %503 : vector<1x8x8xf32> to vector<8x8xf32>
    %505 = arith.mulf %469, %504 : vector<8x8xf32>
    %cst_128 = arith.constant dense<0.000000e+00> : vector<8xf32>
    %506 = vector.multi_reduction <add>, %505, %cst_128 [1] : vector<8x8xf32> to vector<8xf32>
    %507 = vector.shape_cast %506 : vector<8xf32> to vector<8x1xf32>
    %508 = vector.extract_strided_slice %472 {offsets = [3, 0], sizes = [1, 32], strides = [1, 1]} : vector<5x32xf32> to vector<1x32xf32>
    %509 = vector.broadcast %507 : vector<8x1xf32> to vector<8x32xf32>
    %510 = vector.broadcast %508 : vector<1x32xf32> to vector<8x32xf32>
    %511 = arith.mulf %509, %510 : vector<8x32xf32>
    %512 = arith.addf %502, %511 : vector<8x32xf32>
    %513 = vector.extract_strided_slice %3 {offsets = [4, 0, 0], sizes = [1, 8, 8], strides = [1, 1, 1]} : vector<5x8x8xf32> to vector<1x8x8xf32>
    %514 = vector.shape_cast %513 : vector<1x8x8xf32> to vector<8x8xf32>
    %515 = arith.mulf %469, %514 : vector<8x8xf32>
    %cst_129 = arith.constant dense<0.000000e+00> : vector<8xf32>
    %516 = vector.multi_reduction <add>, %515, %cst_129 [1] : vector<8x8xf32> to vector<8xf32>
    %517 = vector.shape_cast %516 : vector<8xf32> to vector<8x1xf32>
    %518 = vector.extract_strided_slice %472 {offsets = [4, 0], sizes = [1, 32], strides = [1, 1]} : vector<5x32xf32> to vector<1x32xf32>
    %519 = vector.broadcast %517 : vector<8x1xf32> to vector<8x32xf32>
    %520 = vector.broadcast %518 : vector<1x32xf32> to vector<8x32xf32>
    %521 = arith.mulf %519, %520 : vector<8x32xf32>
    %522 = arith.addf %512, %521 : vector<8x32xf32>
    %523 = arith.addf %522, %418 : vector<8x32xf32>
    %cst_130 = arith.constant 0.000000e+00 : f32
    %524 = vector.broadcast %cst_130 : f32 to vector<8x32xf32>
    %525 = arith.cmpf ogt, %523, %524 : vector<8x32xf32>
    %cst_131 = arith.constant 0.000000e+00 : f32
    %526 = vector.broadcast %cst_131 : f32 to vector<8x32xf32>
    %527 = arith.cmpf olt, %523, %526 : vector<8x32xf32>
    %cst_132 = arith.constant -1.000000e+00 : f32
    %cst_133 = arith.constant 0.000000e+00 : f32
    %528 = vector.broadcast %cst_132 : f32 to vector<8x32xf32>
    %529 = vector.broadcast %cst_133 : f32 to vector<8x32xf32>
    %530 = arith.select %527, %528, %529 : vector<8x32xi1>, vector<8x32xf32>
    %cst_134 = arith.constant 1.000000e+00 : f32
    %531 = vector.broadcast %cst_134 : f32 to vector<8x32xf32>
    %532 = arith.select %525, %531, %530 : vector<8x32xi1>, vector<8x32xf32>
    %533 = math.absf %523 : vector<8x32xf32>
    %c3_135 = arith.constant 3 : index
    %c0_136 = arith.constant 0 : index
    %c0_137 = arith.constant 0 : index
    %534 = vector.load %arg7[%c3_135, %c0_136, %c0_137] : memref<7x1x32xf32, #tpu.memory_space<vmem>>, vector<1x1x32xf32>
    %535 = vector.shape_cast %534 : vector<1x1x32xf32> to vector<1x32xf32>
    %536 = vector.broadcast %535 : vector<1x32xf32> to vector<8x32xf32>
    %537 = arith.mulf %533, %536 : vector<8x32xf32>
    %c3_138 = arith.constant 3 : index
    %c0_139 = arith.constant 0 : index
    %c0_140 = arith.constant 0 : index
    %538 = vector.load %arg8[%c3_138, %c0_139, %c0_140] : memref<7x1x32xf32, #tpu.memory_space<vmem>>, vector<1x1x32xf32>
    %539 = vector.shape_cast %538 : vector<1x1x32xf32> to vector<1x32xf32>
    %540 = vector.broadcast %539 : vector<1x32xf32> to vector<8x32xf32>
    %541 = arith.addf %537, %540 : vector<8x32xf32>
    %cst_141 = arith.constant 0.000000e+00 : f32
    %542 = vector.broadcast %cst_141 : f32 to vector<8x32xf32>
    %543 = arith.maximumf %541, %542 : vector<8x32xf32>
    %544 = arith.mulf %532, %543 : vector<8x32xf32>
    %c4 = arith.constant 4 : index
    %c0_142 = arith.constant 0 : index
    %c0_143 = arith.constant 0 : index
    %545 = vector.load %arg4[%c4, %c0_142, %c0_143] : memref<7x32x128xf32, #tpu.memory_space<vmem>>, vector<1x32x128xf32>
    %546 = vector.shape_cast %545 : vector<1x32x128xf32> to vector<32x128xf32>
    %cst_144 = arith.constant dense<0.000000e+00> : vector<8x128xf32>
    %547 = tpu.matmul %544, %546, %cst_144 {dimension_numbers = #tpu.dot_dimension_numbers<[1], [0], [0], [1], [0, 0, 1, 1], [], []>} : vector<8x32xf32>, vector<32x128xf32>, vector<8x128xf32> -> vector<8x128xf32>
    %548 = vector.extract_strided_slice %547 {offsets = [0, 0], sizes = [8, 32], strides = [1, 1]} : vector<8x128xf32> to vector<8x32xf32>
    %549 = vector.extract_strided_slice %547 {offsets = [0, 32], sizes = [8, 32], strides = [1, 1]} : vector<8x128xf32> to vector<8x32xf32>
    %550 = vector.extract_strided_slice %547 {offsets = [0, 64], sizes = [8, 32], strides = [1, 1]} : vector<8x128xf32> to vector<8x32xf32>
    %551 = vector.extract_strided_slice %547 {offsets = [0, 96], sizes = [8, 32], strides = [1, 1]} : vector<8x128xf32> to vector<8x32xf32>
    %c4_145 = arith.constant 4 : index
    %c0_146 = arith.constant 0 : index
    %c0_147 = arith.constant 0 : index
    %552 = vector.load %arg5[%c4_145, %c0_146, %c0_147] : memref<7x32x5xf32, #tpu.memory_space<vmem>>, vector<1x32x5xf32>
    %553 = vector.shape_cast %552 : vector<1x32x5xf32> to vector<32x5xf32>
    %cst_148 = arith.constant dense<0.000000e+00> : vector<8x5xf32>
    %554 = tpu.matmul %548, %553, %cst_148 {dimension_numbers = #tpu.dot_dimension_numbers<[1], [0], [0], [1], [0, 0, 1, 1], [], []>} : vector<8x32xf32>, vector<32x5xf32>, vector<8x5xf32> -> vector<8x5xf32>
    %555 = tpu.transpose %549, [1, 0] : vector<8x32xf32> -> vector<32x8xf32>
    %cst_149 = arith.constant dense<0.000000e+00> : vector<8x8xf32>
    %556 = tpu.matmul %548, %555, %cst_149 {dimension_numbers = #tpu.dot_dimension_numbers<[1], [0], [0], [1], [0, 0, 1, 1], [], []>} : vector<8x32xf32>, vector<32x8xf32>, vector<8x8xf32> -> vector<8x8xf32>
    %557 = vector.extract_strided_slice %554 {offsets = [0, 0], sizes = [8, 1], strides = [1, 1]} : vector<8x5xf32> to vector<8x1xf32>
    %558 = vector.extract_strided_slice %3 {offsets = [0, 0, 0], sizes = [1, 8, 8], strides = [1, 1, 1]} : vector<5x8x8xf32> to vector<1x8x8xf32>
    %559 = vector.shape_cast %558 : vector<1x8x8xf32> to vector<8x8xf32>
    %560 = vector.broadcast %557 : vector<8x1xf32> to vector<8x8xf32>
    %561 = arith.mulf %560, %559 : vector<8x8xf32>
    %562 = arith.addf %556, %561 : vector<8x8xf32>
    %563 = vector.extract_strided_slice %554 {offsets = [0, 1], sizes = [8, 1], strides = [1, 1]} : vector<8x5xf32> to vector<8x1xf32>
    %564 = vector.extract_strided_slice %3 {offsets = [1, 0, 0], sizes = [1, 8, 8], strides = [1, 1, 1]} : vector<5x8x8xf32> to vector<1x8x8xf32>
    %565 = vector.shape_cast %564 : vector<1x8x8xf32> to vector<8x8xf32>
    %566 = vector.broadcast %563 : vector<8x1xf32> to vector<8x8xf32>
    %567 = arith.mulf %566, %565 : vector<8x8xf32>
    %568 = arith.addf %562, %567 : vector<8x8xf32>
    %569 = vector.extract_strided_slice %554 {offsets = [0, 2], sizes = [8, 1], strides = [1, 1]} : vector<8x5xf32> to vector<8x1xf32>
    %570 = vector.extract_strided_slice %3 {offsets = [2, 0, 0], sizes = [1, 8, 8], strides = [1, 1, 1]} : vector<5x8x8xf32> to vector<1x8x8xf32>
    %571 = vector.shape_cast %570 : vector<1x8x8xf32> to vector<8x8xf32>
    %572 = vector.broadcast %569 : vector<8x1xf32> to vector<8x8xf32>
    %573 = arith.mulf %572, %571 : vector<8x8xf32>
    %574 = arith.addf %568, %573 : vector<8x8xf32>
    %575 = vector.extract_strided_slice %554 {offsets = [0, 3], sizes = [8, 1], strides = [1, 1]} : vector<8x5xf32> to vector<8x1xf32>
    %576 = vector.extract_strided_slice %3 {offsets = [3, 0, 0], sizes = [1, 8, 8], strides = [1, 1, 1]} : vector<5x8x8xf32> to vector<1x8x8xf32>
    %577 = vector.shape_cast %576 : vector<1x8x8xf32> to vector<8x8xf32>
    %578 = vector.broadcast %575 : vector<8x1xf32> to vector<8x8xf32>
    %579 = arith.mulf %578, %577 : vector<8x8xf32>
    %580 = arith.addf %574, %579 : vector<8x8xf32>
    %581 = vector.extract_strided_slice %554 {offsets = [0, 4], sizes = [8, 1], strides = [1, 1]} : vector<8x5xf32> to vector<8x1xf32>
    %582 = vector.extract_strided_slice %3 {offsets = [4, 0, 0], sizes = [1, 8, 8], strides = [1, 1, 1]} : vector<5x8x8xf32> to vector<1x8x8xf32>
    %583 = vector.shape_cast %582 : vector<1x8x8xf32> to vector<8x8xf32>
    %584 = vector.broadcast %581 : vector<8x1xf32> to vector<8x8xf32>
    %585 = arith.mulf %584, %583 : vector<8x8xf32>
    %586 = arith.addf %580, %585 : vector<8x8xf32>
    %587 = vector.broadcast %12 : f32 to vector<8x8xf32>
    %588 = arith.mulf %586, %587 : vector<8x8xf32>
    %589 = arith.addf %588, %10 : vector<8x8xf32>
    %cst_150 = arith.constant dense<0xFF800000> : vector<8xf32>
    %590 = vector.multi_reduction <maximumf>, %589, %cst_150 [1] : vector<8x8xf32> to vector<8xf32>
    %591 = vector.shape_cast %590 : vector<8xf32> to vector<8x1xf32>
    %592 = vector.broadcast %591 : vector<8x1xf32> to vector<8x8xf32>
    %593 = arith.subf %589, %592 : vector<8x8xf32>
    %594 = math.exp %593 : vector<8x8xf32>
    %595 = arith.mulf %594, %5 : vector<8x8xf32>
    %cst_151 = arith.constant dense<0.000000e+00> : vector<8xf32>
    %596 = vector.multi_reduction <add>, %595, %cst_151 [1] : vector<8x8xf32> to vector<8xf32>
    %597 = vector.shape_cast %596 : vector<8xf32> to vector<8x1xf32>
    %cst_152 = arith.constant 9.99999996E-13 : f32
    %598 = vector.broadcast %cst_152 : f32 to vector<8x1xf32>
    %599 = arith.addf %597, %598 : vector<8x1xf32>
    %600 = tpu.reciprocal %599 {approx = true} : vector<8x1xf32> -> vector<8x1xf32>
    %601 = vector.broadcast %600 : vector<8x1xf32> to vector<8x8xf32>
    %602 = arith.mulf %595, %601 : vector<8x8xf32>
    %cst_153 = arith.constant dense<0.000000e+00> : vector<8x32xf32>
    %603 = tpu.matmul %602, %550, %cst_153 {dimension_numbers = #tpu.dot_dimension_numbers<[1], [0], [0], [1], [0, 0, 1, 1], [], []>} : vector<8x8xf32>, vector<8x32xf32>, vector<8x32xf32> -> vector<8x32xf32>
    %c4_154 = arith.constant 4 : index
    %c0_155 = arith.constant 0 : index
    %c0_156 = arith.constant 0 : index
    %604 = vector.load %arg6[%c4_154, %c0_155, %c0_156] : memref<7x5x32xf32, #tpu.memory_space<vmem>>, vector<1x5x32xf32>
    %605 = vector.shape_cast %604 : vector<1x5x32xf32> to vector<5x32xf32>
    %606 = vector.extract_strided_slice %3 {offsets = [0, 0, 0], sizes = [1, 8, 8], strides = [1, 1, 1]} : vector<5x8x8xf32> to vector<1x8x8xf32>
    %607 = vector.shape_cast %606 : vector<1x8x8xf32> to vector<8x8xf32>
    %608 = arith.mulf %602, %607 : vector<8x8xf32>
    %cst_157 = arith.constant dense<0.000000e+00> : vector<8xf32>
    %609 = vector.multi_reduction <add>, %608, %cst_157 [1] : vector<8x8xf32> to vector<8xf32>
    %610 = vector.shape_cast %609 : vector<8xf32> to vector<8x1xf32>
    %611 = vector.extract_strided_slice %605 {offsets = [0, 0], sizes = [1, 32], strides = [1, 1]} : vector<5x32xf32> to vector<1x32xf32>
    %612 = vector.broadcast %610 : vector<8x1xf32> to vector<8x32xf32>
    %613 = vector.broadcast %611 : vector<1x32xf32> to vector<8x32xf32>
    %614 = arith.mulf %612, %613 : vector<8x32xf32>
    %615 = arith.addf %603, %614 : vector<8x32xf32>
    %616 = vector.extract_strided_slice %3 {offsets = [1, 0, 0], sizes = [1, 8, 8], strides = [1, 1, 1]} : vector<5x8x8xf32> to vector<1x8x8xf32>
    %617 = vector.shape_cast %616 : vector<1x8x8xf32> to vector<8x8xf32>
    %618 = arith.mulf %602, %617 : vector<8x8xf32>
    %cst_158 = arith.constant dense<0.000000e+00> : vector<8xf32>
    %619 = vector.multi_reduction <add>, %618, %cst_158 [1] : vector<8x8xf32> to vector<8xf32>
    %620 = vector.shape_cast %619 : vector<8xf32> to vector<8x1xf32>
    %621 = vector.extract_strided_slice %605 {offsets = [1, 0], sizes = [1, 32], strides = [1, 1]} : vector<5x32xf32> to vector<1x32xf32>
    %622 = vector.broadcast %620 : vector<8x1xf32> to vector<8x32xf32>
    %623 = vector.broadcast %621 : vector<1x32xf32> to vector<8x32xf32>
    %624 = arith.mulf %622, %623 : vector<8x32xf32>
    %625 = arith.addf %615, %624 : vector<8x32xf32>
    %626 = vector.extract_strided_slice %3 {offsets = [2, 0, 0], sizes = [1, 8, 8], strides = [1, 1, 1]} : vector<5x8x8xf32> to vector<1x8x8xf32>
    %627 = vector.shape_cast %626 : vector<1x8x8xf32> to vector<8x8xf32>
    %628 = arith.mulf %602, %627 : vector<8x8xf32>
    %cst_159 = arith.constant dense<0.000000e+00> : vector<8xf32>
    %629 = vector.multi_reduction <add>, %628, %cst_159 [1] : vector<8x8xf32> to vector<8xf32>
    %630 = vector.shape_cast %629 : vector<8xf32> to vector<8x1xf32>
    %631 = vector.extract_strided_slice %605 {offsets = [2, 0], sizes = [1, 32], strides = [1, 1]} : vector<5x32xf32> to vector<1x32xf32>
    %632 = vector.broadcast %630 : vector<8x1xf32> to vector<8x32xf32>
    %633 = vector.broadcast %631 : vector<1x32xf32> to vector<8x32xf32>
    %634 = arith.mulf %632, %633 : vector<8x32xf32>
    %635 = arith.addf %625, %634 : vector<8x32xf32>
    %636 = vector.extract_strided_slice %3 {offsets = [3, 0, 0], sizes = [1, 8, 8], strides = [1, 1, 1]} : vector<5x8x8xf32> to vector<1x8x8xf32>
    %637 = vector.shape_cast %636 : vector<1x8x8xf32> to vector<8x8xf32>
    %638 = arith.mulf %602, %637 : vector<8x8xf32>
    %cst_160 = arith.constant dense<0.000000e+00> : vector<8xf32>
    %639 = vector.multi_reduction <add>, %638, %cst_160 [1] : vector<8x8xf32> to vector<8xf32>
    %640 = vector.shape_cast %639 : vector<8xf32> to vector<8x1xf32>
    %641 = vector.extract_strided_slice %605 {offsets = [3, 0], sizes = [1, 32], strides = [1, 1]} : vector<5x32xf32> to vector<1x32xf32>
    %642 = vector.broadcast %640 : vector<8x1xf32> to vector<8x32xf32>
    %643 = vector.broadcast %641 : vector<1x32xf32> to vector<8x32xf32>
    %644 = arith.mulf %642, %643 : vector<8x32xf32>
    %645 = arith.addf %635, %644 : vector<8x32xf32>
    %646 = vector.extract_strided_slice %3 {offsets = [4, 0, 0], sizes = [1, 8, 8], strides = [1, 1, 1]} : vector<5x8x8xf32> to vector<1x8x8xf32>
    %647 = vector.shape_cast %646 : vector<1x8x8xf32> to vector<8x8xf32>
    %648 = arith.mulf %602, %647 : vector<8x8xf32>
    %cst_161 = arith.constant dense<0.000000e+00> : vector<8xf32>
    %649 = vector.multi_reduction <add>, %648, %cst_161 [1] : vector<8x8xf32> to vector<8xf32>
    %650 = vector.shape_cast %649 : vector<8xf32> to vector<8x1xf32>
    %651 = vector.extract_strided_slice %605 {offsets = [4, 0], sizes = [1, 32], strides = [1, 1]} : vector<5x32xf32> to vector<1x32xf32>
    %652 = vector.broadcast %650 : vector<8x1xf32> to vector<8x32xf32>
    %653 = vector.broadcast %651 : vector<1x32xf32> to vector<8x32xf32>
    %654 = arith.mulf %652, %653 : vector<8x32xf32>
    %655 = arith.addf %645, %654 : vector<8x32xf32>
    %656 = arith.addf %655, %551 : vector<8x32xf32>
    %cst_162 = arith.constant 0.000000e+00 : f32
    %657 = vector.broadcast %cst_162 : f32 to vector<8x32xf32>
    %658 = arith.cmpf ogt, %656, %657 : vector<8x32xf32>
    %cst_163 = arith.constant 0.000000e+00 : f32
    %659 = vector.broadcast %cst_163 : f32 to vector<8x32xf32>
    %660 = arith.cmpf olt, %656, %659 : vector<8x32xf32>
    %cst_164 = arith.constant -1.000000e+00 : f32
    %cst_165 = arith.constant 0.000000e+00 : f32
    %661 = vector.broadcast %cst_164 : f32 to vector<8x32xf32>
    %662 = vector.broadcast %cst_165 : f32 to vector<8x32xf32>
    %663 = arith.select %660, %661, %662 : vector<8x32xi1>, vector<8x32xf32>
    %cst_166 = arith.constant 1.000000e+00 : f32
    %664 = vector.broadcast %cst_166 : f32 to vector<8x32xf32>
    %665 = arith.select %658, %664, %663 : vector<8x32xi1>, vector<8x32xf32>
    %666 = math.absf %656 : vector<8x32xf32>
    %c4_167 = arith.constant 4 : index
    %c0_168 = arith.constant 0 : index
    %c0_169 = arith.constant 0 : index
    %667 = vector.load %arg7[%c4_167, %c0_168, %c0_169] : memref<7x1x32xf32, #tpu.memory_space<vmem>>, vector<1x1x32xf32>
    %668 = vector.shape_cast %667 : vector<1x1x32xf32> to vector<1x32xf32>
    %669 = vector.broadcast %668 : vector<1x32xf32> to vector<8x32xf32>
    %670 = arith.mulf %666, %669 : vector<8x32xf32>
    %c4_170 = arith.constant 4 : index
    %c0_171 = arith.constant 0 : index
    %c0_172 = arith.constant 0 : index
    %671 = vector.load %arg8[%c4_170, %c0_171, %c0_172] : memref<7x1x32xf32, #tpu.memory_space<vmem>>, vector<1x1x32xf32>
    %672 = vector.shape_cast %671 : vector<1x1x32xf32> to vector<1x32xf32>
    %673 = vector.broadcast %672 : vector<1x32xf32> to vector<8x32xf32>
    %674 = arith.addf %670, %673 : vector<8x32xf32>
    %cst_173 = arith.constant 0.000000e+00 : f32
    %675 = vector.broadcast %cst_173 : f32 to vector<8x32xf32>
    %676 = arith.maximumf %674, %675 : vector<8x32xf32>
    %677 = arith.mulf %665, %676 : vector<8x32xf32>
    %c5 = arith.constant 5 : index
    %c0_174 = arith.constant 0 : index
    %c0_175 = arith.constant 0 : index
    %678 = vector.load %arg4[%c5, %c0_174, %c0_175] : memref<7x32x128xf32, #tpu.memory_space<vmem>>, vector<1x32x128xf32>
    %679 = vector.shape_cast %678 : vector<1x32x128xf32> to vector<32x128xf32>
    %cst_176 = arith.constant dense<0.000000e+00> : vector<8x128xf32>
    %680 = tpu.matmul %677, %679, %cst_176 {dimension_numbers = #tpu.dot_dimension_numbers<[1], [0], [0], [1], [0, 0, 1, 1], [], []>} : vector<8x32xf32>, vector<32x128xf32>, vector<8x128xf32> -> vector<8x128xf32>
    %681 = vector.extract_strided_slice %680 {offsets = [0, 0], sizes = [8, 32], strides = [1, 1]} : vector<8x128xf32> to vector<8x32xf32>
    %682 = vector.extract_strided_slice %680 {offsets = [0, 32], sizes = [8, 32], strides = [1, 1]} : vector<8x128xf32> to vector<8x32xf32>
    %683 = vector.extract_strided_slice %680 {offsets = [0, 64], sizes = [8, 32], strides = [1, 1]} : vector<8x128xf32> to vector<8x32xf32>
    %684 = vector.extract_strided_slice %680 {offsets = [0, 96], sizes = [8, 32], strides = [1, 1]} : vector<8x128xf32> to vector<8x32xf32>
    %c5_177 = arith.constant 5 : index
    %c0_178 = arith.constant 0 : index
    %c0_179 = arith.constant 0 : index
    %685 = vector.load %arg5[%c5_177, %c0_178, %c0_179] : memref<7x32x5xf32, #tpu.memory_space<vmem>>, vector<1x32x5xf32>
    %686 = vector.shape_cast %685 : vector<1x32x5xf32> to vector<32x5xf32>
    %cst_180 = arith.constant dense<0.000000e+00> : vector<8x5xf32>
    %687 = tpu.matmul %681, %686, %cst_180 {dimension_numbers = #tpu.dot_dimension_numbers<[1], [0], [0], [1], [0, 0, 1, 1], [], []>} : vector<8x32xf32>, vector<32x5xf32>, vector<8x5xf32> -> vector<8x5xf32>
    %688 = tpu.transpose %682, [1, 0] : vector<8x32xf32> -> vector<32x8xf32>
    %cst_181 = arith.constant dense<0.000000e+00> : vector<8x8xf32>
    %689 = tpu.matmul %681, %688, %cst_181 {dimension_numbers = #tpu.dot_dimension_numbers<[1], [0], [0], [1], [0, 0, 1, 1], [], []>} : vector<8x32xf32>, vector<32x8xf32>, vector<8x8xf32> -> vector<8x8xf32>
    %690 = vector.extract_strided_slice %687 {offsets = [0, 0], sizes = [8, 1], strides = [1, 1]} : vector<8x5xf32> to vector<8x1xf32>
    %691 = vector.extract_strided_slice %3 {offsets = [0, 0, 0], sizes = [1, 8, 8], strides = [1, 1, 1]} : vector<5x8x8xf32> to vector<1x8x8xf32>
    %692 = vector.shape_cast %691 : vector<1x8x8xf32> to vector<8x8xf32>
    %693 = vector.broadcast %690 : vector<8x1xf32> to vector<8x8xf32>
    %694 = arith.mulf %693, %692 : vector<8x8xf32>
    %695 = arith.addf %689, %694 : vector<8x8xf32>
    %696 = vector.extract_strided_slice %687 {offsets = [0, 1], sizes = [8, 1], strides = [1, 1]} : vector<8x5xf32> to vector<8x1xf32>
    %697 = vector.extract_strided_slice %3 {offsets = [1, 0, 0], sizes = [1, 8, 8], strides = [1, 1, 1]} : vector<5x8x8xf32> to vector<1x8x8xf32>
    %698 = vector.shape_cast %697 : vector<1x8x8xf32> to vector<8x8xf32>
    %699 = vector.broadcast %696 : vector<8x1xf32> to vector<8x8xf32>
    %700 = arith.mulf %699, %698 : vector<8x8xf32>
    %701 = arith.addf %695, %700 : vector<8x8xf32>
    %702 = vector.extract_strided_slice %687 {offsets = [0, 2], sizes = [8, 1], strides = [1, 1]} : vector<8x5xf32> to vector<8x1xf32>
    %703 = vector.extract_strided_slice %3 {offsets = [2, 0, 0], sizes = [1, 8, 8], strides = [1, 1, 1]} : vector<5x8x8xf32> to vector<1x8x8xf32>
    %704 = vector.shape_cast %703 : vector<1x8x8xf32> to vector<8x8xf32>
    %705 = vector.broadcast %702 : vector<8x1xf32> to vector<8x8xf32>
    %706 = arith.mulf %705, %704 : vector<8x8xf32>
    %707 = arith.addf %701, %706 : vector<8x8xf32>
    %708 = vector.extract_strided_slice %687 {offsets = [0, 3], sizes = [8, 1], strides = [1, 1]} : vector<8x5xf32> to vector<8x1xf32>
    %709 = vector.extract_strided_slice %3 {offsets = [3, 0, 0], sizes = [1, 8, 8], strides = [1, 1, 1]} : vector<5x8x8xf32> to vector<1x8x8xf32>
    %710 = vector.shape_cast %709 : vector<1x8x8xf32> to vector<8x8xf32>
    %711 = vector.broadcast %708 : vector<8x1xf32> to vector<8x8xf32>
    %712 = arith.mulf %711, %710 : vector<8x8xf32>
    %713 = arith.addf %707, %712 : vector<8x8xf32>
    %714 = vector.extract_strided_slice %687 {offsets = [0, 4], sizes = [8, 1], strides = [1, 1]} : vector<8x5xf32> to vector<8x1xf32>
    %715 = vector.extract_strided_slice %3 {offsets = [4, 0, 0], sizes = [1, 8, 8], strides = [1, 1, 1]} : vector<5x8x8xf32> to vector<1x8x8xf32>
    %716 = vector.shape_cast %715 : vector<1x8x8xf32> to vector<8x8xf32>
    %717 = vector.broadcast %714 : vector<8x1xf32> to vector<8x8xf32>
    %718 = arith.mulf %717, %716 : vector<8x8xf32>
    %719 = arith.addf %713, %718 : vector<8x8xf32>
    %720 = vector.broadcast %12 : f32 to vector<8x8xf32>
    %721 = arith.mulf %719, %720 : vector<8x8xf32>
    %722 = arith.addf %721, %10 : vector<8x8xf32>
    %cst_182 = arith.constant dense<0xFF800000> : vector<8xf32>
    %723 = vector.multi_reduction <maximumf>, %722, %cst_182 [1] : vector<8x8xf32> to vector<8xf32>
    %724 = vector.shape_cast %723 : vector<8xf32> to vector<8x1xf32>
    %725 = vector.broadcast %724 : vector<8x1xf32> to vector<8x8xf32>
    %726 = arith.subf %722, %725 : vector<8x8xf32>
    %727 = math.exp %726 : vector<8x8xf32>
    %728 = arith.mulf %727, %5 : vector<8x8xf32>
    %cst_183 = arith.constant dense<0.000000e+00> : vector<8xf32>
    %729 = vector.multi_reduction <add>, %728, %cst_183 [1] : vector<8x8xf32> to vector<8xf32>
    %730 = vector.shape_cast %729 : vector<8xf32> to vector<8x1xf32>
    %cst_184 = arith.constant 9.99999996E-13 : f32
    %731 = vector.broadcast %cst_184 : f32 to vector<8x1xf32>
    %732 = arith.addf %730, %731 : vector<8x1xf32>
    %733 = tpu.reciprocal %732 {approx = true} : vector<8x1xf32> -> vector<8x1xf32>
    %734 = vector.broadcast %733 : vector<8x1xf32> to vector<8x8xf32>
    %735 = arith.mulf %728, %734 : vector<8x8xf32>
    %cst_185 = arith.constant dense<0.000000e+00> : vector<8x32xf32>
    %736 = tpu.matmul %735, %683, %cst_185 {dimension_numbers = #tpu.dot_dimension_numbers<[1], [0], [0], [1], [0, 0, 1, 1], [], []>} : vector<8x8xf32>, vector<8x32xf32>, vector<8x32xf32> -> vector<8x32xf32>
    %c5_186 = arith.constant 5 : index
    %c0_187 = arith.constant 0 : index
    %c0_188 = arith.constant 0 : index
    %737 = vector.load %arg6[%c5_186, %c0_187, %c0_188] : memref<7x5x32xf32, #tpu.memory_space<vmem>>, vector<1x5x32xf32>
    %738 = vector.shape_cast %737 : vector<1x5x32xf32> to vector<5x32xf32>
    %739 = vector.extract_strided_slice %3 {offsets = [0, 0, 0], sizes = [1, 8, 8], strides = [1, 1, 1]} : vector<5x8x8xf32> to vector<1x8x8xf32>
    %740 = vector.shape_cast %739 : vector<1x8x8xf32> to vector<8x8xf32>
    %741 = arith.mulf %735, %740 : vector<8x8xf32>
    %cst_189 = arith.constant dense<0.000000e+00> : vector<8xf32>
    %742 = vector.multi_reduction <add>, %741, %cst_189 [1] : vector<8x8xf32> to vector<8xf32>
    %743 = vector.shape_cast %742 : vector<8xf32> to vector<8x1xf32>
    %744 = vector.extract_strided_slice %738 {offsets = [0, 0], sizes = [1, 32], strides = [1, 1]} : vector<5x32xf32> to vector<1x32xf32>
    %745 = vector.broadcast %743 : vector<8x1xf32> to vector<8x32xf32>
    %746 = vector.broadcast %744 : vector<1x32xf32> to vector<8x32xf32>
    %747 = arith.mulf %745, %746 : vector<8x32xf32>
    %748 = arith.addf %736, %747 : vector<8x32xf32>
    %749 = vector.extract_strided_slice %3 {offsets = [1, 0, 0], sizes = [1, 8, 8], strides = [1, 1, 1]} : vector<5x8x8xf32> to vector<1x8x8xf32>
    %750 = vector.shape_cast %749 : vector<1x8x8xf32> to vector<8x8xf32>
    %751 = arith.mulf %735, %750 : vector<8x8xf32>
    %cst_190 = arith.constant dense<0.000000e+00> : vector<8xf32>
    %752 = vector.multi_reduction <add>, %751, %cst_190 [1] : vector<8x8xf32> to vector<8xf32>
    %753 = vector.shape_cast %752 : vector<8xf32> to vector<8x1xf32>
    %754 = vector.extract_strided_slice %738 {offsets = [1, 0], sizes = [1, 32], strides = [1, 1]} : vector<5x32xf32> to vector<1x32xf32>
    %755 = vector.broadcast %753 : vector<8x1xf32> to vector<8x32xf32>
    %756 = vector.broadcast %754 : vector<1x32xf32> to vector<8x32xf32>
    %757 = arith.mulf %755, %756 : vector<8x32xf32>
    %758 = arith.addf %748, %757 : vector<8x32xf32>
    %759 = vector.extract_strided_slice %3 {offsets = [2, 0, 0], sizes = [1, 8, 8], strides = [1, 1, 1]} : vector<5x8x8xf32> to vector<1x8x8xf32>
    %760 = vector.shape_cast %759 : vector<1x8x8xf32> to vector<8x8xf32>
    %761 = arith.mulf %735, %760 : vector<8x8xf32>
    %cst_191 = arith.constant dense<0.000000e+00> : vector<8xf32>
    %762 = vector.multi_reduction <add>, %761, %cst_191 [1] : vector<8x8xf32> to vector<8xf32>
    %763 = vector.shape_cast %762 : vector<8xf32> to vector<8x1xf32>
    %764 = vector.extract_strided_slice %738 {offsets = [2, 0], sizes = [1, 32], strides = [1, 1]} : vector<5x32xf32> to vector<1x32xf32>
    %765 = vector.broadcast %763 : vector<8x1xf32> to vector<8x32xf32>
    %766 = vector.broadcast %764 : vector<1x32xf32> to vector<8x32xf32>
    %767 = arith.mulf %765, %766 : vector<8x32xf32>
    %768 = arith.addf %758, %767 : vector<8x32xf32>
    %769 = vector.extract_strided_slice %3 {offsets = [3, 0, 0], sizes = [1, 8, 8], strides = [1, 1, 1]} : vector<5x8x8xf32> to vector<1x8x8xf32>
    %770 = vector.shape_cast %769 : vector<1x8x8xf32> to vector<8x8xf32>
    %771 = arith.mulf %735, %770 : vector<8x8xf32>
    %cst_192 = arith.constant dense<0.000000e+00> : vector<8xf32>
    %772 = vector.multi_reduction <add>, %771, %cst_192 [1] : vector<8x8xf32> to vector<8xf32>
    %773 = vector.shape_cast %772 : vector<8xf32> to vector<8x1xf32>
    %774 = vector.extract_strided_slice %738 {offsets = [3, 0], sizes = [1, 32], strides = [1, 1]} : vector<5x32xf32> to vector<1x32xf32>
    %775 = vector.broadcast %773 : vector<8x1xf32> to vector<8x32xf32>
    %776 = vector.broadcast %774 : vector<1x32xf32> to vector<8x32xf32>
    %777 = arith.mulf %775, %776 : vector<8x32xf32>
    %778 = arith.addf %768, %777 : vector<8x32xf32>
    %779 = vector.extract_strided_slice %3 {offsets = [4, 0, 0], sizes = [1, 8, 8], strides = [1, 1, 1]} : vector<5x8x8xf32> to vector<1x8x8xf32>
    %780 = vector.shape_cast %779 : vector<1x8x8xf32> to vector<8x8xf32>
    %781 = arith.mulf %735, %780 : vector<8x8xf32>
    %cst_193 = arith.constant dense<0.000000e+00> : vector<8xf32>
    %782 = vector.multi_reduction <add>, %781, %cst_193 [1] : vector<8x8xf32> to vector<8xf32>
    %783 = vector.shape_cast %782 : vector<8xf32> to vector<8x1xf32>
    %784 = vector.extract_strided_slice %738 {offsets = [4, 0], sizes = [1, 32], strides = [1, 1]} : vector<5x32xf32> to vector<1x32xf32>
    %785 = vector.broadcast %783 : vector<8x1xf32> to vector<8x32xf32>
    %786 = vector.broadcast %784 : vector<1x32xf32> to vector<8x32xf32>
    %787 = arith.mulf %785, %786 : vector<8x32xf32>
    %788 = arith.addf %778, %787 : vector<8x32xf32>
    %789 = arith.addf %788, %684 : vector<8x32xf32>
    %cst_194 = arith.constant 0.000000e+00 : f32
    %790 = vector.broadcast %cst_194 : f32 to vector<8x32xf32>
    %791 = arith.cmpf ogt, %789, %790 : vector<8x32xf32>
    %cst_195 = arith.constant 0.000000e+00 : f32
    %792 = vector.broadcast %cst_195 : f32 to vector<8x32xf32>
    %793 = arith.cmpf olt, %789, %792 : vector<8x32xf32>
    %cst_196 = arith.constant -1.000000e+00 : f32
    %cst_197 = arith.constant 0.000000e+00 : f32
    %794 = vector.broadcast %cst_196 : f32 to vector<8x32xf32>
    %795 = vector.broadcast %cst_197 : f32 to vector<8x32xf32>
    %796 = arith.select %793, %794, %795 : vector<8x32xi1>, vector<8x32xf32>
    %cst_198 = arith.constant 1.000000e+00 : f32
    %797 = vector.broadcast %cst_198 : f32 to vector<8x32xf32>
    %798 = arith.select %791, %797, %796 : vector<8x32xi1>, vector<8x32xf32>
    %799 = math.absf %789 : vector<8x32xf32>
    %c5_199 = arith.constant 5 : index
    %c0_200 = arith.constant 0 : index
    %c0_201 = arith.constant 0 : index
    %800 = vector.load %arg7[%c5_199, %c0_200, %c0_201] : memref<7x1x32xf32, #tpu.memory_space<vmem>>, vector<1x1x32xf32>
    %801 = vector.shape_cast %800 : vector<1x1x32xf32> to vector<1x32xf32>
    %802 = vector.broadcast %801 : vector<1x32xf32> to vector<8x32xf32>
    %803 = arith.mulf %799, %802 : vector<8x32xf32>
    %c5_202 = arith.constant 5 : index
    %c0_203 = arith.constant 0 : index
    %c0_204 = arith.constant 0 : index
    %804 = vector.load %arg8[%c5_202, %c0_203, %c0_204] : memref<7x1x32xf32, #tpu.memory_space<vmem>>, vector<1x1x32xf32>
    %805 = vector.shape_cast %804 : vector<1x1x32xf32> to vector<1x32xf32>
    %806 = vector.broadcast %805 : vector<1x32xf32> to vector<8x32xf32>
    %807 = arith.addf %803, %806 : vector<8x32xf32>
    %cst_205 = arith.constant 0.000000e+00 : f32
    %808 = vector.broadcast %cst_205 : f32 to vector<8x32xf32>
    %809 = arith.maximumf %807, %808 : vector<8x32xf32>
    %810 = arith.mulf %798, %809 : vector<8x32xf32>
    %c6 = arith.constant 6 : index
    %c0_206 = arith.constant 0 : index
    %c0_207 = arith.constant 0 : index
    %811 = vector.load %arg4[%c6, %c0_206, %c0_207] : memref<7x32x128xf32, #tpu.memory_space<vmem>>, vector<1x32x128xf32>
    %812 = vector.shape_cast %811 : vector<1x32x128xf32> to vector<32x128xf32>
    %cst_208 = arith.constant dense<0.000000e+00> : vector<8x128xf32>
    %813 = tpu.matmul %810, %812, %cst_208 {dimension_numbers = #tpu.dot_dimension_numbers<[1], [0], [0], [1], [0, 0, 1, 1], [], []>} : vector<8x32xf32>, vector<32x128xf32>, vector<8x128xf32> -> vector<8x128xf32>
    %814 = vector.extract_strided_slice %813 {offsets = [0, 0], sizes = [8, 32], strides = [1, 1]} : vector<8x128xf32> to vector<8x32xf32>
    %815 = vector.extract_strided_slice %813 {offsets = [0, 32], sizes = [8, 32], strides = [1, 1]} : vector<8x128xf32> to vector<8x32xf32>
    %816 = vector.extract_strided_slice %813 {offsets = [0, 64], sizes = [8, 32], strides = [1, 1]} : vector<8x128xf32> to vector<8x32xf32>
    %817 = vector.extract_strided_slice %813 {offsets = [0, 96], sizes = [8, 32], strides = [1, 1]} : vector<8x128xf32> to vector<8x32xf32>
    %c6_209 = arith.constant 6 : index
    %c0_210 = arith.constant 0 : index
    %c0_211 = arith.constant 0 : index
    %818 = vector.load %arg5[%c6_209, %c0_210, %c0_211] : memref<7x32x5xf32, #tpu.memory_space<vmem>>, vector<1x32x5xf32>
    %819 = vector.shape_cast %818 : vector<1x32x5xf32> to vector<32x5xf32>
    %cst_212 = arith.constant dense<0.000000e+00> : vector<8x5xf32>
    %820 = tpu.matmul %814, %819, %cst_212 {dimension_numbers = #tpu.dot_dimension_numbers<[1], [0], [0], [1], [0, 0, 1, 1], [], []>} : vector<8x32xf32>, vector<32x5xf32>, vector<8x5xf32> -> vector<8x5xf32>
    %821 = tpu.transpose %815, [1, 0] : vector<8x32xf32> -> vector<32x8xf32>
    %cst_213 = arith.constant dense<0.000000e+00> : vector<8x8xf32>
    %822 = tpu.matmul %814, %821, %cst_213 {dimension_numbers = #tpu.dot_dimension_numbers<[1], [0], [0], [1], [0, 0, 1, 1], [], []>} : vector<8x32xf32>, vector<32x8xf32>, vector<8x8xf32> -> vector<8x8xf32>
    %823 = vector.extract_strided_slice %820 {offsets = [0, 0], sizes = [8, 1], strides = [1, 1]} : vector<8x5xf32> to vector<8x1xf32>
    %824 = vector.extract_strided_slice %3 {offsets = [0, 0, 0], sizes = [1, 8, 8], strides = [1, 1, 1]} : vector<5x8x8xf32> to vector<1x8x8xf32>
    %825 = vector.shape_cast %824 : vector<1x8x8xf32> to vector<8x8xf32>
    %826 = vector.broadcast %823 : vector<8x1xf32> to vector<8x8xf32>
    %827 = arith.mulf %826, %825 : vector<8x8xf32>
    %828 = arith.addf %822, %827 : vector<8x8xf32>
    %829 = vector.extract_strided_slice %820 {offsets = [0, 1], sizes = [8, 1], strides = [1, 1]} : vector<8x5xf32> to vector<8x1xf32>
    %830 = vector.extract_strided_slice %3 {offsets = [1, 0, 0], sizes = [1, 8, 8], strides = [1, 1, 1]} : vector<5x8x8xf32> to vector<1x8x8xf32>
    %831 = vector.shape_cast %830 : vector<1x8x8xf32> to vector<8x8xf32>
    %832 = vector.broadcast %829 : vector<8x1xf32> to vector<8x8xf32>
    %833 = arith.mulf %832, %831 : vector<8x8xf32>
    %834 = arith.addf %828, %833 : vector<8x8xf32>
    %835 = vector.extract_strided_slice %820 {offsets = [0, 2], sizes = [8, 1], strides = [1, 1]} : vector<8x5xf32> to vector<8x1xf32>
    %836 = vector.extract_strided_slice %3 {offsets = [2, 0, 0], sizes = [1, 8, 8], strides = [1, 1, 1]} : vector<5x8x8xf32> to vector<1x8x8xf32>
    %837 = vector.shape_cast %836 : vector<1x8x8xf32> to vector<8x8xf32>
    %838 = vector.broadcast %835 : vector<8x1xf32> to vector<8x8xf32>
    %839 = arith.mulf %838, %837 : vector<8x8xf32>
    %840 = arith.addf %834, %839 : vector<8x8xf32>
    %841 = vector.extract_strided_slice %820 {offsets = [0, 3], sizes = [8, 1], strides = [1, 1]} : vector<8x5xf32> to vector<8x1xf32>
    %842 = vector.extract_strided_slice %3 {offsets = [3, 0, 0], sizes = [1, 8, 8], strides = [1, 1, 1]} : vector<5x8x8xf32> to vector<1x8x8xf32>
    %843 = vector.shape_cast %842 : vector<1x8x8xf32> to vector<8x8xf32>
    %844 = vector.broadcast %841 : vector<8x1xf32> to vector<8x8xf32>
    %845 = arith.mulf %844, %843 : vector<8x8xf32>
    %846 = arith.addf %840, %845 : vector<8x8xf32>
    %847 = vector.extract_strided_slice %820 {offsets = [0, 4], sizes = [8, 1], strides = [1, 1]} : vector<8x5xf32> to vector<8x1xf32>
    %848 = vector.extract_strided_slice %3 {offsets = [4, 0, 0], sizes = [1, 8, 8], strides = [1, 1, 1]} : vector<5x8x8xf32> to vector<1x8x8xf32>
    %849 = vector.shape_cast %848 : vector<1x8x8xf32> to vector<8x8xf32>
    %850 = vector.broadcast %847 : vector<8x1xf32> to vector<8x8xf32>
    %851 = arith.mulf %850, %849 : vector<8x8xf32>
    %852 = arith.addf %846, %851 : vector<8x8xf32>
    %853 = vector.broadcast %12 : f32 to vector<8x8xf32>
    %854 = arith.mulf %852, %853 : vector<8x8xf32>
    %855 = arith.addf %854, %10 : vector<8x8xf32>
    %cst_214 = arith.constant dense<0xFF800000> : vector<8xf32>
    %856 = vector.multi_reduction <maximumf>, %855, %cst_214 [1] : vector<8x8xf32> to vector<8xf32>
    %857 = vector.shape_cast %856 : vector<8xf32> to vector<8x1xf32>
    %858 = vector.broadcast %857 : vector<8x1xf32> to vector<8x8xf32>
    %859 = arith.subf %855, %858 : vector<8x8xf32>
    %860 = math.exp %859 : vector<8x8xf32>
    %861 = arith.mulf %860, %5 : vector<8x8xf32>
    %cst_215 = arith.constant dense<0.000000e+00> : vector<8xf32>
    %862 = vector.multi_reduction <add>, %861, %cst_215 [1] : vector<8x8xf32> to vector<8xf32>
    %863 = vector.shape_cast %862 : vector<8xf32> to vector<8x1xf32>
    %cst_216 = arith.constant 9.99999996E-13 : f32
    %864 = vector.broadcast %cst_216 : f32 to vector<8x1xf32>
    %865 = arith.addf %863, %864 : vector<8x1xf32>
    %866 = tpu.reciprocal %865 {approx = true} : vector<8x1xf32> -> vector<8x1xf32>
    %867 = vector.broadcast %866 : vector<8x1xf32> to vector<8x8xf32>
    %868 = arith.mulf %861, %867 : vector<8x8xf32>
    %cst_217 = arith.constant dense<0.000000e+00> : vector<8x32xf32>
    %869 = tpu.matmul %868, %816, %cst_217 {dimension_numbers = #tpu.dot_dimension_numbers<[1], [0], [0], [1], [0, 0, 1, 1], [], []>} : vector<8x8xf32>, vector<8x32xf32>, vector<8x32xf32> -> vector<8x32xf32>
    %c6_218 = arith.constant 6 : index
    %c0_219 = arith.constant 0 : index
    %c0_220 = arith.constant 0 : index
    %870 = vector.load %arg6[%c6_218, %c0_219, %c0_220] : memref<7x5x32xf32, #tpu.memory_space<vmem>>, vector<1x5x32xf32>
    %871 = vector.shape_cast %870 : vector<1x5x32xf32> to vector<5x32xf32>
    %872 = vector.extract_strided_slice %3 {offsets = [0, 0, 0], sizes = [1, 8, 8], strides = [1, 1, 1]} : vector<5x8x8xf32> to vector<1x8x8xf32>
    %873 = vector.shape_cast %872 : vector<1x8x8xf32> to vector<8x8xf32>
    %874 = arith.mulf %868, %873 : vector<8x8xf32>
    %cst_221 = arith.constant dense<0.000000e+00> : vector<8xf32>
    %875 = vector.multi_reduction <add>, %874, %cst_221 [1] : vector<8x8xf32> to vector<8xf32>
    %876 = vector.shape_cast %875 : vector<8xf32> to vector<8x1xf32>
    %877 = vector.extract_strided_slice %871 {offsets = [0, 0], sizes = [1, 32], strides = [1, 1]} : vector<5x32xf32> to vector<1x32xf32>
    %878 = vector.broadcast %876 : vector<8x1xf32> to vector<8x32xf32>
    %879 = vector.broadcast %877 : vector<1x32xf32> to vector<8x32xf32>
    %880 = arith.mulf %878, %879 : vector<8x32xf32>
    %881 = arith.addf %869, %880 : vector<8x32xf32>
    %882 = vector.extract_strided_slice %3 {offsets = [1, 0, 0], sizes = [1, 8, 8], strides = [1, 1, 1]} : vector<5x8x8xf32> to vector<1x8x8xf32>
    %883 = vector.shape_cast %882 : vector<1x8x8xf32> to vector<8x8xf32>
    %884 = arith.mulf %868, %883 : vector<8x8xf32>
    %cst_222 = arith.constant dense<0.000000e+00> : vector<8xf32>
    %885 = vector.multi_reduction <add>, %884, %cst_222 [1] : vector<8x8xf32> to vector<8xf32>
    %886 = vector.shape_cast %885 : vector<8xf32> to vector<8x1xf32>
    %887 = vector.extract_strided_slice %871 {offsets = [1, 0], sizes = [1, 32], strides = [1, 1]} : vector<5x32xf32> to vector<1x32xf32>
    %888 = vector.broadcast %886 : vector<8x1xf32> to vector<8x32xf32>
    %889 = vector.broadcast %887 : vector<1x32xf32> to vector<8x32xf32>
    %890 = arith.mulf %888, %889 : vector<8x32xf32>
    %891 = arith.addf %881, %890 : vector<8x32xf32>
    %892 = vector.extract_strided_slice %3 {offsets = [2, 0, 0], sizes = [1, 8, 8], strides = [1, 1, 1]} : vector<5x8x8xf32> to vector<1x8x8xf32>
    %893 = vector.shape_cast %892 : vector<1x8x8xf32> to vector<8x8xf32>
    %894 = arith.mulf %868, %893 : vector<8x8xf32>
    %cst_223 = arith.constant dense<0.000000e+00> : vector<8xf32>
    %895 = vector.multi_reduction <add>, %894, %cst_223 [1] : vector<8x8xf32> to vector<8xf32>
    %896 = vector.shape_cast %895 : vector<8xf32> to vector<8x1xf32>
    %897 = vector.extract_strided_slice %871 {offsets = [2, 0], sizes = [1, 32], strides = [1, 1]} : vector<5x32xf32> to vector<1x32xf32>
    %898 = vector.broadcast %896 : vector<8x1xf32> to vector<8x32xf32>
    %899 = vector.broadcast %897 : vector<1x32xf32> to vector<8x32xf32>
    %900 = arith.mulf %898, %899 : vector<8x32xf32>
    %901 = arith.addf %891, %900 : vector<8x32xf32>
    %902 = vector.extract_strided_slice %3 {offsets = [3, 0, 0], sizes = [1, 8, 8], strides = [1, 1, 1]} : vector<5x8x8xf32> to vector<1x8x8xf32>
    %903 = vector.shape_cast %902 : vector<1x8x8xf32> to vector<8x8xf32>
    %904 = arith.mulf %868, %903 : vector<8x8xf32>
    %cst_224 = arith.constant dense<0.000000e+00> : vector<8xf32>
    %905 = vector.multi_reduction <add>, %904, %cst_224 [1] : vector<8x8xf32> to vector<8xf32>
    %906 = vector.shape_cast %905 : vector<8xf32> to vector<8x1xf32>
    %907 = vector.extract_strided_slice %871 {offsets = [3, 0], sizes = [1, 32], strides = [1, 1]} : vector<5x32xf32> to vector<1x32xf32>
    %908 = vector.broadcast %906 : vector<8x1xf32> to vector<8x32xf32>
    %909 = vector.broadcast %907 : vector<1x32xf32> to vector<8x32xf32>
    %910 = arith.mulf %908, %909 : vector<8x32xf32>
    %911 = arith.addf %901, %910 : vector<8x32xf32>
    %912 = vector.extract_strided_slice %3 {offsets = [4, 0, 0], sizes = [1, 8, 8], strides = [1, 1, 1]} : vector<5x8x8xf32> to vector<1x8x8xf32>
    %913 = vector.shape_cast %912 : vector<1x8x8xf32> to vector<8x8xf32>
    %914 = arith.mulf %868, %913 : vector<8x8xf32>
    %cst_225 = arith.constant dense<0.000000e+00> : vector<8xf32>
    %915 = vector.multi_reduction <add>, %914, %cst_225 [1] : vector<8x8xf32> to vector<8xf32>
    %916 = vector.shape_cast %915 : vector<8xf32> to vector<8x1xf32>
    %917 = vector.extract_strided_slice %871 {offsets = [4, 0], sizes = [1, 32], strides = [1, 1]} : vector<5x32xf32> to vector<1x32xf32>
    %918 = vector.broadcast %916 : vector<8x1xf32> to vector<8x32xf32>
    %919 = vector.broadcast %917 : vector<1x32xf32> to vector<8x32xf32>
    %920 = arith.mulf %918, %919 : vector<8x32xf32>
    %921 = arith.addf %911, %920 : vector<8x32xf32>
    %922 = arith.addf %921, %817 : vector<8x32xf32>
    %cst_226 = arith.constant 0.000000e+00 : f32
    %923 = vector.broadcast %cst_226 : f32 to vector<8x32xf32>
    %924 = arith.cmpf ogt, %922, %923 : vector<8x32xf32>
    %cst_227 = arith.constant 0.000000e+00 : f32
    %925 = vector.broadcast %cst_227 : f32 to vector<8x32xf32>
    %926 = arith.cmpf olt, %922, %925 : vector<8x32xf32>
    %cst_228 = arith.constant -1.000000e+00 : f32
    %cst_229 = arith.constant 0.000000e+00 : f32
    %927 = vector.broadcast %cst_228 : f32 to vector<8x32xf32>
    %928 = vector.broadcast %cst_229 : f32 to vector<8x32xf32>
    %929 = arith.select %926, %927, %928 : vector<8x32xi1>, vector<8x32xf32>
    %cst_230 = arith.constant 1.000000e+00 : f32
    %930 = vector.broadcast %cst_230 : f32 to vector<8x32xf32>
    %931 = arith.select %924, %930, %929 : vector<8x32xi1>, vector<8x32xf32>
    %932 = math.absf %922 : vector<8x32xf32>
    %c6_231 = arith.constant 6 : index
    %c0_232 = arith.constant 0 : index
    %c0_233 = arith.constant 0 : index
    %933 = vector.load %arg7[%c6_231, %c0_232, %c0_233] : memref<7x1x32xf32, #tpu.memory_space<vmem>>, vector<1x1x32xf32>
    %934 = vector.shape_cast %933 : vector<1x1x32xf32> to vector<1x32xf32>
    %935 = vector.broadcast %934 : vector<1x32xf32> to vector<8x32xf32>
    %936 = arith.mulf %932, %935 : vector<8x32xf32>
    %c6_234 = arith.constant 6 : index
    %c0_235 = arith.constant 0 : index
    %c0_236 = arith.constant 0 : index
    %937 = vector.load %arg8[%c6_234, %c0_235, %c0_236] : memref<7x1x32xf32, #tpu.memory_space<vmem>>, vector<1x1x32xf32>
    %938 = vector.shape_cast %937 : vector<1x1x32xf32> to vector<1x32xf32>
    %939 = vector.broadcast %938 : vector<1x32xf32> to vector<8x32xf32>
    %940 = arith.addf %936, %939 : vector<8x32xf32>
    %cst_237 = arith.constant 0.000000e+00 : f32
    %941 = vector.broadcast %cst_237 : f32 to vector<8x32xf32>
    %942 = arith.maximumf %940, %941 : vector<8x32xf32>
    %943 = arith.mulf %931, %942 : vector<8x32xf32>
    %cst_238 = arith.constant dense<0.000000e+00> : vector<8xf32>
    %944 = vector.multi_reduction <add>, %5, %cst_238 [1] : vector<8x8xf32> to vector<8xf32>
    %945 = vector.shape_cast %944 : vector<8xf32> to vector<8x1xf32>
    %cst_239 = arith.constant dense<0.000000e+00> : vector<8x32xf32>
    %946 = tpu.matmul %5, %943, %cst_239 {dimension_numbers = #tpu.dot_dimension_numbers<[1], [0], [0], [1], [0, 0, 1, 1], [], []>} : vector<8x8xf32>, vector<8x32xf32>, vector<8x32xf32> -> vector<8x32xf32>
    %cst_240 = arith.constant 9.99999996E-13 : f32
    %947 = vector.broadcast %cst_240 : f32 to vector<8x1xf32>
    %948 = arith.addf %945, %947 : vector<8x1xf32>
    %949 = tpu.reciprocal %948 {approx = true} : vector<8x1xf32> -> vector<8x1xf32>
    %950 = vector.broadcast %949 : vector<8x1xf32> to vector<8x32xf32>
    %951 = arith.mulf %946, %950 : vector<8x32xf32>
    %c0_241 = arith.constant 0 : index
    %c0_242 = arith.constant 0 : index
    %952 = vector.load %arg9[%c0_241, %c0_242] : memref<64x128xf32, #tpu.memory_space<vmem>>, vector<32x128xf32>
    %cst_243 = arith.constant dense<0.000000e+00> : vector<8x128xf32>
    %953 = tpu.matmul %943, %952, %cst_243 {dimension_numbers = #tpu.dot_dimension_numbers<[1], [0], [0], [1], [0, 0, 1, 1], [], []>} : vector<8x32xf32>, vector<32x128xf32>, vector<8x128xf32> -> vector<8x128xf32>
    %c32 = arith.constant 32 : index
    %c0_244 = arith.constant 0 : index
    %954 = vector.load %arg9[%c32, %c0_244] : memref<64x128xf32, #tpu.memory_space<vmem>>, vector<32x128xf32>
    %cst_245 = arith.constant dense<0.000000e+00> : vector<8x128xf32>
    %955 = tpu.matmul %951, %954, %cst_245 {dimension_numbers = #tpu.dot_dimension_numbers<[1], [0], [0], [1], [0, 0, 1, 1], [], []>} : vector<8x32xf32>, vector<32x128xf32>, vector<8x128xf32> -> vector<8x128xf32>
    %956 = arith.addf %953, %955 : vector<8x128xf32>
    %cst_246 = arith.constant dense<0xFF800000> : vector<128xf32>
    %957 = vector.multi_reduction <maximumf>, %956, %cst_246 [0] : vector<8x128xf32> to vector<128xf32>
    %958 = vector.shape_cast %957 : vector<128xf32> to vector<1x128xf32>
    %c0_247 = arith.constant 0 : index
    %c0_248 = arith.constant 0 : index
    %959 = vector.load %arg10[%c0_247, %c0_248] : memref<128x128xf32, #tpu.memory_space<vmem>>, vector<128x128xf32>
    %cst_249 = arith.constant dense<0.000000e+00> : vector<1x128xf32>
    %960 = tpu.matmul %958, %959, %cst_249 {dimension_numbers = #tpu.dot_dimension_numbers<[1], [0], [0], [1], [0, 0, 1, 1], [], []>} : vector<1x128xf32>, vector<128x128xf32>, vector<1x128xf32> -> vector<1x128xf32>
    %c0_250 = arith.constant 0 : index
    %c0_251 = arith.constant 0 : index
    %961 = vector.load %arg11[%c0_250, %c0_251] : memref<1x128xf32, #tpu.memory_space<vmem>>, vector<1x128xf32>
    %962 = arith.addf %960, %961 : vector<1x128xf32>
    %cst_252 = arith.constant 0.000000e+00 : f32
    %963 = vector.broadcast %cst_252 : f32 to vector<1x128xf32>
    %964 = arith.maximumf %962, %963 : vector<1x128xf32>
    %c0_253 = arith.constant 0 : index
    %c0_254 = arith.constant 0 : index
    %965 = vector.load %arg12[%c0_253, %c0_254] : memref<128x1xf32, #tpu.memory_space<vmem>>, vector<128x1xf32>
    %cst_255 = arith.constant dense<0.000000e+00> : vector<1x1xf32>
    %966 = tpu.matmul %964, %965, %cst_255 {dimension_numbers = #tpu.dot_dimension_numbers<[1], [0], [0], [1], [0, 0, 1, 1], [], []>} : vector<1x128xf32>, vector<128x1xf32>, vector<1x1xf32> -> vector<1x1xf32>
    %c0_256 = arith.constant 0 : index
    %c0_257 = arith.constant 0 : index
    %967 = vector.load %arg13[%c0_256, %c0_257] : memref<1x1xf32, #tpu.memory_space<vmem>>, vector<1x1xf32>
    %968 = arith.addf %966, %967 : vector<1x1xf32>
    %c0_258 = arith.constant 0 : index
    %c0_259 = arith.constant 0 : index
    %c0_260 = arith.constant 0 : index
    %969 = vector.load %arg14[%c0_258, %c0_259, %c0_260] : memref<1x1x1xf32, #tpu.memory_space<vmem>>, vector<1x1x1xf32>
    %970 = vector.shape_cast %969 : vector<1x1x1xf32> to vector<1x1xf32>
    %971 = vector.shape_cast %968 : vector<1x1xf32> to vector<1x1x1xf32>
    tpu.vector_store %arg14[%c0_258, %c0_259, %c0_260], %971 {strides = array<i32>} : memref<1x1x1xf32, #tpu.memory_space<vmem>>, vector<1x1x1xf32>,
    return
  }
  func.func @transform_0(%arg0: i32) -> (i32, i32, i32) {
    %c0_i32 = arith.constant 0 : i32
    %c0_i32_0 = arith.constant 0 : i32
    %c0_i32_1 = arith.constant 0 : i32
    return %arg0, %c0_i32, %c0_i32_0 : i32, i32, i32
  }
  func.func @transform_1(%arg0: i32) -> (i32, i32, i32, i32) {
    %c0_i32 = arith.constant 0 : i32
    %c0_i32_0 = arith.constant 0 : i32
    %c0_i32_1 = arith.constant 0 : i32
    %c0_i32_2 = arith.constant 0 : i32
    return %arg0, %c0_i32, %c0_i32_0, %c0_i32_1 : i32, i32, i32, i32
  }
  func.func @transform_2(%arg0: i32) -> (i32, i32, i32) {
    %c0_i32 = arith.constant 0 : i32
    %c0_i32_0 = arith.constant 0 : i32
    %c0_i32_1 = arith.constant 0 : i32
    return %arg0, %c0_i32, %c0_i32_0 : i32, i32, i32
  }
  func.func @transform_3(%arg0: i32) -> (i32, i32, i32) {
    %c0_i32 = arith.constant 0 : i32
    %c0_i32_0 = arith.constant 0 : i32
    %c0_i32_1 = arith.constant 0 : i32
    %c0_i32_2 = arith.constant 0 : i32
    return %c0_i32, %c0_i32_0, %c0_i32_1 : i32, i32, i32
  }
  func.func @transform_4(%arg0: i32) -> (i32, i32, i32) {
    %c0_i32 = arith.constant 0 : i32
    %c0_i32_0 = arith.constant 0 : i32
    %c0_i32_1 = arith.constant 0 : i32
    %c0_i32_2 = arith.constant 0 : i32
    return %c0_i32, %c0_i32_0, %c0_i32_1 : i32, i32, i32
  }
  func.func @transform_5(%arg0: i32) -> (i32, i32, i32) {
    %c0_i32 = arith.constant 0 : i32
    %c0_i32_0 = arith.constant 0 : i32
    %c0_i32_1 = arith.constant 0 : i32
    %c0_i32_2 = arith.constant 0 : i32
    return %c0_i32, %c0_i32_0, %c0_i32_1 : i32, i32, i32
  }
  func.func @transform_6(%arg0: i32) -> (i32, i32, i32) {
    %c0_i32 = arith.constant 0 : i32
    %c0_i32_0 = arith.constant 0 : i32
    %c0_i32_1 = arith.constant 0 : i32
    %c0_i32_2 = arith.constant 0 : i32
    return %c0_i32, %c0_i32_0, %c0_i32_1 : i32, i32, i32
  }
  func.func @transform_7(%arg0: i32) -> (i32, i32, i32) {
    %c0_i32 = arith.constant 0 : i32
    %c0_i32_0 = arith.constant 0 : i32
    %c0_i32_1 = arith.constant 0 : i32
    %c0_i32_2 = arith.constant 0 : i32
    return %c0_i32, %c0_i32_0, %c0_i32_1 : i32, i32, i32
  }
  func.func @transform_8(%arg0: i32) -> (i32, i32) {
    %c0_i32 = arith.constant 0 : i32
    %c0_i32_0 = arith.constant 0 : i32
    %c0_i32_1 = arith.constant 0 : i32
    return %c0_i32, %c0_i32_0 : i32, i32
  }
  func.func @transform_9(%arg0: i32) -> (i32, i32) {
    %c0_i32 = arith.constant 0 : i32
    %c0_i32_0 = arith.constant 0 : i32
    %c0_i32_1 = arith.constant 0 : i32
    return %c0_i32, %c0_i32_0 : i32, i32
  }
  func.func @transform_10(%arg0: i32) -> (i32, i32) {
    %c0_i32 = arith.constant 0 : i32
    %c0_i32_0 = arith.constant 0 : i32
    %c0_i32_1 = arith.constant 0 : i32
    return %c0_i32, %c0_i32_0 : i32, i32
  }
  func.func @transform_11(%arg0: i32) -> (i32, i32) {
    %c0_i32 = arith.constant 0 : i32
    %c0_i32_0 = arith.constant 0 : i32
    %c0_i32_1 = arith.constant 0 : i32
    return %c0_i32, %c0_i32_0 : i32, i32
  }
  func.func @transform_12(%arg0: i32) -> (i32, i32) {
    %c0_i32 = arith.constant 0 : i32
    %c0_i32_0 = arith.constant 0 : i32
    %c0_i32_1 = arith.constant 0 : i32
    return %c0_i32, %c0_i32_0 : i32, i32
  }
  func.func @transform_13(%arg0: i32) -> (i32, i32, i32) {
    %c0_i32 = arith.constant 0 : i32
    %c0_i32_0 = arith.constant 0 : i32
    %c0_i32_1 = arith.constant 0 : i32
    return %arg0, %c0_i32, %c0_i32_0 : i32, i32, i32
  }
}

</mosaic_0001>

<llo_original>
// kernel: se3_transformer_forward.1
$region0: #{se3_transformer_forward.1}
  #allocation0 [shape = 'u32[]', space=smem, size = 0x4, offset = 0x4, fixed_abs, tag = 'smem constant byte address 0x4 - core index']
  #allocation1 [shape = 'u32[144,128]{1,0:T(1,128)}', space=vmem, size = 0x12000, scoped, tag = 'internal scratch']
  #allocation2 [shape = 'f32[1,1]{1,0:T(1,128)S(1)}', space=vmem, size = 0x200, scoped, tag = 'scoped memory for se3_transformer_forward.1']
  %s0 = inlined_call_operand.vmem [shape: f32[2,8,32], index: 0, kind: input, shape index: {}]
  %s1 = inlined_call_operand.vmem [shape: f32[2,5,8,8], index: 1, kind: input, shape index: {}]
  %s2 = inlined_call_operand.vmem [shape: f32[2,8,8], index: 2, kind: input, shape index: {}]
  %s3 = inlined_call_operand.vmem [shape: f32[7,32,128], index: 3, kind: input, shape index: {}]
  %s4 = inlined_call_operand.vmem [shape: f32[7,32,5], index: 4, kind: input, shape index: {}]
  %s5 = inlined_call_operand.vmem [shape: f32[7,5,32], index: 5, kind: input, shape index: {}]
  %s6 = inlined_call_operand.vmem [shape: f32[7,1,32], index: 6, kind: input, shape index: {}]
  %s7 = inlined_call_operand.vmem [shape: f32[7,1,32], index: 7, kind: input, shape index: {}]
  %s8 = inlined_call_operand.vmem [shape: f32[64,128], index: 8, kind: input, shape index: {}]
  %s9 = inlined_call_operand.vmem [shape: f32[128,128], index: 9, kind: input, shape index: {}]
  %s10 = inlined_call_operand.vmem [shape: f32[1,128], index: 10, kind: input, shape index: {}]
  %s11 = inlined_call_operand.vmem [shape: f32[128,1], index: 11, kind: input, shape index: {}]
  %s12 = inlined_call_operand.<no memory space> [shape: f32[1,1], index: 12, kind: input, shape index: {}]
  %s13 = inlined_call_operand.vmem [shape: f32[2,1,1], index: 13, kind: output, shape index: {}]
  %s14 = sld [smem:[#allocation0]]
  $region85: #{se3_transformer_forward.1} parent=0
    _
  %s16 = ssub.s32 1, %s14
  %s17 = scalar_select 0, %s16, %s14
  %v18 = vstv %s12
  %19 = vst [vmem:[#allocation2] sm:$0x1] %v18
  loop: start=0, step=1, limit=4
  $region2: #{se3_transformer_forward.1} parent=0 // loop_pre_header
    _
  $region3: #{se3_transformer_forward.1} parent=0 // loop_header
    %s21 = sphi 0, %s25
    %p22 = scmp.ge.s32.totalorder %s21, 4
    %s31 = sphi 0, %s33
    %s34 = sphi 0, %s31
    %s35 = sphi 0, %s34
    %s51 = sphi 0, %s35
    %s57 = sphi 0, %s59
    %s60 = sphi 0, %s57
    %s61 = sphi 0, %s60
    %s77 = sphi 0, %s61
    %s83 = sphi 0, %s85
    %s86 = sphi 0, %s83
    %s87 = sphi 0, %s86
    %s103 = sphi 0, %s87
    %s107 = sphi 0, %s107
    %s109 = sphi 0, %s107
    %s110 = sphi 0, %s109
    %s124 = sphi 0, %s110
    %s128 = sphi 0, %s128
    %s130 = sphi 0, %s128
    %s131 = sphi 0, %s130
    %s145 = sphi 0, %s131
    %s149 = sphi 0, %s149
    %s151 = sphi 0, %s149
    %s152 = sphi 0, %s151
    %s166 = sphi 0, %s152
    %s170 = sphi 0, %s170
    %s172 = sphi 0, %s170
    %s173 = sphi 0, %s172
    %s187 = sphi 0, %s173
    %s191 = sphi 0, %s191
    %s193 = sphi 0, %s191
    %s194 = sphi 0, %s193
    %s208 = sphi 0, %s194
    %s212 = sphi 0, %s212
    %s214 = sphi 0, %s212
    %s215 = sphi 0, %s214
    %s229 = sphi 0, %s215
    %s233 = sphi 0, %s233
    %s235 = sphi 0, %s233
    %s236 = sphi 0, %s235
    %s250 = sphi 0, %s236
    %s254 = sphi 0, %s254
    %s256 = sphi 0, %s254
    %s257 = sphi 0, %s256
    %s271 = sphi 0, %s257
    %s275 = sphi 0, %s275
    %s277 = sphi 0, %s275
    %s278 = sphi 0, %s277
    %s292 = sphi 0, %s278
    %s296 = sphi 0, %s296
    %s298 = sphi 0, %s296
    %s299 = sphi 0, %s298
    %s313 = sphi 0, %s299
    %s319 = sphi 0, %s321
    %s322 = sphi 0, %s319
    %s323 = sphi 0, %s322
    %s339 = sphi 0, %s323
  $region4: #{se3_transformer_forward.1} parent=0 // loop_header_branch
    %24 = sbr.rel (%p22) target = $region8
  $region5: #{se3_transformer_forward.1} parent=0 // loop_body
    %s26 = ssub.s32 %s21, 1
    %s27 = ssub.s32 %s21, 2
    %s28 = sadd.s32 %s21, 1
    %s29 = ssub.s32 %s21, %s28
    %p30 = scmp.eq.s32.totalorder %s29, 0
    %s32 = sadd.s32 %s31, 1
    %s33 = scalar_select %p30, %s31, %s32
    %p36 = pneg %p30
    %p37 = scmp.eq.s32.totalorder %s21, 1
    %p38 = por %p36, %p37
    %p39 = scmp.ne.s32.totalorder %s31, %s34
    %p40 = scmp.eq.s32.totalorder %s21, 0
    %p41 = por %p39, %p40
    %p42 = scmp.ne.s32.totalorder %s31, %s34
    %p43 = scmp.eq.s32.totalorder %s26, 1
    %p44 = por %p42, %p43
    %p45 = scmp.ne.s32.totalorder %s34, %s35
    %p46 = scmp.eq.s32.totalorder %s26, 0
    %p47 = por %p45, %p46
    %p48 = scmp.ne.s32.totalorder %s34, %s35
    %p49 = scmp.eq.s32.totalorder %s27, 1
    %p50 = por %p48, %p49
    %p52 = scmp.ne.s32.totalorder %s35, %s51
    %p53 = scmp.eq.s32.totalorder %s27, 0
    %p54 = por %p52, %p53
    %s55 = ssub.s32 %s21, %s28
    %p56 = scmp.eq.s32.totalorder %s55, 0
    %s58 = sadd.s32 %s57, 1
    %s59 = scalar_select %p56, %s57, %s58
    %p62 = pneg %p56
    %p63 = scmp.eq.s32.totalorder %s21, 1
    %p64 = por %p62, %p63
    %p65 = scmp.ne.s32.totalorder %s57, %s60
    %p66 = scmp.eq.s32.totalorder %s21, 0
    %p67 = por %p65, %p66
    %p68 = scmp.ne.s32.totalorder %s57, %s60
    %p69 = scmp.eq.s32.totalorder %s26, 1
    %p70 = por %p68, %p69
    %p71 = scmp.ne.s32.totalorder %s60, %s61
    %p72 = scmp.eq.s32.totalorder %s26, 0
    %p73 = por %p71, %p72
    %p74 = scmp.ne.s32.totalorder %s60, %s61
    %p75 = scmp.eq.s32.totalorder %s27, 1
    %p76 = por %p74, %p75
    %p78 = scmp.ne.s32.totalorder %s61, %s77
    %p79 = scmp.eq.s32.totalorder %s27, 0
    %p80 = por %p78, %p79
    %s81 = ssub.s32 %s21, %s28
    %p82 = scmp.eq.s32.totalorder %s81, 0
    %s84 = sadd.s32 %s83, 1
    %s85 = scalar_select %p82, %s83, %s84
    %p88 = pneg %p82
    %p89 = scmp.eq.s32.totalorder %s21, 1
    %p90 = por %p88, %p89
    %p91 = scmp.ne.s32.totalorder %s83, %s86
    %p92 = scmp.eq.s32.totalorder %s21, 0
    %p93 = por %p91, %p92
    %p94 = scmp.ne.s32.totalorder %s83, %s86
    %p95 = scmp.eq.s32.totalorder %s26, 1
    %p96 = por %p94, %p95
    %p97 = scmp.ne.s32.totalorder %s86, %s87
    %p98 = scmp.eq.s32.totalorder %s26, 0
    %p99 = por %p97, %p98
    %p100 = scmp.ne.s32.totalorder %s86, %s87
    %p101 = scmp.eq.s32.totalorder %s27, 1
    %p102 = por %p100, %p101
    %p104 = scmp.ne.s32.totalorder %s87, %s103
    %p105 = scmp.eq.s32.totalorder %s27, 0
    %p106 = por %p104, %p105
    %s108 = sadd.s32 %s107, 1
    %p111 = scmp.eq.s32.totalorder %s21, 1
    %p112 = scmp.ne.s32.totalorder %s107, %s109
    %p113 = scmp.eq.s32.totalorder %s21, 0
    %p114 = por %p112, %p113
    %p115 = scmp.ne.s32.totalorder %s107, %s109
    %p116 = scmp.eq.s32.totalorder %s26, 1
    %p117 = por %p115, %p116
    %p118 = scmp.ne.s32.totalorder %s109, %s110
    %p119 = scmp.eq.s32.totalorder %s26, 0
    %p120 = por %p118, %p119
    %p121 = scmp.ne.s32.totalorder %s109, %s110
    %p122 = scmp.eq.s32.totalorder %s27, 1
    %p123 = por %p121, %p122
    %p125 = scmp.ne.s32.totalorder %s110, %s124
    %p126 = scmp.eq.s32.totalorder %s27, 0
    %p127 = por %p125, %p126
    %s129 = sadd.s32 %s128, 1
    %p132 = scmp.eq.s32.totalorder %s21, 1
    %p133 = scmp.ne.s32.totalorder %s128, %s130
    %p134 = scmp.eq.s32.totalorder %s21, 0
    %p135 = por %p133, %p134
    %p136 = scmp.ne.s32.totalorder %s128, %s130
    %p137 = scmp.eq.s32.totalorder %s26, 1
    %p138 = por %p136, %p137
    %p139 = scmp.ne.s32.totalorder %s130, %s131
    %p140 = scmp.eq.s32.totalorder %s26, 0
    %p141 = por %p139, %p140
    %p142 = scmp.ne.s32.totalorder %s130, %s131
    %p143 = scmp.eq.s32.totalorder %s27, 1
    %p144 = por %p142, %p143
    %p146 = scmp.ne.s32.totalorder %s131, %s145
    %p147 = scmp.eq.s32.totalorder %s27, 0
    %p148 = por %p146, %p147
    %s150 = sadd.s32 %s149, 1
    %p153 = scmp.eq.s32.totalorder %s21, 1
    %p154 = scmp.ne.s32.totalorder %s149, %s151
    %p155 = scmp.eq.s32.totalorder %s21, 0
    %p156 = por %p154, %p155
    %p157 = scmp.ne.s32.totalorder %s149, %s151
    %p158 = scmp.eq.s32.totalorder %s26, 1
    %p159 = por %p157, %p158
    %p160 = scmp.ne.s32.totalorder %s151, %s152
    %p161 = scmp.eq.s32.totalorder %s26, 0
    %p162 = por %p160, %p161
    %p163 = scmp.ne.s32.totalorder %s151, %s152
    %p164 = scmp.eq.s32.totalorder %s27, 1
    %p165 = por %p163, %p164
    %p167 = scmp.ne.s32.totalorder %s152, %s166
    %p168 = scmp.eq.s32.totalorder %s27, 0
    %p169 = por %p167, %p168
    %s171 = sadd.s32 %s170, 1
    %p174 = scmp.eq.s32.totalorder %s21, 1
    %p175 = scmp.ne.s32.totalorder %s170, %s172
    %p176 = scmp.eq.s32.totalorder %s21, 0
    %p177 = por %p175, %p176
    %p178 = scmp.ne.s32.totalorder %s170, %s172
    %p179 = scmp.eq.s32.totalorder %s26, 1
    %p180 = por %p178, %p179
    %p181 = scmp.ne.s32.totalorder %s172, %s173
    %p182 = scmp.eq.s32.totalorder %s26, 0
    %p183 = por %p181, %p182
    %p184 = scmp.ne.s32.totalorder %s172, %s173
    %p185 = scmp.eq.s32.totalorder %s27, 1
    %p186 = por %p184, %p185
    %p188 = scmp.ne.s32.totalorder %s173, %s187
    %p189 = scmp.eq.s32.totalorder %s27, 0
    %p190 = por %p188, %p189
    %s192 = sadd.s32 %s191, 1
    %p195 = scmp.eq.s32.totalorder %s21, 1
    %p196 = scmp.ne.s32.totalorder %s191, %s193
    %p197 = scmp.eq.s32.totalorder %s21, 0
    %p198 = por %p196, %p197
    %p199 = scmp.ne.s32.totalorder %s191, %s193
    %p200 = scmp.eq.s32.totalorder %s26, 1
    %p201 = por %p199, %p200
    %p202 = scmp.ne.s32.totalorder %s193, %s194
    %p203 = scmp.eq.s32.totalorder %s26, 0
    %p204 = por %p202, %p203
    %p205 = scmp.ne.s32.totalorder %s193, %s194
    %p206 = scmp.eq.s32.totalorder %s27, 1
    %p207 = por %p205, %p206
    %p209 = scmp.ne.s32.totalorder %s194, %s208
    %p210 = scmp.eq.s32.totalorder %s27, 0
    %p211 = por %p209, %p210
    %s213 = sadd.s32 %s212, 1
    %p216 = scmp.eq.s32.totalorder %s21, 1
    %p217 = scmp.ne.s32.totalorder %s212, %s214
    %p218 = scmp.eq.s32.totalorder %s21, 0
    %p219 = por %p217, %p218
    %p220 = scmp.ne.s32.totalorder %s212, %s214
    %p221 = scmp.eq.s32.totalorder %s26, 1
    %p222 = por %p220, %p221
    %p223 = scmp.ne.s32.totalorder %s214, %s215
    %p224 = scmp.eq.s32.totalorder %s26, 0
    %p225 = por %p223, %p224
    %p226 = scmp.ne.s32.totalorder %s214, %s215
    %p227 = scmp.eq.s32.totalorder %s27, 1
    %p228 = por %p226, %p227
    %p230 = scmp.ne.s32.totalorder %s215, %s229
    %p231 = scmp.eq.s32.totalorder %s27, 0
    %p232 = por %p230, %p231
    %s234 = sadd.s32 %s233, 1
    %p237 = scmp.eq.s32.totalorder %s21, 1
    %p238 = scmp.ne.s32.totalorder %s233, %s235
    %p239 = scmp.eq.s32.totalorder %s21, 0
    %p240 = por %p238, %p239
    %p241 = scmp.ne.s32.totalorder %s233, %s235
    %p242 = scmp.eq.s32.totalorder %s26, 1
    %p243 = por %p241, %p242
    %p244 = scmp.ne.s32.totalorder %s235, %s236
    %p245 = scmp.eq.s32.totalorder %s26, 0
    %p246 = por %p244, %p245
    %p247 = scmp.ne.s32.totalorder %s235, %s236
    %p248 = scmp.eq.s32.totalorder %s27, 1
    %p249 = por %p247, %p248
    %p251 = scmp.ne.s32.totalorder %s236, %s250
    %p252 = scmp.eq.s32.totalorder %s27, 0
    %p253 = por %p251, %p252
    %s255 = sadd.s32 %s254, 1
    %p258 = scmp.eq.s32.totalorder %s21, 1
    %p259 = scmp.ne.s32.totalorder %s254, %s256
    %p260 = scmp.eq.s32.totalorder %s21, 0
    %p261 = por %p259, %p260
    %p262 = scmp.ne.s32.totalorder %s254, %s256
    %p263 = scmp.eq.s32.totalorder %s26, 1
    %p264 = por %p262, %p263
    %p265 = scmp.ne.s32.totalorder %s256, %s257
    %p266 = scmp.eq.s32.totalorder %s26, 0
    %p267 = por %p265, %p266
    %p268 = scmp.ne.s32.totalorder %s256, %s257
    %p269 = scmp.eq.s32.totalorder %s27, 1
    %p270 = por %p268, %p269
    %p272 = scmp.ne.s32.totalorder %s257, %s271
    %p273 = scmp.eq.s32.totalorder %s27, 0
    %p274 = por %p272, %p273
    %s276 = sadd.s32 %s275, 1
    %p279 = scmp.eq.s32.totalorder %s21, 1
    %p280 = scmp.ne.s32.totalorder %s275, %s277
    %p281 = scmp.eq.s32.totalorder %s21, 0
    %p282 = por %p280, %p281
    %p283 = scmp.ne.s32.totalorder %s275, %s277
    %p284 = scmp.eq.s32.totalorder %s26, 1
    %p285 = por %p283, %p284
    %p286 = scmp.ne.s32.totalorder %s277, %s278
    %p287 = scmp.eq.s32.totalorder %s26, 0
    %p288 = por %p286, %p287
    %p289 = scmp.ne.s32.totalorder %s277, %s278
    %p290 = scmp.eq.s32.totalorder %s27, 1
    %p291 = por %p289, %p290
    %p293 = scmp.ne.s32.totalorder %s278, %s292
    %p294 = scmp.eq.s32.totalorder %s27, 0
    %p295 = por %p293, %p294
    %s297 = sadd.s32 %s296, 1
    %p300 = scmp.eq.s32.totalorder %s21, 1
    %p301 = scmp.ne.s32.totalorder %s296, %s298
    %p302 = scmp.eq.s32.totalorder %s21, 0
    %p303 = por %p301, %p302
    %p304 = scmp.ne.s32.totalorder %s296, %s298
    %p305 = scmp.eq.s32.totalorder %s26, 1
    %p306 = por %p304, %p305
    %p307 = scmp.ne.s32.totalorder %s298, %s299
    %p308 = scmp.eq.s32.totalorder %s26, 0
    %p309 = por %p307, %p308
    %p310 = scmp.ne.s32.totalorder %s298, %s299
    %p311 = scmp.eq.s32.totalorder %s27, 1
    %p312 = por %p310, %p311
    %p314 = scmp.ne.s32.totalorder %s299, %s313
    %p315 = scmp.eq.s32.totalorder %s27, 0
    %p316 = por %p314, %p315
    %s317 = ssub.s32 %s21, %s28
    %p318 = scmp.eq.s32.totalorder %s317, 0
    %s320 = sadd.s32 %s319, 1
    %s321 = scalar_select %p318, %s319, %s320
    %p324 = pneg %p318
    %p325 = scmp.eq.s32.totalorder %s21, 1
    %p326 = por %p324, %p325
    %p327 = scmp.ne.s32.totalorder %s319, %s322
    %p328 = scmp.eq.s32.totalorder %s21, 0
    %p329 = por %p327, %p328
    %p330 = scmp.ne.s32.totalorder %s319, %s322
    %p331 = scmp.eq.s32.totalorder %s26, 1
    %p332 = por %p330, %p331
    %p333 = scmp.ne.s32.totalorder %s322, %s323
    %p334 = scmp.eq.s32.totalorder %s26, 0
    %p335 = por %p333, %p334
    %p336 = scmp.ne.s32.totalorder %s322, %s323
    %p337 = scmp.eq.s32.totalorder %s27, 1
    %p338 = por %p336, %p337
    %p340 = scmp.ne.s32.totalorder %s323, %s339
    %p341 = scmp.eq.s32.totalorder %s27, 0
    %p342 = por %p340, %p341
    %p343 = scmp.le.s32.totalorder 1, %s21
    %p344 = scmp.lt.s32.totalorder %s21, 3
    %p345 = pnand %p343, %p344
    %p346 = pneg %p345
    // Predicated region
    $region9: #{se3_transformer_forward.1} parent=5 // pred_check
      _
    $region10: #{se3_transformer_forward.1} parent=5 // pred_check_branch
      %348 = sbr.rel (%p345) target = $region12
    $region11: #{se3_transformer_forward.1} parent=5 // pred_region
      %s349 = ssub.s32 %s21, 1
      // Predicated region
      $region13: #{se3_transformer_forward.1} parent=11 // pred_check
        %p350 = pneg %p120
      $region14: #{se3_transformer_forward.1} parent=11 // pred_check_branch
        %352 = sbr.rel (%p350) target = $region16
      $region15: #{se3_transformer_forward.1} parent=11 // pred_region
        _
      $region16: #{se3_transformer_forward.1} parent=11 // pred_fallthru
        _
      // Predicated region
      $region17: #{se3_transformer_forward.1} parent=11 // pred_check
        %p353 = pneg %p141
      $region18: #{se3_transformer_forward.1} parent=11 // pred_check_branch
        %355 = sbr.rel (%p353) target = $region20
      $region19: #{se3_transformer_forward.1} parent=11 // pred_region
        _
      $region20: #{se3_transformer_forward.1} parent=11 // pred_fallthru
        _
      // Predicated region
      $region21: #{se3_transformer_forward.1} parent=11 // pred_check
        %p356 = pneg %p162
      $region22: #{se3_transformer_forward.1} parent=11 // pred_check_branch
        %358 = sbr.rel (%p356) target = $region24
      $region23: #{se3_transformer_forward.1} parent=11 // pred_region
        _
      $region24: #{se3_transformer_forward.1} parent=11 // pred_fallthru
        _
      // Predicated region
      $region25: #{se3_transformer_forward.1} parent=11 // pred_check
        %p359 = pneg %p183
      $region26: #{se3_transformer_forward.1} parent=11 // pred_check_branch
        %361 = sbr.rel (%p359) target = $region28
      $region27: #{se3_transformer_forward.1} parent=11 // pred_region
        _
      $region28: #{se3_transformer_forward.1} parent=11 // pred_fallthru
        _
      // Predicated region
      $region29: #{se3_transformer_forward.1} parent=11 // pred_check
        %p362 = pneg %p204
      $region30: #{se3_transformer_forward.1} parent=11 // pred_check_branch
        %364 = sbr.rel (%p362) target = $region32
      $region31: #{se3_transformer_forward.1} parent=11 // pred_region
        _
      $region32: #{se3_transformer_forward.1} parent=11 // pred_fallthru
        _
      // Predicated region
      $region33: #{se3_transformer_forward.1} parent=11 // pred_check
        %p365 = pneg %p225
      $region34: #{se3_transformer_forward.1} parent=11 // pred_check_branch
        %367 = sbr.rel (%p365) target = $region36
      $region35: #{se3_transformer_forward.1} parent=11 // pred_region
        _
      $region36: #{se3_transformer_forward.1} parent=11 // pred_fallthru
        _
      // Predicated region
      $region37: #{se3_transformer_forward.1} parent=11 // pred_check
        %p368 = pneg %p246
      $region38: #{se3_transformer_forward.1} parent=11 // pred_check_branch
        %370 = sbr.rel (%p368) target = $region40
      $region39: #{se3_transformer_forward.1} parent=11 // pred_region
        _
      $region40: #{se3_transformer_forward.1} parent=11 // pred_fallthru
        _
      // Predicated region
      $region41: #{se3_transformer_forward.1} parent=11 // pred_check
        %p371 = pneg %p267
      $region42: #{se3_transformer_forward.1} parent=11 // pred_check_branch
        %373 = sbr.rel (%p371) target = $region44
      $region43: #{se3_transformer_forward.1} parent=11 // pred_region
        _
      $region44: #{se3_transformer_forward.1} parent=11 // pred_fallthru
        _
      // Predicated region
      $region45: #{se3_transformer_forward.1} parent=11 // pred_check
        %p374 = pneg %p288
      $region46: #{se3_transformer_forward.1} parent=11 // pred_check_branch
        %376 = sbr.rel (%p374) target = $region48
      $region47: #{se3_transformer_forward.1} parent=11 // pred_region
        _
      $region48: #{se3_transformer_forward.1} parent=11 // pred_fallthru
        _
      // Predicated region
      $region49: #{se3_transformer_forward.1} parent=11 // pred_check
        %p377 = pneg %p309
      $region50: #{se3_transformer_forward.1} parent=11 // pred_check_branch
        %379 = sbr.rel (%p377) target = $region52
      $region51: #{se3_transformer_forward.1} parent=11 // pred_region
        _
      $region52: #{se3_transformer_forward.1} parent=11 // pred_fallthru
        _
    $region12: #{se3_transformer_forward.1} parent=5 // pred_fallthru
      _
    %p380 = scmp.lt.s32.totalorder %s21, 2
    // Predicated region
    $region53: #{se3_transformer_forward.1} parent=5 // pred_check
      %p381 = pneg %p380
    $region54: #{se3_transformer_forward.1} parent=5 // pred_check_branch
      %383 = sbr.rel (%p381) target = $region56
    $region55: #{se3_transformer_forward.1} parent=5 // pred_region
      // Predicated region
      $region57: #{se3_transformer_forward.1} parent=55 // pred_check
        %p384 = pneg %p41
      $region58: #{se3_transformer_forward.1} parent=55 // pred_check_branch
        %386 = sbr.rel (%p384) target = $region60
      $region59: #{se3_transformer_forward.1} parent=55 // pred_region
        %p387 = scmp.lt.s32.totalorder %s21, 1
        %s388 = scalar_select %p387, %s21, 1
        %s389 = smul.addr %s388, 8
        %s390 = scalar_lea.vmem %s0, %s389
      $region60: #{se3_transformer_forward.1} parent=55 // pred_fallthru
        _
      // Predicated region
      $region61: #{se3_transformer_forward.1} parent=55 // pred_check
        %p391 = pneg %p67
      $region62: #{se3_transformer_forward.1} parent=55 // pred_check_branch
        %393 = sbr.rel (%p391) target = $region64
      $region63: #{se3_transformer_forward.1} parent=55 // pred_region
        %p394 = scmp.lt.s32.totalorder %s21, 1
        %s395 = scalar_select %p394, %s21, 1
        %s396 = smul.addr %s395, 5
        %s397 = smul.addr %s396, 8
        %s398 = scalar_lea.vmem %s1, %s397
      $region64: #{se3_transformer_forward.1} parent=55 // pred_fallthru
        _
      // Predicated region
      $region65: #{se3_transformer_forward.1} parent=55 // pred_check
        %p399 = pneg %p93
      $region66: #{se3_transformer_forward.1} parent=55 // pred_check_branch
        %401 = sbr.rel (%p399) target = $region68
      $region67: #{se3_transformer_forward.1} parent=55 // pred_region
        %p402 = scmp.lt.s32.totalorder %s21, 1
        %s403 = scalar_select %p402, %s21, 1
        %s404 = smul.addr %s403, 8
        %s405 = scalar_lea.vmem %s2, %s404
      $region68: #{se3_transformer_forward.1} parent=55 // pred_fallthru
        _
    $region56: #{se3_transformer_forward.1} parent=5 // pred_fallthru
      _
    %p406 = scmp.le.s32.totalorder 1, %s21
    %p407 = scmp.lt.s32.totalorder %s21, 3
    %p408 = pnand %p406, %p407
    %p409 = pneg %p408
    // Predicated region
    $region69: #{se3_transformer_forward.1} parent=5 // pred_check
      _
    $region70: #{se3_transformer_forward.1} parent=5 // pred_check_branch
      %411 = sbr.rel (%p408) target = $region72
    $region71: #{se3_transformer_forward.1} parent=5 // pred_region
      %s412 = ssub.s32 %s21, 1
      %p413 = scmp.lt.s32.totalorder %s26, 1
      %s414 = scalar_select %p413, %s26, 1
      %s415 = smul.addr %s414, 8
      %s416 = scalar_lea.vmem %s0, %s415
      %p417 = pneg %p47
      %p418 = pneg %p44
      %p419 = scmp.lt.s32.totalorder %s26, 1
      %s420 = scalar_select %p419, %s26, 1
      %s421 = smul.addr %s420, 5
      %s422 = smul.addr %s421, 8
      %s423 = scalar_lea.vmem %s1, %s422
      %p424 = pneg %p73
      %p425 = pneg %p70
      %p426 = scmp.lt.s32.totalorder %s26, 1
      %s427 = scalar_select %p426, %s26, 1
      %s428 = smul.addr %s427, 8
      %s429 = scalar_lea.vmem %s2, %s428
      %p430 = pneg %p99
      %p431 = pneg %p96
      %p432 = pneg %p120
      %p433 = pneg %p117
      %p434 = pneg %p141
      %p435 = pneg %p138
      %p436 = pneg %p162
      %p437 = pneg %p159
      %p438 = pneg %p183
      %p439 = pneg %p180
      %p440 = pneg %p204
      %p441 = pneg %p201
      %p442 = pneg %p225
      %p443 = pneg %p222
      %p444 = pneg %p246
      %p445 = pneg %p243
      %p446 = pneg %p267
      %p447 = pneg %p264
      %p448 = pneg %p288
      %p449 = pneg %p285
      %p450 = pneg %p309
      %p451 = pneg %p306
      %p452 = pneg %p335
      %p453 = pneg %p332
      %p454 = scmp.lt.s32.totalorder %s26, 1
      %s455 = scalar_select %p454, %s26, 1
      %s456 = scalar_lea.vmem %s13, %s455
      %p457 = scmp.lt.s32.totalorder %s26, 1
      %s458 = scalar_select %p457, %s26, 1
      %s459 = smul.addr %s458, 8
      %s460 = scalar_lea.vmem %s0, %s459
      %p461 = scmp.lt.s32.totalorder %s26, 1
      %s462 = scalar_select %p461, %s26, 1
      %s463 = smul.addr %s462, 5
      %s464 = smul.addr %s463, 8
      %s465 = scalar_lea.vmem %s1, %s464
      %p466 = scmp.lt.s32.totalorder %s26, 1
      %s467 = scalar_select %p466, %s26, 1
      %s468 = smul.addr %s467, 8
      %s469 = scalar_lea.vmem %s2, %s468
      %p470 = scmp.lt.s32.totalorder %s26, 1
      %s471 = scalar_select %p470, %s26, 1
      %s472 = scalar_lea.vmem %s13, %s471
      %v473 = vld [vmem:[%s460] sm:$0xff]
      %v474 = vld [vmem:[%s465] sm:$0xff]
      %v475 = vld [vmem:[%s465 + $0x8] sm:$0xff]
      %v476 = vld [vmem:[%s465 + $0x10] sm:$0xff]
      %v477 = vld [vmem:[%s465 + $0x18] sm:$0xff]
      %v478 = vld [vmem:[%s465 + $0x20] sm:$0xff]
      %v479 = vld [vmem:[%s469] sm:$0xff]
      %vm480 = vcmp.gt.f32.partialorder %v479, 0.0
      %v481 = vsel %vm480, 0.0, -1e+09
      %v482 = vld [vmem:[%s3] sm:$0xff]
      %v483 = vld [vmem:[%s3 + $0x8] sm:$0xff]
      %v484 = vld [vmem:[%s3 + $0x10] sm:$0xff]
      %v485 = vld [vmem:[%s3 + $0x18] sm:$0xff]
      %vm486 = vcmask 261120
      %v488 = vsel %vm486, %v473, 0
      %490 = vmatprep.subr.mxu0 0.0
      %491 = vmatpush1.msra.mxu0 0.0
      %492 = vmatprep.subr.mxu0 0.0
      %493 = vmatpush1.msra.mxu0 0.0
      %494 = vmatprep.subr.mxu0 0.0
      %495 = vmatpush1.msra.mxu0 0.0
      %496 = vmatprep.subr.mxu0 0.0
      %497 = vmatpush1.msra.mxu0 0.0
      %498 = vmatprep.subr.mxu0 0.0
      %499 = vmatpush1.msra.mxu0 0.0
      %500 = vmatprep.subr.mxu0 0.0
      %501 = vmatpush1.msra.mxu0 0.0
      %502 = vmatprep.subr.mxu0 0.0
      %503 = vmatpush1.msra.mxu0 0.0
      %504 = vmatprep.subr.mxu0 0.0
      %505 = vmatpush1.msra.mxu0 0.0
      %506 = vmatprep.subr.mxu0 0.0
      %507 = vmatpush1.msra.mxu0 0.0
      %508 = vmatprep.subr.mxu0 0.0
      %509 = vmatpush1.msra.mxu0 0.0
      %510 = vmatprep.subr.mxu0 0.0
      %511 = vmatpush1.msra.mxu0 0.0
      %512 = vmatprep.subr.mxu0 0.0
      %513 = vmatpush1.msra.mxu0 0.0
      %514 = vmatprep.subr.mxu0 0.0
      %515 = vmatpush1.msra.mxu0 %v485
      %516 = vmatprep.subr.mxu0 0.0
      %517 = vmatpush1.msra.mxu0 %v484
      %518 = vmatprep.subr.mxu0 0.0
      %519 = vmatpush1.msra.mxu0 %v483
      %520 = vmatprep.subr.mxu0 0.0
      %521 = vmatpush1.msra.mxu0 %v482
      %522 = vmatprep.subr.mxu0 0.0
      %523 = vmatpush2.msra.mxu0 0.0
      %524 = vmatprep.subr.mxu0 0.0
      %525 = vmatpush2.msra.mxu0 0.0
      %526 = vmatprep.subr.mxu0 0.0
      %527 = vmatpush2.msra.mxu0 0.0
      %528 = vmatprep.subr.mxu0 0.0
      %529 = vmatpush2.msra.mxu0 0.0
      %530 = vmatprep.subr.mxu0 0.0
      %531 = vmatpush2.msra.mxu0 0.0
      %532 = vmatprep.subr.mxu0 0.0
      %533 = vmatpush2.msra.mxu0 0.0
      %534 = vmatprep.subr.mxu0 0.0
      %535 = vmatpush2.msra.mxu0 0.0
      %536 = vmatprep.subr.mxu0 0.0
      %537 = vmatpush2.msra.mxu0 0.0
      %538 = vmatprep.subr.mxu0 0.0
      %539 = vmatpush2.msra.mxu0 0.0
      %540 = vmatprep.subr.mxu0 0.0
      %541 = vmatpush2.msra.mxu0 0.0
      %542 = vmatprep.subr.mxu0 0.0
      %543 = vmatpush2.msra.mxu0 0.0
      %544 = vmatprep.subr.mxu0 0.0
      %545 = vmatpush2.msra.mxu0 0.0
      %546 = vmatprep.subr.mxu0 0.0
      %547 = vmatpush2.msra.mxu0 0.0
      %548 = vmatprep.subr.mxu0 0.0
      %549 = vmatpush2.msra.mxu0 0.0
      %550 = vmatprep.subr.mxu0 0.0
      %551 = vmatpush2.msra.mxu0 0.0
      %552 = vmatprep.subr.mxu0 0.0
      %553 = vmatpush2.msra.mxu0 0.0
      %554 = vmatprep.mubr.f32.mxu0 0.0
      %555 = vmatmul.mubr.f32.gmra.mxu0 %v488
      %v556 = vpop.f32.mrf.mxu0
      %v557 = vadd.f32 0.0, %v556
      %v558 = vpop.f32.mrf.mxu0
      %559 = vdwg.mxu0
      %v560 = vld [vmem:[%s4] sm:$0xff]
      %v561 = vld [vmem:[%s4 + $0x8] sm:$0xff]
      %v562 = vld [vmem:[%s4 + $0x10] sm:$0xff]
      %v563 = vld [vmem:[%s4 + $0x18] sm:$0xff]
      %v565 = vsel %vm486, %v557, 0
      %567 = vmatprep.subr.mxu0 0.0
      %568 = vmatpush1.msra.mxu0 0.0
      %569 = vmatprep.subr.mxu0 0.0
      %570 = vmatpush1.msra.mxu0 0.0
      %571 = vmatprep.subr.mxu0 0.0
      %572 = vmatpush1.msra.mxu0 0.0
      %573 = vmatprep.subr.mxu0 0.0
      %574 = vmatpush1.msra.mxu0 0.0
      %575 = vmatprep.subr.mxu0 0.0
      %576 = vmatpush1.msra.mxu0 0.0
      %577 = vmatprep.subr.mxu0 0.0
      %578 = vmatpush1.msra.mxu0 0.0
      %579 = vmatprep.subr.mxu0 0.0
      %580 = vmatpush1.msra.mxu0 0.0
      %581 = vmatprep.subr.mxu0 0.0
      %582 = vmatpush1.msra.mxu0 0.0
      %583 = vmatprep.subr.mxu0 0.0
      %584 = vmatpush1.msra.mxu0 0.0
      %585 = vmatprep.subr.mxu0 0.0
      %586 = vmatpush1.msra.mxu0 0.0
      %587 = vmatprep.subr.mxu0 0.0
      %588 = vmatpush1.msra.mxu0 0.0
      %589 = vmatprep.subr.mxu0 0.0
      %590 = vmatpush1.msra.mxu0 0.0
      %591 = vmatprep.subr.mxu0 0.0
      %592 = vmatpush1.msra.mxu0 %v563
      %593 = vmatprep.subr.mxu0 0.0
      %594 = vmatpush1.msra.mxu0 %v562
      %595 = vmatprep.subr.mxu0 0.0
      %596 = vmatpush1.msra.mxu0 %v561
      %597 = vmatprep.subr.mxu0 0.0
      %598 = vmatpush1.msra.mxu0 %v560
      %599 = vmatprep.subr.mxu0 0.0
      %600 = vmatpush2.msra.mxu0 0.0
      %601 = vmatprep.subr.mxu0 0.0
      %602 = vmatpush2.msra.mxu0 0.0
      %603 = vmatprep.subr.mxu0 0.0
      %604 = vmatpush2.msra.mxu0 0.0
      %605 = vmatprep.subr.mxu0 0.0
      %606 = vmatpush2.msra.mxu0 0.0
      %607 = vmatprep.subr.mxu0 0.0
      %608 = vmatpush2.msra.mxu0 0.0
      %609 = vmatprep.subr.mxu0 0.0
      %610 = vmatpush2.msra.mxu0 0.0
      %611 = vmatprep.subr.mxu0 0.0
      %612 = vmatpush2.msra.mxu0 0.0
      %613 = vmatprep.subr.mxu0 0.0
      %614 = vmatpush2.msra.mxu0 0.0
      %615 = vmatprep.subr.mxu0 0.0
      %616 = vmatpush2.msra.mxu0 0.0
      %617 = vmatprep.subr.mxu0 0.0
      %618 = vmatpush2.msra.mxu0 0.0
      %619 = vmatprep.subr.mxu0 0.0
      %620 = vmatpush2.msra.mxu0 0.0
      %621 = vmatprep.subr.mxu0 0.0
      %622 = vmatpush2.msra.mxu0 0.0
      %623 = vmatprep.subr.mxu0 0.0
      %624 = vmatpush2.msra.mxu0 0.0
      %625 = vmatprep.subr.mxu0 0.0
      %626 = vmatpush2.msra.mxu0 0.0
      %627 = vmatprep.subr.mxu0 0.0
      %628 = vmatpush2.msra.mxu0 0.0
      %629 = vmatprep.subr.mxu0 0.0
      %630 = vmatpush2.msra.mxu0 0.0
      %631 = vmatprep.mubr.f32.mxu0 0.0
      %632 = vmatmul.mubr.f32.gmra.mxu0 %v565
      %v633 = vpop.f32.mrf.mxu0
      %v634 = vadd.f32 0.0, %v633
      %v635 = vpop.f32.mrf.mxu0
      %636 = vdwg.mxu0
      %638 = vset.pattern.permute.xlu0 0
      %639 = vperm.xlu0 %638, %v634
      %v640 = vpop.permute.xlu0 %639
      %v642 = vmul.f32 %v640, %v474
      %643 = vrot.lane.b32.xlu0 %v557, 96
      %v644 = vpop.permute.xlu0 %643
      %v645 = vsel %vm486, %v644, 0
      %647 = vmatprep.subr.mxu0 0.0
      %648 = vmatpush1.xpose.msra.mxu0 0.0
      %649 = vmatprep.subr.mxu0 0.0
      %650 = vmatpush1.xpose.msra.mxu0 0.0
      %651 = vmatprep.subr.mxu0 0.0
      %652 = vmatpush1.xpose.msra.mxu0 0.0
      %653 = vmatprep.subr.mxu0 0.0
      %654 = vmatpush1.xpose.msra.mxu0 0.0
      %655 = vmatprep.subr.mxu0 0.0
      %656 = vmatpush1.xpose.msra.mxu0 0.0
      %657 = vmatprep.subr.mxu0 0.0
      %658 = vmatpush1.xpose.msra.mxu0 0.0
      %659 = vmatprep.subr.mxu0 0.0
      %660 = vmatpush1.xpose.msra.mxu0 0.0
      %661 = vmatprep.subr.mxu0 0.0
      %662 = vmatpush1.xpose.msra.mxu0 0.0
      %663 = vmatprep.subr.mxu0 0.0
      %664 = vmatpush1.xpose.msra.mxu0 0.0
      %665 = vmatprep.subr.mxu0 0.0
      %666 = vmatpush1.xpose.msra.mxu0 0.0
      %667 = vmatprep.subr.mxu0 0.0
      %668 = vmatpush1.xpose.msra.mxu0 0.0
      %669 = vmatprep.subr.mxu0 0.0
      %670 = vmatpush1.xpose.msra.mxu0 0.0
      %671 = vmatprep.subr.mxu0 0.0
      %672 = vmatpush1.xpose.msra.mxu0 0.0
      %673 = vmatprep.subr.mxu0 0.0
      %674 = vmatpush1.xpose.msra.mxu0 0.0
      %675 = vmatprep.subr.mxu0 0.0
      %676 = vmatpush1.xpose.msra.mxu0 0.0
      %677 = vmatprep.subr.mxu0 0.0
      %678 = vmatpush1.xpose.msra.mxu0 %v645
      %679 = vmatprep.subr.mxu0 0.0
      %680 = vmatpush2.xpose.msra.mxu0 0.0
      %681 = vmatprep.subr.mxu0 0.0
      %682 = vmatpush2.xpose.msra.mxu0 0.0
      %683 = vmatprep.subr.mxu0 0.0
      %684 = vmatpush2.xpose.msra.mxu0 0.0
      %685 = vmatprep.subr.mxu0 0.0
      %686 = vmatpush2.xpose.msra.mxu0 0.0
      %687 = vmatprep.subr.mxu0 0.0
      %688 = vmatpush2.xpose.msra.mxu0 0.0
      %689 = vmatprep.subr.mxu0 0.0
      %690 = vmatpush2.xpose.msra.mxu0 0.0
      %691 = vmatprep.subr.mxu0 0.0
      %692 = vmatpush2.xpose.msra.mxu0 0.0
      %693 = vmatprep.subr.mxu0 0.0
      %694 = vmatpush2.xpose.msra.mxu0 0.0
      %695 = vmatprep.subr.mxu0 0.0
      %696 = vmatpush2.xpose.msra.mxu0 0.0
      %697 = vmatprep.subr.mxu0 0.0
      %698 = vmatpush2.xpose.msra.mxu0 0.0
      %699 = vmatprep.subr.mxu0 0.0
      %700 = vmatpush2.xpose.msra.mxu0 0.0
      %701 = vmatprep.subr.mxu0 0.0
      %702 = vmatpush2.xpose.msra.mxu0 0.0
      %703 = vmatprep.subr.mxu0 0.0
      %704 = vmatpush2.xpose.msra.mxu0 0.0
      %705 = vmatprep.subr.mxu0 0.0
      %706 = vmatpush2.xpose.msra.mxu0 0.0
      %707 = vmatprep.subr.mxu0 0.0
      %708 = vmatpush2.xpose.msra.mxu0 0.0
      %709 = vmatprep.subr.mxu0 0.0
      %710 = vmatpush2.xpose.msra.mxu0 0.0
      %711 = vmatprep.mubr.f32.mxu0 0.0
      %712 = vmatmul.mubr.f32.gmra.mxu0 %v565
      %v713 = vpop.f32.mrf.mxu0
      %v714 = vadd.f32 %v642, %v713
      %v715 = vpop.f32.mrf.mxu0
      %716 = vdwg.mxu0
      %717 = vset.pattern.permute.xlu0 1
      %718 = vperm.xlu0 %717, %v634
      %v719 = vpop.permute.xlu0 %718
      %v721 = vmul.f32 %v719, %v475
      %v722 = vadd.f32 %v714, %v721
      %723 = vset.pattern.permute.xlu0 2
      %724 = vperm.xlu0 %723, %v634
      %v725 = vpop.permute.xlu0 %724
      %v727 = vmul.f32 %v725, %v476
      %v728 = vadd.f32 %v722, %v727
      %729 = vset.pattern.permute.xlu0 3
      %730 = vperm.xlu0 %729, %v634
      %v731 = vpop.permute.xlu0 %730
      %v733 = vmul.f32 %v731, %v477
      %v734 = vadd.f32 %v728, %v733
      %735 = vset.pattern.permute.xlu0 4
      %736 = vperm.xlu0 %735, %v634
      %v737 = vpop.permute.xlu0 %736
      %v739 = vmul.f32 %v737, %v478
      %v740 = vadd.f32 %v734, %v739
      %v741 = vmul.f32 %v740, 0.17677669
      %v742 = vadd.f32 %v741, %v481
      %vm743 = vcmask 64512
      %v744 = vsel %vm743, %v742, -inf
      %745 = vmax.xlane.f32.xlu0 %v744
      %v746 = vpop.xlane.xlu0 %745
      %v747 = vsub.f32 %v742, %v746
      %v748 = vmul.f32 %v747, 1.442695
      %v749 = vpow.pop %v748
      %v750 = vmul.f32 %v749, %v479
      %v751 = vsel %vm743, %v750, 0.0
      %752 = vadd.xlane.f32.xlu0 %v751
      %v753 = vpop.xlane.xlu0 %752
      %v754 = vadd.f32 %v753, 1e-12
      %v755 = vrcp.pop %v754
      %v756 = vmul.f32 %v750, %v755
      %v757 = vld [vmem:[%s5] sm:$0x1f]
      %v758 = vmul.f32 %v756, %v474
      %v759 = vsel %vm743, %v758, 0.0
      %760 = vadd.xlane.f32.xlu0 %v759
      %v761 = vpop.xlane.xlu0 %760
      %v762 = vlaneseq
      %v763 = vshrl.u32 %v762, 7
      %v764 = vsub.s32 0, %v763
      %v765 = vrot.slane %v757, %v764
      %v766 = vmul.f32 %v761, %v765
      %767 = vrot.lane.b32.xlu0 %v557, 64
      %v768 = vpop.permute.xlu0 %767
      %v771 = vsel %vm743, %v756, 0
      %773 = vmatprep.subr.mxu0 0.0
      %774 = vmatpush1.msra.mxu0 0.0
      %775 = vmatprep.subr.mxu0 0.0
      %776 = vmatpush1.msra.mxu0 0.0
      %777 = vmatprep.subr.mxu0 0.0
      %778 = vmatpush1.msra.mxu0 0.0
      %779 = vmatprep.subr.mxu0 0.0
      %780 = vmatpush1.msra.mxu0 0.0
      %781 = vmatprep.subr.mxu0 0.0
      %782 = vmatpush1.msra.mxu0 0.0
      %783 = vmatprep.subr.mxu0 0.0
      %784 = vmatpush1.msra.mxu0 0.0
      %785 = vmatprep.subr.mxu0 0.0
      %786 = vmatpush1.msra.mxu0 0.0
      %787 = vmatprep.subr.mxu0 0.0
      %788 = vmatpush1.msra.mxu0 0.0
      %789 = vmatprep.subr.mxu0 0.0
      %790 = vmatpush1.msra.mxu0 0.0
      %791 = vmatprep.subr.mxu0 0.0
      %792 = vmatpush1.msra.mxu0 0.0
      %793 = vmatprep.subr.mxu0 0.0
      %794 = vmatpush1.msra.mxu0 0.0
      %795 = vmatprep.subr.mxu0 0.0
      %796 = vmatpush1.msra.mxu0 0.0
      %797 = vmatprep.subr.mxu0 0.0
      %798 = vmatpush1.msra.mxu0 0.0
      %799 = vmatprep.subr.mxu0 0.0
      %800 = vmatpush1.msra.mxu0 0.0
      %801 = vmatprep.subr.mxu0 0.0
      %802 = vmatpush1.msra.mxu0 0.0
      %803 = vmatprep.subr.mxu0 0.0
      %804 = vmatpush1.msra.mxu0 %v768
      %805 = vmatprep.subr.mxu0 0.0
      %806 = vmatpush2.msra.mxu0 0.0
      %807 = vmatprep.subr.mxu0 0.0
      %808 = vmatpush2.msra.mxu0 0.0
      %809 = vmatprep.subr.mxu0 0.0
      %810 = vmatpush2.msra.mxu0 0.0
      %811 = vmatprep.subr.mxu0 0.0
      %812 = vmatpush2.msra.mxu0 0.0
      %813 = vmatprep.subr.mxu0 0.0
      %814 = vmatpush2.msra.mxu0 0.0
      %815 = vmatprep.subr.mxu0 0.0
      %816 = vmatpush2.msra.mxu0 0.0
      %817 = vmatprep.subr.mxu0 0.0
      %818 = vmatpush2.msra.mxu0 0.0
      %819 = vmatprep.subr.mxu0 0.0
      %820 = vmatpush2.msra.mxu0 0.0
      %821 = vmatprep.subr.mxu0 0.0
      %822 = vmatpush2.msra.mxu0 0.0
      %823 = vmatprep.subr.mxu0 0.0
      %824 = vmatpush2.msra.mxu0 0.0
      %825 = vmatprep.subr.mxu0 0.0
      %826 = vmatpush2.msra.mxu0 0.0
      %827 = vmatprep.subr.mxu0 0.0
      %828 = vmatpush2.msra.mxu0 0.0
      %829 = vmatprep.subr.mxu0 0.0
      %830 = vmatpush2.msra.mxu0 0.0
      %831 = vmatprep.subr.mxu0 0.0
      %832 = vmatpush2.msra.mxu0 0.0
      %833 = vmatprep.subr.mxu0 0.0
      %834 = vmatpush2.msra.mxu0 0.0
      %835 = vmatprep.subr.mxu0 0.0
      %836 = vmatpush2.msra.mxu0 0.0
      %837 = vmatprep.mubr.f32.mxu0 0.0
      %838 = vmatmul.mubr.f32.gmra.mxu0 %v771
      %v839 = vpop.f32.mrf.mxu0
      %v840 = vadd.f32 %v766, %v839
      %v841 = vpop.f32.mrf.mxu0
      %842 = vdwg.mxu0
      %v843 = vmul.f32 %v756, %v475
      %v844 = vsel %vm743, %v843, 0.0
      %845 = vadd.xlane.f32.xlu0 %v844
      %v846 = vpop.xlane.xlu0 %845
      %v847 = vlaneseq
      %v848 = vshrl.u32 %v847, 7
      %v849 = vsub.s32 1, %v848
      %v850 = vrot.slane %v757, %v849
      %v851 = vmul.f32 %v846, %v850
      %v852 = vadd.f32 %v840, %v851
      %v853 = vmul.f32 %v756, %v476
      %v854 = vsel %vm743, %v853, 0.0
      %855 = vadd.xlane.f32.xlu0 %v854
      %v856 = vpop.xlane.xlu0 %855
      %v857 = vlaneseq
      %v858 = vshrl.u32 %v857, 7
      %v859 = vsub.s32 2, %v858
      %v860 = vrot.slane %v757, %v859
      %v861 = vmul.f32 %v856, %v860
      %v862 = vadd.f32 %v852, %v861
      %v863 = vmul.f32 %v756, %v477
      %v864 = vsel %vm743, %v863, 0.0
      %865 = vadd.xlane.f32.xlu0 %v864
      %v866 = vpop.xlane.xlu0 %865
      %v867 = vlaneseq
      %v868 = vshrl.u32 %v867, 7
      %v869 = vsub.s32 3, %v868
      %v870 = vrot.slane %v757, %v869
      %v871 = vmul.f32 %v866, %v870
      %v872 = vadd.f32 %v862, %v871
      %v873 = vmul.f32 %v756, %v478
      %v874 = vsel %vm743, %v873, 0.0
      %875 = vadd.xlane.f32.xlu0 %v874
      %v876 = vpop.xlane.xlu0 %875
      %v877 = vlaneseq
      %v878 = vshrl.u32 %v877, 7
      %v879 = vsub.s32 4, %v878
      %v880 = vrot.slane %v757, %v879
      %v881 = vmul.f32 %v876, %v880
      %v882 = vadd.f32 %v872, %v881
      %883 = vrot.lane.b32.xlu0 %v557, 32
      %v884 = vpop.permute.xlu0 %883
      %v886 = vadd.f32 %v882, %v884
      %vm887 = vcmp.gt.f32.partialorder %v886, 0.0
      %vm888 = vcmp.lt.f32.partialorder %v886, 0.0
      %v889 = vsel %vm888, -1.0, 0.0
      %v890 = vsel %vm887, 1.0, %v889
      %v891 = vand.u32 2147483647, %v886
      %v892 = vld [vmem:[%s6] sm:$0x1]
      %v894 = vlaneseq
      %v895 = vshrl.u32 %v894, 7
      %v896 = vsub.s32 0, %v895
      %v897 = vrot.slane %v892, %v896
      %v899 = vmul.f32 %v891, %v897
      %v900 = vld [vmem:[%s7] sm:$0x1]
      %v902 = vlaneseq
      %v903 = vshrl.u32 %v902, 7
      %v904 = vsub.s32 0, %v903
      %v905 = vrot.slane %v900, %v904
      %v907 = vadd.f32 %v899, %v905
      %v908 = vmax.f32 %v907, 0.0
      %v909 = vmul.f32 %v890, %v908
      %s910 = scalar_lea.vmem %s3, 32
      %v911 = vld [vmem:[%s910] sm:$0xff]
      %v912 = vld [vmem:[%s910 + $0x8] sm:$0xff]
      %v913 = vld [vmem:[%s910 + $0x10] sm:$0xff]
      %v914 = vld [vmem:[%s910 + $0x18] sm:$0xff]
      %v916 = vsel %vm486, %v909, 0
      %918 = vmatprep.subr.mxu0 0.0
      %919 = vmatpush1.msra.mxu0 0.0
      %920 = vmatprep.subr.mxu0 0.0
      %921 = vmatpush1.msra.mxu0 0.0
      %922 = vmatprep.subr.mxu0 0.0
      %923 = vmatpush1.msra.mxu0 0.0
      %924 = vmatprep.subr.mxu0 0.0
      %925 = vmatpush1.msra.mxu0 0.0
      %926 = vmatprep.subr.mxu0 0.0
      %927 = vmatpush1.msra.mxu0 0.0
      %928 = vmatprep.subr.mxu0 0.0
      %929 = vmatpush1.msra.mxu0 0.0
      %930 = vmatprep.subr.mxu0 0.0
      %931 = vmatpush1.msra.mxu0 0.0
      %932 = vmatprep.subr.mxu0 0.0
      %933 = vmatpush1.msra.mxu0 0.0
      %934 = vmatprep.subr.mxu0 0.0
      %935 = vmatpush1.msra.mxu0 0.0
      %936 = vmatprep.subr.mxu0 0.0
      %937 = vmatpush1.msra.mxu0 0.0
      %938 = vmatprep.subr.mxu0 0.0
      %939 = vmatpush1.msra.mxu0 0.0
      %940 = vmatprep.subr.mxu0 0.0
      %941 = vmatpush1.msra.mxu0 0.0
      %942 = vmatprep.subr.mxu0 0.0
      %943 = vmatpush1.msra.mxu0 %v914
      %944 = vmatprep.subr.mxu0 0.0
      %945 = vmatpush1.msra.mxu0 %v913
      %946 = vmatprep.subr.mxu0 0.0
      %947 = vmatpush1.msra.mxu0 %v912
      %948 = vmatprep.subr.mxu0 0.0
      %949 = vmatpush1.msra.mxu0 %v911
      %950 = vmatprep.subr.mxu0 0.0
      %951 = vmatpush2.msra.mxu0 0.0
      %952 = vmatprep.subr.mxu0 0.0
      %953 = vmatpush2.msra.mxu0 0.0
      %954 = vmatprep.subr.mxu0 0.0
      %955 = vmatpush2.msra.mxu0 0.0
      %956 = vmatprep.subr.mxu0 0.0
      %957 = vmatpush2.msra.mxu0 0.0
      %958 = vmatprep.subr.mxu0 0.0
      %959 = vmatpush2.msra.mxu0 0.0
      %960 = vmatprep.subr.mxu0 0.0
      %961 = vmatpush2.msra.mxu0 0.0
      %962 = vmatprep.subr.mxu0 0.0
      %963 = vmatpush2.msra.mxu0 0.0
      %964 = vmatprep.subr.mxu0 0.0
      %965 = vmatpush2.msra.mxu0 0.0
      %966 = vmatprep.subr.mxu0 0.0
      %967 = vmatpush2.msra.mxu0 0.0
      %968 = vmatprep.subr.mxu0 0.0
      %969 = vmatpush2.msra.mxu0 0.0
      %970 = vmatprep.subr.mxu0 0.0
      %971 = vmatpush2.msra.mxu0 0.0
      %972 = vmatprep.subr.mxu0 0.0
      %973 = vmatpush2.msra.mxu0 0.0
      %974 = vmatprep.subr.mxu0 0.0
      %975 = vmatpush2.msra.mxu0 0.0
      %976 = vmatprep.subr.mxu0 0.0
      %977 = vmatpush2.msra.mxu0 0.0
      %978 = vmatprep.subr.mxu0 0.0
      %979 = vmatpush2.msra.mxu0 0.0
      %980 = vmatprep.subr.mxu0 0.0
      %981 = vmatpush2.msra.mxu0 0.0
      %982 = vmatprep.mubr.f32.mxu0 0.0
      %983 = vmatmul.mubr.f32.gmra.mxu0 %v916
      %v984 = vpop.f32.mrf.mxu0
      %v985 = vadd.f32 0.0, %v984
      %v986 = vpop.f32.mrf.mxu0
      %987 = vdwg.mxu0
      %s988 = scalar_lea.vmem %s4, 32
      %v989 = vld [vmem:[%s988] sm:$0xff]
      %v990 = vld [vmem:[%s988 + $0x8] sm:$0xff]
      %v991 = vld [vmem:[%s988 + $0x10] sm:$0xff]
      %v992 = vld [vmem:[%s988 + $0x18] sm:$0xff]
      %v994 = vsel %vm486, %v985, 0
      %996 = vmatprep.subr.mxu0 0.0
      %997 = vmatpush1.msra.mxu0 0.0
      %998 = vmatprep.subr.mxu0 0.0
      %999 = vmatpush1.msra.mxu0 0.0
      %1000 = vmatprep.subr.mxu0 0.0
      %1001 = vmatpush1.msra.mxu0 0.0
      %1002 = vmatprep.subr.mxu0 0.0
      %1003 = vmatpush1.msra.mxu0 0.0
      %1004 = vmatprep.subr.mxu0 0.0
      %1005 = vmatpush1.msra.mxu0 0.0
      %1006 = vmatprep.subr.mxu0 0.0
      %1007 = vmatpush1.msra.mxu0 0.0
      %1008 = vmatprep.subr.mxu0 0.0
      %1009 = vmatpush1.msra.mxu0 0.0
      %1010 = vmatprep.subr.mxu0 0.0
      %1011 = vmatpush1.msra.mxu0 0.0
      %1012 = vmatprep.subr.mxu0 0.0
      %1013 = vmatpush1.msra.mxu0 0.0
      %1014 = vmatprep.subr.mxu0 0.0
      %1015 = vmatpush1.msra.mxu0 0.0
      %1016 = vmatprep.subr.mxu0 0.0
      %1017 = vmatpush1.msra.mxu0 0.0
      %1018 = vmatprep.subr.mxu0 0.0
      %1019 = vmatpush1.msra.mxu0 0.0
      %1020 = vmatprep.subr.mxu0 0.0
      %1021 = vmatpush1.msra.mxu0 %v992
      %1022 = vmatprep.subr.mxu0 0.0
      %1023 = vmatpush1.msra.mxu0 %v991
      %1024 = vmatprep.subr.mxu0 0.0
      %1025 = vmatpush1.msra.mxu0 %v990
      %1026 = vmatprep.subr.mxu0 0.0
      %1027 = vmatpush1.msra.mxu0 %v989
      %1028 = vmatprep.subr.mxu0 0.0
      %1029 = vmatpush2.msra.mxu0 0.0
      %1030 = vmatprep.subr.mxu0 0.0
      %1031 = vmatpush2.msra.mxu0 0.0
      %1032 = vmatprep.subr.mxu0 0.0
      %1033 = vmatpush2.msra.mxu0 0.0
      %1034 = vmatprep.subr.mxu0 0.0
      %1035 = vmatpush2.msra.mxu0 0.0
      %1036 = vmatprep.subr.mxu0 0.0
      %1037 = vmatpush2.msra.mxu0 0.0
      %1038 = vmatprep.subr.mxu0 0.0
      %1039 = vmatpush2.msra.mxu0 0.0
      %1040 = vmatprep.subr.mxu0 0.0
      %1041 = vmatpush2.msra.mxu0 0.0
      %1042 = vmatprep.subr.mxu0 0.0
      %1043 = vmatpush2.msra.mxu0 0.0
      %1044 = vmatprep.subr.mxu0 0.0
      %1045 = vmatpush2.msra.mxu0 0.0
      %1046 = vmatprep.subr.mxu0 0.0
      %1047 = vmatpush2.msra.mxu0 0.0
      %1048 = vmatprep.subr.mxu0 0.0
      %1049 = vmatpush2.msra.mxu0 0.0
      %1050 = vmatprep.subr.mxu0 0.0
      %1051 = vmatpush2.msra.mxu0 0.0
      %1052 = vmatprep.subr.mxu0 0.0
      %1053 = vmatpush2.msra.mxu0 0.0
      %1054 = vmatprep.subr.mxu0 0.0
      %1055 = vmatpush2.msra.mxu0 0.0
      %1056 = vmatprep.subr.mxu0 0.0
      %1057 = vmatpush2.msra.mxu0 0.0
      %1058 = vmatprep.subr.mxu0 0.0
      %1059 = vmatpush2.msra.mxu0 0.0
      %1060 = vmatprep.mubr.f32.mxu0 0.0
      %1061 = vmatmul.mubr.f32.gmra.mxu0 %v994
      %v1062 = vpop.f32.mrf.mxu0
      %v1063 = vadd.f32 0.0, %v1062
      %v1064 = vpop.f32.mrf.mxu0
      %1065 = vdwg.mxu0
      %1067 = vset.pattern.permute.xlu0 0
      %1068 = vperm.xlu0 %1067, %v1063
      %v1069 = vpop.permute.xlu0 %1068
      %v1071 = vmul.f32 %v1069, %v474
      %1072 = vrot.lane.b32.xlu0 %v985, 96
      %v1073 = vpop.permute.xlu0 %1072
      %v1074 = vsel %vm486, %v1073, 0
      %1076 = vmatprep.subr.mxu0 0.0
      %1077 = vmatpush1.xpose.msra.mxu0 0.0
      %1078 = vmatprep.subr.mxu0 0.0
      %1079 = vmatpush1.xpose.msra.mxu0 0.0
      %1080 = vmatprep.subr.mxu0 0.0
      %1081 = vmatpush1.xpose.msra.mxu0 0.0
      %1082 = vmatprep.subr.mxu0 0.0
      %1083 = vmatpush1.xpose.msra.mxu0 0.0
      %1084 = vmatprep.subr.mxu0 0.0
      %1085 = vmatpush1.xpose.msra.mxu0 0.0
      %1086 = vmatprep.subr.mxu0 0.0
      %1087 = vmatpush1.xpose.msra.mxu0 0.0
      %1088 = vmatprep.subr.mxu0 0.0
      %1089 = vmatpush1.xpose.msra.mxu0 0.0
      %1090 = vmatprep.subr.mxu0 0.0
      %1091 = vmatpush1.xpose.msra.mxu0 0.0
      %1092 = vmatprep.subr.mxu0 0.0
      %1093 = vmatpush1.xpose.msra.mxu0 0.0
      %1094 = vmatprep.subr.mxu0 0.0
      %1095 = vmatpush1.xpose.msra.mxu0 0.0
      %1096 = vmatprep.subr.mxu0 0.0
      %1097 = vmatpush1.xpose.msra.mxu0 0.0
      %1098 = vmatprep.subr.mxu0 0.0
      %1099 = vmatpush1.xpose.msra.mxu0 0.0
      %1100 = vmatprep.subr.mxu0 0.0
      %1101 = vmatpush1.xpose.msra.mxu0 0.0
      %1102 = vmatprep.subr.mxu0 0.0
      %1103 = vmatpush1.xpose.msra.mxu0 0.0
      %1104 = vmatprep.subr.mxu0 0.0
      %1105 = vmatpush1.xpose.msra.mxu0 0.0
      %1106 = vmatprep.subr.mxu0 0.0
      %1107 = vmatpush1.xpose.msra.mxu0 %v1074
      %1108 = vmatprep.subr.mxu0 0.0
      %1109 = vmatpush2.xpose.msra.mxu0 0.0
      %1110 = vmatprep.subr.mxu0 0.0
      %1111 = vmatpush2.xpose.msra.mxu0 0.0
      %1112 = vmatprep.subr.mxu0 0.0
      %1113 = vmatpush2.xpose.msra.mxu0 0.0
      %1114 = vmatprep.subr.mxu0 0.0
      %1115 = vmatpush2.xpose.msra.mxu0 0.0
      %1116 = vmatprep.subr.mxu0 0.0
      %1117 = vmatpush2.xpose.msra.mxu0 0.0
      %1118 = vmatprep.subr.mxu0 0.0
      %1119 = vmatpush2.xpose.msra.mxu0 0.0
      %1120 = vmatprep.subr.mxu0 0.0
      %1121 = vmatpush2.xpose.msra.mxu0 0.0
      %1122 = vmatprep.subr.mxu0 0.0
      %1123 = vmatpush2.xpose.msra.mxu0 0.0
      %1124 = vmatprep.subr.mxu0 0.0
      %1125 = vmatpush2.xpose.msra.mxu0 0.0
      %1126 = vmatprep.subr.mxu0 0.0
      %1127 = vmatpush2.xpose.msra.mxu0 0.0
      %1128 = vmatprep.subr.mxu0 0.0
      %1129 = vmatpush2.xpose.msra.mxu0 0.0
      %1130 = vmatprep.subr.mxu0 0.0
      %1131 = vmatpush2.xpose.msra.mxu0 0.0
      %1132 = vmatprep.subr.mxu0 0.0
      %1133 = vmatpush2.xpose.msra.mxu0 0.0
      %1134 = vmatprep.subr.mxu0 0.0
      %1135 = vmatpush2.xpose.msra.mxu0 0.0
      %1136 = vmatprep.subr.mxu0 0.0
      %1137 = vmatpush2.xpose.msra.mxu0 0.0
      %1138 = vmatprep.subr.mxu0 0.0
      %1139 = vmatpush2.xpose.msra.mxu0 0.0
      %1140 = vmatprep.mubr.f32.mxu0 0.0
      %1141 = vmatmul.mubr.f32.gmra.mxu0 %v994
      %v1142 = vpop.f32.mrf.mxu0
      %v1143 = vadd.f32 %v1071, %v1142
      %v1144 = vpop.f32.mrf.mxu0
      %1145 = vdwg.mxu0
      %1146 = vset.pattern.permute.xlu0 1
      %1147 = vperm.xlu0 %1146, %v1063
      %v1148 = vpop.permute.xlu0 %1147
      %v1150 = vmul.f32 %v1148, %v475
      %v1151 = vadd.f32 %v1143, %v1150
      %1152 = vset.pattern.permute.xlu0 2
      %1153 = vperm.xlu0 %1152, %v1063
      %v1154 = vpop.permute.xlu0 %1153
      %v1156 = vmul.f32 %v1154, %v476
      %v1157 = vadd.f32 %v1151, %v1156
      %1158 = vset.pattern.permute.xlu0 3
      %1159 = vperm.xlu0 %1158, %v1063
      %v1160 = vpop.permute.xlu0 %1159
      %v1162 = vmul.f32 %v1160, %v477
      %v1163 = vadd.f32 %v1157, %v1162
      %1164 = vset.pattern.permute.xlu0 4
      %1165 = vperm.xlu0 %1164, %v1063
      %v1166 = vpop.permute.xlu0 %1165
      %v1168 = vmul.f32 %v1166, %v478
      %v1169 = vadd.f32 %v1163, %v1168
      %v1170 = vmul.f32 %v1169, 0.17677669
      %v1171 = vadd.f32 %v1170, %v481
      %v1172 = vsel %vm743, %v1171, -inf
      %1173 = vmax.xlane.f32.xlu0 %v1172
      %v1174 = vpop.xlane.xlu0 %1173
      %v1175 = vsub.f32 %v1171, %v1174
      %v1176 = vmul.f32 %v1175, 1.442695
      %v1177 = vpow.pop %v1176
      %v1178 = vmul.f32 %v1177, %v479
      %v1179 = vsel %vm743, %v1178, 0.0
      %1180 = vadd.xlane.f32.xlu0 %v1179
      %v1181 = vpop.xlane.xlu0 %1180
      %v1182 = vadd.f32 %v1181, 1e-12
      %v1183 = vrcp.pop %v1182
      %v1184 = vmul.f32 %v1178, %v1183
      %s1185 = scalar_lea.vmem %s5, 8
      %v1186 = vld [vmem:[%s1185] sm:$0x1f]
      %v1187 = vmul.f32 %v1184, %v474
      %v1188 = vsel %vm743, %v1187, 0.0
      %1189 = vadd.xlane.f32.xlu0 %v1188
      %v1190 = vpop.xlane.xlu0 %1189
      %v1191 = vlaneseq
      %v1192 = vshrl.u32 %v1191, 7
      %v1193 = vsub.s32 0, %v1192
      %v1194 = vrot.slane %v1186, %v1193
      %v1195 = vmul.f32 %v1190, %v1194
      %1196 = vrot.lane.b32.xlu0 %v985, 64
      %v1197 = vpop.permute.xlu0 %1196
      %v1200 = vsel %vm743, %v1184, 0
      %1202 = vmatprep.subr.mxu0 0.0
      %1203 = vmatpush1.msra.mxu0 0.0
      %1204 = vmatprep.subr.mxu0 0.0
      %1205 = vmatpush1.msra.mxu0 0.0
      %1206 = vmatprep.subr.mxu0 0.0
      %1207 = vmatpush1.msra.mxu0 0.0
      %1208 = vmatprep.subr.mxu0 0.0
      %1209 = vmatpush1.msra.mxu0 0.0
      %1210 = vmatprep.subr.mxu0 0.0
      %1211 = vmatpush1.msra.mxu0 0.0
      %1212 = vmatprep.subr.mxu0 0.0
      %1213 = vmatpush1.msra.mxu0 0.0
      %1214 = vmatprep.subr.mxu0 0.0
      %1215 = vmatpush1.msra.mxu0 0.0
      %1216 = vmatprep.subr.mxu0 0.0
      %1217 = vmatpush1.msra.mxu0 0.0
      %1218 = vmatprep.subr.mxu0 0.0
      %1219 = vmatpush1.msra.mxu0 0.0
      %1220 = vmatprep.subr.mxu0 0.0
      %1221 = vmatpush1.msra.mxu0 0.0
      %1222 = vmatprep.subr.mxu0 0.0
      %1223 = vmatpush1.msra.mxu0 0.0
      %1224 = vmatprep.subr.mxu0 0.0
      %1225 = vmatpush1.msra.mxu0 0.0
      %1226 = vmatprep.subr.mxu0 0.0
      %1227 = vmatpush1.msra.mxu0 0.0
      %1228 = vmatprep.subr.mxu0 0.0
      %1229 = vmatpush1.msra.mxu0 0.0
      %1230 = vmatprep.subr.mxu0 0.0
      %1231 = vmatpush1.msra.mxu0 0.0
      %1232 = vmatprep.subr.mxu0 0.0
      %1233 = vmatpush1.msra.mxu0 %v1197
      %1234 = vmatprep.subr.mxu0 0.0
      %1235 = vmatpush2.msra.mxu0 0.0
      %1236 = vmatprep.subr.mxu0 0.0
      %1237 = vmatpush2.msra.mxu0 0.0
      %1238 = vmatprep.subr.mxu0 0.0
      %1239 = vmatpush2.msra.mxu0 0.0
      %1240 = vmatprep.subr.mxu0 0.0
      %1241 = vmatpush2.msra.mxu0 0.0
      %1242 = vmatprep.subr.mxu0 0.0
      %1243 = vmatpush2.msra.mxu0 0.0
      %1244 = vmatprep.subr.mxu0 0.0
      %1245 = vmatpush2.msra.mxu0 0.0
      %1246 = vmatprep.subr.mxu0 0.0
      %1247 = vmatpush2.msra.mxu0 0.0
      %1248 = vmatprep.subr.mxu0 0.0
      %1249 = vmatpush2.msra.mxu0 0.0
      %1250 = vmatprep.subr.mxu0 0.0
      %1251 = vmatpush2.msra.mxu0 0.0
      %1252 = vmatprep.subr.mxu0 0.0
      %1253 = vmatpush2.msra.mxu0 0.0
      %1254 = vmatprep.subr.mxu0 0.0
      %1255 = vmatpush2.msra.mxu0 0.0
      %1256 = vmatprep.subr.mxu0 0.0
      %1257 = vmatpush2.msra.mxu0 0.0
      %1258 = vmatprep.subr.mxu0 0.0
      %1259 = vmatpush2.msra.mxu0 0.0
      %1260 = vmatprep.subr.mxu0 0.0
      %1261 = vmatpush2.msra.mxu0 0.0
      %1262 = vmatprep.subr.mxu0 0.0
      %1263 = vmatpush2.msra.mxu0 0.0
      %1264 = vmatprep.subr.mxu0 0.0
      %1265 = vmatpush2.msra.mxu0 0.0
      %1266 = vmatprep.mubr.f32.mxu0 0.0
      %1267 = vmatmul.mubr.f32.gmra.mxu0 %v1200
      %v1268 = vpop.f32.mrf.mxu0
      %v1269 = vadd.f32 %v1195, %v1268
      %v1270 = vpop.f32.mrf.mxu0
      %1271 = vdwg.mxu0
      %v1272 = vmul.f32 %v1184, %v475
      %v1273 = vsel %vm743, %v1272, 0.0
      %1274 = vadd.xlane.f32.xlu0 %v1273
      %v1275 = vpop.xlane.xlu0 %1274
      %v1276 = vlaneseq
      %v1277 = vshrl.u32 %v1276, 7
      %v1278 = vsub.s32 1, %v1277
      %v1279 = vrot.slane %v1186, %v1278
      %v1280 = vmul.f32 %v1275, %v1279
      %v1281 = vadd.f32 %v1269, %v1280
      %v1282 = vmul.f32 %v1184, %v476
      %v1283 = vsel %vm743, %v1282, 0.0
      %1284 = vadd.xlane.f32.xlu0 %v1283
      %v1285 = vpop.xlane.xlu0 %1284
      %v1286 = vlaneseq
      %v1287 = vshrl.u32 %v1286, 7
      %v1288 = vsub.s32 2, %v1287
      %v1289 = vrot.slane %v1186, %v1288
      %v1290 = vmul.f32 %v1285, %v1289
      %v1291 = vadd.f32 %v1281, %v1290
      %v1292 = vmul.f32 %v1184, %v477
      %v1293 = vsel %vm743, %v1292, 0.0
      %1294 = vadd.xlane.f32.xlu0 %v1293
      %v1295 = vpop.xlane.xlu0 %1294
      %v1296 = vlaneseq
      %v1297 = vshrl.u32 %v1296, 7
      %v1298 = vsub.s32 3, %v1297
      %v1299 = vrot.slane %v1186, %v1298
      %v1300 = vmul.f32 %v1295, %v1299
      %v1301 = vadd.f32 %v1291, %v1300
      %v1302 = vmul.f32 %v1184, %v478
      %v1303 = vsel %vm743, %v1302, 0.0
      %1304 = vadd.xlane.f32.xlu0 %v1303
      %v1305 = vpop.xlane.xlu0 %1304
      %v1306 = vlaneseq
      %v1307 = vshrl.u32 %v1306, 7
      %v1308 = vsub.s32 4, %v1307
      %v1309 = vrot.slane %v1186, %v1308
      %v1310 = vmul.f32 %v1305, %v1309
      %v1311 = vadd.f32 %v1301, %v1310
      %1312 = vrot.lane.b32.xlu0 %v985, 32
      %v1313 = vpop.permute.xlu0 %1312
      %v1315 = vadd.f32 %v1311, %v1313
      %vm1316 = vcmp.gt.f32.partialorder %v1315, 0.0
      %vm1317 = vcmp.lt.f32.partialorder %v1315, 0.0
      %v1318 = vsel %vm1317, -1.0, 0.0
      %v1319 = vsel %vm1316, 1.0, %v1318
      %v1320 = vand.u32 2147483647, %v1315
      %s1321 = scalar_lea.vmem %s6, 1
      %v1322 = vld [vmem:[%s1321] sm:$0x1]
      %v1324 = vlaneseq
      %v1325 = vshrl.u32 %v1324, 7
      %v1326 = vsub.s32 0, %v1325
      %v1327 = vrot.slane %v1322, %v1326
      %v1329 = vmul.f32 %v1320, %v1327
      %s1330 = scalar_lea.vmem %s7, 1
      %v1331 = vld [vmem:[%s1330] sm:$0x1]
      %v1333 = vlaneseq
      %v1334 = vshrl.u32 %v1333, 7
      %v1335 = vsub.s32 0, %v1334
      %v1336 = vrot.slane %v1331, %v1335
      %v1338 = vadd.f32 %v1329, %v1336
      %v1339 = vmax.f32 %v1338, 0.0
      %v1340 = vmul.f32 %v1319, %v1339
      %s1341 = scalar_lea.vmem %s3, 64
      %v1342 = vld [vmem:[%s1341] sm:$0xff]
      %v1343 = vld [vmem:[%s1341 + $0x8] sm:$0xff]
      %v1344 = vld [vmem:[%s1341 + $0x10] sm:$0xff]
      %v1345 = vld [vmem:[%s1341 + $0x18] sm:$0xff]
      %v1347 = vsel %vm486, %v1340, 0
      %1349 = vmatprep.subr.mxu0 0.0
      %1350 = vmatpush1.msra.mxu0 0.0
      %1351 = vmatprep.subr.mxu0 0.0
      %1352 = vmatpush1.msra.mxu0 0.0
      %1353 = vmatprep.subr.mxu0 0.0
      %1354 = vmatpush1.msra.mxu0 0.0
      %1355 = vmatprep.subr.mxu0 0.0
      %1356 = vmatpush1.msra.mxu0 0.0
      %1357 = vmatprep.subr.mxu0 0.0
      %1358 = vmatpush1.msra.mxu0 0.0
      %1359 = vmatprep.subr.mxu0 0.0
      %1360 = vmatpush1.msra.mxu0 0.0
      %1361 = vmatprep.subr.mxu0 0.0
      %1362 = vmatpush1.msra.mxu0 0.0
      %1363 = vmatprep.subr.mxu0 0.0
      %1364 = vmatpush1.msra.mxu0 0.0
      %1365 = vmatprep.subr.mxu0 0.0
      %1366 = vmatpush1.msra.mxu0 0.0
      %1367 = vmatprep.subr.mxu0 0.0
      %1368 = vmatpush1.msra.mxu0 0.0
      %1369 = vmatprep.subr.mxu0 0.0
      %1370 = vmatpush1.msra.mxu0 0.0
      %1371 = vmatprep.subr.mxu0 0.0
      %1372 = vmatpush1.msra.mxu0 0.0
      %1373 = vmatprep.subr.mxu0 0.0
      %1374 = vmatpush1.msra.mxu0 %v1345
      %1375 = vmatprep.subr.mxu0 0.0
      %1376 = vmatpush1.msra.mxu0 %v1344
      %1377 = vmatprep.subr.mxu0 0.0
      %1378 = vmatpush1.msra.mxu0 %v1343
      %1379 = vmatprep.subr.mxu0 0.0
      %1380 = vmatpush1.msra.mxu0 %v1342
      %1381 = vmatprep.subr.mxu0 0.0
      %1382 = vmatpush2.msra.mxu0 0.0
      %1383 = vmatprep.subr.mxu0 0.0
      %1384 = vmatpush2.msra.mxu0 0.0
      %1385 = vmatprep.subr.mxu0 0.0
      %1386 = vmatpush2.msra.mxu0 0.0
      %1387 = vmatprep.subr.mxu0 0.0
      %1388 = vmatpush2.msra.mxu0 0.0
      %1389 = vmatprep.subr.mxu0 0.0
      %1390 = vmatpush2.msra.mxu0 0.0
      %1391 = vmatprep.subr.mxu0 0.0
      %1392 = vmatpush2.msra.mxu0 0.0
      %1393 = vmatprep.subr.mxu0 0.0
      %1394 = vmatpush2.msra.mxu0 0.0
      %1395 = vmatprep.subr.mxu0 0.0
      %1396 = vmatpush2.msra.mxu0 0.0
      %1397 = vmatprep.subr.mxu0 0.0
      %1398 = vmatpush2.msra.mxu0 0.0
      %1399 = vmatprep.subr.mxu0 0.0
      %1400 = vmatpush2.msra.mxu0 0.0
      %1401 = vmatprep.subr.mxu0 0.0
      %1402 = vmatpush2.msra.mxu0 0.0
      %1403 = vmatprep.subr.mxu0 0.0
      %1404 = vmatpush2.msra.mxu0 0.0
      %1405 = vmatprep.subr.mxu0 0.0
      %1406 = vmatpush2.msra.mxu0 0.0
      %1407 = vmatprep.subr.mxu0 0.0
      %1408 = vmatpush2.msra.mxu0 0.0
      %1409 = vmatprep.subr.mxu0 0.0
      %1410 = vmatpush2.msra.mxu0 0.0
      %1411 = vmatprep.subr.mxu0 0.0
      %1412 = vmatpush2.msra.mxu0 0.0
      %1413 = vmatprep.mubr.f32.mxu0 0.0
      %1414 = vmatmul.mubr.f32.gmra.mxu0 %v1347
      %v1415 = vpop.f32.mrf.mxu0
      %v1416 = vadd.f32 0.0, %v1415
      %v1417 = vpop.f32.mrf.mxu0
      %1418 = vdwg.mxu0
      %s1419 = scalar_lea.vmem %s4, 64
      %v1420 = vld [vmem:[%s1419] sm:$0xff]
      %v1421 = vld [vmem:[%s1419 + $0x8] sm:$0xff]
      %v1422 = vld [vmem:[%s1419 + $0x10] sm:$0xff]
      %v1423 = vld [vmem:[%s1419 + $0x18] sm:$0xff]
      %v1425 = vsel %vm486, %v1416, 0
      %1427 = vmatprep.subr.mxu0 0.0
      %1428 = vmatpush1.msra.mxu0 0.0
      %1429 = vmatprep.subr.mxu0 0.0
      %1430 = vmatpush1.msra.mxu0 0.0
      %1431 = vmatprep.subr.mxu0 0.0
      %1432 = vmatpush1.msra.mxu0 0.0
      %1433 = vmatprep.subr.mxu0 0.0
      %1434 = vmatpush1.msra.mxu0 0.0
      %1435 = vmatprep.subr.mxu0 0.0
      %1436 = vmatpush1.msra.mxu0 0.0
      %1437 = vmatprep.subr.mxu0 0.0
      %1438 = vmatpush1.msra.mxu0 0.0
      %1439 = vmatprep.subr.mxu0 0.0
      %1440 = vmatpush1.msra.mxu0 0.0
      %1441 = vmatprep.subr.mxu0 0.0
      %1442 = vmatpush1.msra.mxu0 0.0
      %1443 = vmatprep.subr.mxu0 0.0
      %1444 = vmatpush1.msra.mxu0 0.0
      %1445 = vmatprep.subr.mxu0 0.0
      %1446 = vmatpush1.msra.mxu0 0.0
      %1447 = vmatprep.subr.mxu0 0.0
      %1448 = vmatpush1.msra.mxu0 0.0
      %1449 = vmatprep.subr.mxu0 0.0
      %1450 = vmatpush1.msra.mxu0 0.0
      %1451 = vmatprep.subr.mxu0 0.0
      %1452 = vmatpush1.msra.mxu0 %v1423
      %1453 = vmatprep.subr.mxu0 0.0
      %1454 = vmatpush1.msra.mxu0 %v1422
      %1455 = vmatprep.subr.mxu0 0.0
      %1456 = vmatpush1.msra.mxu0 %v1421
      %1457 = vmatprep.subr.mxu0 0.0
      %1458 = vmatpush1.msra.mxu0 %v1420
      %1459 = vmatprep.subr.mxu0 0.0
      %1460 = vmatpush2.msra.mxu0 0.0
      %1461 = vmatprep.subr.mxu0 0.0
      %1462 = vmatpush2.msra.mxu0 0.0
      %1463 = vmatprep.subr.mxu0 0.0
      %1464 = vmatpush2.msra.mxu0 0.0
      %1465 = vmatprep.subr.mxu0 0.0
      %1466 = vmatpush2.msra.mxu0 0.0
      %1467 = vmatprep.subr.mxu0 0.0
      %1468 = vmatpush2.msra.mxu0 0.0
      %1469 = vmatprep.subr.mxu0 0.0
      %1470 = vmatpush2.msra.mxu0 0.0
      %1471 = vmatprep.subr.mxu0 0.0
      %1472 = vmatpush2.msra.mxu0 0.0
      %1473 = vmatprep.subr.mxu0 0.0
      %1474 = vmatpush2.msra.mxu0 0.0
      %1475 = vmatprep.subr.mxu0 0.0
      %1476 = vmatpush2.msra.mxu0 0.0
      %1477 = vmatprep.subr.mxu0 0.0
      %1478 = vmatpush2.msra.mxu0 0.0
      %1479 = vmatprep.subr.mxu0 0.0
      %1480 = vmatpush2.msra.mxu0 0.0
      %1481 = vmatprep.subr.mxu0 0.0
      %1482 = vmatpush2.msra.mxu0 0.0
      %1483 = vmatprep.subr.mxu0 0.0
      %1484 = vmatpush2.msra.mxu0 0.0
      %1485 = vmatprep.subr.mxu0 0.0
      %1486 = vmatpush2.msra.mxu0 0.0
      %1487 = vmatprep.subr.mxu0 0.0
      %1488 = vmatpush2.msra.mxu0 0.0
      %1489 = vmatprep.subr.mxu0 0.0
      %1490 = vmatpush2.msra.mxu0 0.0
      %1491 = vmatprep.mubr.f32.mxu0 0.0
      %1492 = vmatmul.mubr.f32.gmra.mxu0 %v1425
      %v1493 = vpop.f32.mrf.mxu0
      %v1494 = vadd.f32 0.0, %v1493
      %v1495 = vpop.f32.mrf.mxu0
      %1496 = vdwg.mxu0
      %1498 = vset.pattern.permute.xlu0 0
      %1499 = vperm.xlu0 %1498, %v1494
      %v1500 = vpop.permute.xlu0 %1499
      %v1502 = vmul.f32 %v1500, %v474
      %1503 = vrot.lane.b32.xlu0 %v1416, 96
      %v1504 = vpop.permute.xlu0 %1503
      %v1505 = vsel %vm486, %v1504, 0
      %1507 = vmatprep.subr.mxu0 0.0
      %1508 = vmatpush1.xpose.msra.mxu0 0.0
      %1509 = vmatprep.subr.mxu0 0.0
      %1510 = vmatpush1.xpose.msra.mxu0 0.0
      %1511 = vmatprep.subr.mxu0 0.0
      %1512 = vmatpush1.xpose.msra.mxu0 0.0
      %1513 = vmatprep.subr.mxu0 0.0
      %1514 = vmatpush1.xpose.msra.mxu0 0.0
      %1515 = vmatprep.subr.mxu0 0.0
      %1516 = vmatpush1.xpose.msra.mxu0 0.0
      %1517 = vmatprep.subr.mxu0 0.0
      %1518 = vmatpush1.xpose.msra.mxu0 0.0
      %1519 = vmatprep.subr.mxu0 0.0
      %1520 = vmatpush1.xpose.msra.mxu0 0.0
      %1521 = vmatprep.subr.mxu0 0.0
      %1522 = vmatpush1.xpose.msra.mxu0 0.0
      %1523 = vmatprep.subr.mxu0 0.0
      %1524 = vmatpush1.xpose.msra.mxu0 0.0
      %1525 = vmatprep.subr.mxu0 0.0
      %1526 = vmatpush1.xpose.msra.mxu0 0.0
      %1527 = vmatprep.subr.mxu0 0.0
      %1528 = vmatpush1.xpose.msra.mxu0 0.0
      %1529 = vmatprep.subr.mxu0 0.0
      %1530 = vmatpush1.xpose.msra.mxu0 0.0
      %1531 = vmatprep.subr.mxu0 0.0
      %1532 = vmatpush1.xpose.msra.mxu0 0.0
      %1533 = vmatprep.subr.mxu0 0.0
      %1534 = vmatpush1.xpose.msra.mxu0 0.0
      %1535 = vmatprep.subr.mxu0 0.0
      %1536 = vmatpush1.xpose.msra.mxu0 0.0
      %1537 = vmatprep.subr.mxu0 0.0
      %1538 = vmatpush1.xpose.msra.mxu0 %v1505
      %1539 = vmatprep.subr.mxu0 0.0
      %1540 = vmatpush2.xpose.msra.mxu0 0.0
      %1541 = vmatprep.subr.mxu0 0.0
      %1542 = vmatpush2.xpose.msra.mxu0 0.0
      %1543 = vmatprep.subr.mxu0 0.0
      %1544 = vmatpush2.xpose.msra.mxu0 0.0
      %1545 = vmatprep.subr.mxu0 0.0
      %1546 = vmatpush2.xpose.msra.mxu0 0.0
      %1547 = vmatprep.subr.mxu0 0.0
      %1548 = vmatpush2.xpose.msra.mxu0 0.0
      %1549 = vmatprep.subr.mxu0 0.0
      %1550 = vmatpush2.xpose.msra.mxu0 0.0
      %1551 = vmatprep.subr.mxu0 0.0
      %1552 = vmatpush2.xpose.msra.mxu0 0.0
      %1553 = vmatprep.subr.mxu0 0.0
      %1554 = vmatpush2.xpose.msra.mxu0 0.0
      %1555 = vmatprep.subr.mxu0 0.0
      %1556 = vmatpush2.xpose.msra.mxu0 0.0
      %1557 = vmatprep.subr.mxu0 0.0
      %1558 = vmatpush2.xpose.msra.mxu0 0.0
      %1559 = vmatprep.subr.mxu0 0.0
      %1560 = vmatpush2.xpose.msra.mxu0 0.0
      %1561 = vmatprep.subr.mxu0 0.0
      %1562 = vmatpush2.xpose.msra.mxu0 0.0
      %1563 = vmatprep.subr.mxu0 0.0
      %1564 = vmatpush2.xpose.msra.mxu0 0.0
      %1565 = vmatprep.subr.mxu0 0.0
      %1566 = vmatpush2.xpose.msra.mxu0 0.0
      %1567 = vmatprep.subr.mxu0 0.0
      %1568 = vmatpush2.xpose.msra.mxu0 0.0
      %1569 = vmatprep.subr.mxu0 0.0
      %1570 = vmatpush2.xpose.msra.mxu0 0.0
      %1571 = vmatprep.mubr.f32.mxu0 0.0
      %1572 = vmatmul.mubr.f32.gmra.mxu0 %v1425
      %v1573 = vpop.f32.mrf.mxu0
      %v1574 = vadd.f32 %v1502, %v1573
      %v1575 = vpop.f32.mrf.mxu0
      %1576 = vdwg.mxu0
      %1577 = vset.pattern.permute.xlu0 1
      %1578 = vperm.xlu0 %1577, %v1494
      %v1579 = vpop.permute.xlu0 %1578
      %v1581 = vmul.f32 %v1579, %v475
      %v1582 = vadd.f32 %v1574, %v1581
      %1583 = vset.pattern.permute.xlu0 2
      %1584 = vperm.xlu0 %1583, %v1494
      %v1585 = vpop.permute.xlu0 %1584
      %v1587 = vmul.f32 %v1585, %v476
      %v1588 = vadd.f32 %v1582, %v1587
      %1589 = vset.pattern.permute.xlu0 3
      %1590 = vperm.xlu0 %1589, %v1494
      %v1591 = vpop.permute.xlu0 %1590
      %v1593 = vmul.f32 %v1591, %v477
      %v1594 = vadd.f32 %v1588, %v1593
      %1595 = vset.pattern.permute.xlu0 4
      %1596 = vperm.xlu0 %1595, %v1494
      %v1597 = vpop.permute.xlu0 %1596
      %v1599 = vmul.f32 %v1597, %v478
      %v1600 = vadd.f32 %v1594, %v1599
      %v1601 = vmul.f32 %v1600, 0.17677669
      %v1602 = vadd.f32 %v1601, %v481
      %v1603 = vsel %vm743, %v1602, -inf
      %1604 = vmax.xlane.f32.xlu0 %v1603
      %v1605 = vpop.xlane.xlu0 %1604
      %v1606 = vsub.f32 %v1602, %v1605
      %v1607 = vmul.f32 %v1606, 1.442695
      %v1608 = vpow.pop %v1607
      %v1609 = vmul.f32 %v1608, %v479
      %v1610 = vsel %vm743, %v1609, 0.0
      %1611 = vadd.xlane.f32.xlu0 %v1610
      %v1612 = vpop.xlane.xlu0 %1611
      %v1613 = vadd.f32 %v1612, 1e-12
      %v1614 = vrcp.pop %v1613
      %v1615 = vmul.f32 %v1609, %v1614
      %s1616 = scalar_lea.vmem %s5, 16
      %v1617 = vld [vmem:[%s1616] sm:$0x1f]
      %v1618 = vmul.f32 %v1615, %v474
      %v1619 = vsel %vm743, %v1618, 0.0
      %1620 = vadd.xlane.f32.xlu0 %v1619
      %v1621 = vpop.xlane.xlu0 %1620
      %v1622 = vlaneseq
      %v1623 = vshrl.u32 %v1622, 7
      %v1624 = vsub.s32 0, %v1623
      %v1625 = vrot.slane %v1617, %v1624
      %v1626 = vmul.f32 %v1621, %v1625
      %1627 = vrot.lane.b32.xlu0 %v1416, 64
      %v1628 = vpop.permute.xlu0 %1627
      %v1631 = vsel %vm743, %v1615, 0
      %1633 = vmatprep.subr.mxu0 0.0
      %1634 = vmatpush1.msra.mxu0 0.0
      %1635 = vmatprep.subr.mxu0 0.0
      %1636 = vmatpush1.msra.mxu0 0.0
      %1637 = vmatprep.subr.mxu0 0.0
      %1638 = vmatpush1.msra.mxu0 0.0
      %1639 = vmatprep.subr.mxu0 0.0
      %1640 = vmatpush1.msra.mxu0 0.0
      %1641 = vmatprep.subr.mxu0 0.0
      %1642 = vmatpush1.msra.mxu0 0.0
      %1643 = vmatprep.subr.mxu0 0.0
      %1644 = vmatpush1.msra.mxu0 0.0
      %1645 = vmatprep.subr.mxu0 0.0
      %1646 = vmatpush1.msra.mxu0 0.0
      %1647 = vmatprep.subr.mxu0 0.0
      %1648 = vmatpush1.msra.mxu0 0.0
      %1649 = vmatprep.subr.mxu0 0.0
      %1650 = vmatpush1.msra.mxu0 0.0
      %1651 = vmatprep.subr.mxu0 0.0
      %1652 = vmatpush1.msra.mxu0 0.0
      %1653 = vmatprep.subr.mxu0 0.0
      %1654 = vmatpush1.msra.mxu0 0.0
      %1655 = vmatprep.subr.mxu0 0.0
      %1656 = vmatpush1.msra.mxu0 0.0
      %1657 = vmatprep.subr.mxu0 0.0
      %1658 = vmatpush1.msra.mxu0 0.0
      %1659 = vmatprep.subr.mxu0 0.0
      %1660 = vmatpush1.msra.mxu0 0.0
      %1661 = vmatprep.subr.mxu0 0.0
      %1662 = vmatpush1.msra.mxu0 0.0
      %1663 = vmatprep.subr.mxu0 0.0
      %1664 = vmatpush1.msra.mxu0 %v1628
      %1665 = vmatprep.subr.mxu0 0.0
      %1666 = vmatpush2.msra.mxu0 0.0
      %1667 = vmatprep.subr.mxu0 0.0
      %1668 = vmatpush2.msra.mxu0 0.0
      %1669 = vmatprep.subr.mxu0 0.0
      %1670 = vmatpush2.msra.mxu0 0.0
      %1671 = vmatprep.subr.mxu0 0.0
      %1672 = vmatpush2.msra.mxu0 0.0
      %1673 = vmatprep.subr.mxu0 0.0
      %1674 = vmatpush2.msra.mxu0 0.0
      %1675 = vmatprep.subr.mxu0 0.0
      %1676 = vmatpush2.msra.mxu0 0.0
      %1677 = vmatprep.subr.mxu0 0.0
      %1678 = vmatpush2.msra.mxu0 0.0
      %1679 = vmatprep.subr.mxu0 0.0
      %1680 = vmatpush2.msra.mxu0 0.0
      %1681 = vmatprep.subr.mxu0 0.0
      %1682 = vmatpush2.msra.mxu0 0.0
      %1683 = vmatprep.subr.mxu0 0.0
      %1684 = vmatpush2.msra.mxu0 0.0
      %1685 = vmatprep.subr.mxu0 0.0
      %1686 = vmatpush2.msra.mxu0 0.0
      %1687 = vmatprep.subr.mxu0 0.0
      %1688 = vmatpush2.msra.mxu0 0.0
      %1689 = vmatprep.subr.mxu0 0.0
      %1690 = vmatpush2.msra.mxu0 0.0
      %1691 = vmatprep.subr.mxu0 0.0
      %1692 = vmatpush2.msra.mxu0 0.0
      %1693 = vmatprep.subr.mxu0 0.0
      %1694 = vmatpush2.msra.mxu0 0.0
      %1695 = vmatprep.subr.mxu0 0.0
      %1696 = vmatpush2.msra.mxu0 0.0
      %1697 = vmatprep.mubr.f32.mxu0 0.0
      %1698 = vmatmul.mubr.f32.gmra.mxu0 %v1631
      %v1699 = vpop.f32.mrf.mxu0
      %v1700 = vadd.f32 %v1626, %v1699
      %v1701 = vpop.f32.mrf.mxu0
      %1702 = vdwg.mxu0
      %v1703 = vmul.f32 %v1615, %v475
      %v1704 = vsel %vm743, %v1703, 0.0
      %1705 = vadd.xlane.f32.xlu0 %v1704
      %v1706 = vpop.xlane.xlu0 %1705
      %v1707 = vlaneseq
      %v1708 = vshrl.u32 %v1707, 7
      %v1709 = vsub.s32 1, %v1708
      %v1710 = vrot.slane %v1617, %v1709
      %v1711 = vmul.f32 %v1706, %v1710
      %v1712 = vadd.f32 %v1700, %v1711
      %v1713 = vmul.f32 %v1615, %v476
      %v1714 = vsel %vm743, %v1713, 0.0
      %1715 = vadd.xlane.f32.xlu0 %v1714
      %v1716 = vpop.xlane.xlu0 %1715
      %v1717 = vlaneseq
      %v1718 = vshrl.u32 %v1717, 7
      %v1719 = vsub.s32 2, %v1718
      %v1720 = vrot.slane %v1617, %v1719
      %v1721 = vmul.f32 %v1716, %v1720
      %v1722 = vadd.f32 %v1712, %v1721
      %v1723 = vmul.f32 %v1615, %v477
      %v1724 = vsel %vm743, %v1723, 0.0
      %1725 = vadd.xlane.f32.xlu0 %v1724
      %v1726 = vpop.xlane.xlu0 %1725
      %v1727 = vlaneseq
      %v1728 = vshrl.u32 %v1727, 7
      %v1729 = vsub.s32 3, %v1728
      %v1730 = vrot.slane %v1617, %v1729
      %v1731 = vmul.f32 %v1726, %v1730
      %v1732 = vadd.f32 %v1722, %v1731
      %v1733 = vmul.f32 %v1615, %v478
      %v1734 = vsel %vm743, %v1733, 0.0
      %1735 = vadd.xlane.f32.xlu0 %v1734
      %v1736 = vpop.xlane.xlu0 %1735
      %v1737 = vlaneseq
      %v1738 = vshrl.u32 %v1737, 7
      %v1739 = vsub.s32 4, %v1738
      %v1740 = vrot.slane %v1617, %v1739
      %v1741 = vmul.f32 %v1736, %v1740
      %v1742 = vadd.f32 %v1732, %v1741
      %1743 = vrot.lane.b32.xlu0 %v1416, 32
      %v1744 = vpop.permute.xlu0 %1743
      %v1746 = vadd.f32 %v1742, %v1744
      %vm1747 = vcmp.gt.f32.partialorder %v1746, 0.0
      %vm1748 = vcmp.lt.f32.partialorder %v1746, 0.0
      %v1749 = vsel %vm1748, -1.0, 0.0
      %v1750 = vsel %vm1747, 1.0, %v1749
      %v1751 = vand.u32 2147483647, %v1746
      %s1752 = scalar_lea.vmem %s6, 2
      %v1753 = vld [vmem:[%s1752] sm:$0x1]
      %v1755 = vlaneseq
      %v1756 = vshrl.u32 %v1755, 7
      %v1757 = vsub.s32 0, %v1756
      %v1758 = vrot.slane %v1753, %v1757
      %v1760 = vmul.f32 %v1751, %v1758
      %s1761 = scalar_lea.vmem %s7, 2
      %v1762 = vld [vmem:[%s1761] sm:$0x1]
      %v1764 = vlaneseq
      %v1765 = vshrl.u32 %v1764, 7
      %v1766 = vsub.s32 0, %v1765
      %v1767 = vrot.slane %v1762, %v1766
      %v1769 = vadd.f32 %v1760, %v1767
      %v1770 = vmax.f32 %v1769, 0.0
      %v1771 = vmul.f32 %v1750, %v1770
      %s1772 = scalar_lea.vmem %s3, 96
      %v1773 = vld [vmem:[%s1772] sm:$0xff]
      %v1774 = vld [vmem:[%s1772 + $0x8] sm:$0xff]
      %v1775 = vld [vmem:[%s1772 + $0x10] sm:$0xff]
      %v1776 = vld [vmem:[%s1772 + $0x18] sm:$0xff]
      %v1778 = vsel %vm486, %v1771, 0
      %1780 = vmatprep.subr.mxu0 0.0
      %1781 = vmatpush1.msra.mxu0 0.0
      %1782 = vmatprep.subr.mxu0 0.0
      %1783 = vmatpush1.msra.mxu0 0.0
      %1784 = vmatprep.subr.mxu0 0.0
      %1785 = vmatpush1.msra.mxu0 0.0
      %1786 = vmatprep.subr.mxu0 0.0
      %1787 = vmatpush1.msra.mxu0 0.0
      %1788 = vmatprep.subr.mxu0 0.0
      %1789 = vmatpush1.msra.mxu0 0.0
      %1790 = vmatprep.subr.mxu0 0.0
      %1791 = vmatpush1.msra.mxu0 0.0
      %1792 = vmatprep.subr.mxu0 0.0
      %1793 = vmatpush1.msra.mxu0 0.0
      %1794 = vmatprep.subr.mxu0 0.0
      %1795 = vmatpush1.msra.mxu0 0.0
      %1796 = vmatprep.subr.mxu0 0.0
      %1797 = vmatpush1.msra.mxu0 0.0
      %1798 = vmatprep.subr.mxu0 0.0
      %1799 = vmatpush1.msra.mxu0 0.0
      %1800 = vmatprep.subr.mxu0 0.0
      %1801 = vmatpush1.msra.mxu0 0.0
      %1802 = vmatprep.subr.mxu0 0.0
      %1803 = vmatpush1.msra.mxu0 0.0
      %1804 = vmatprep.subr.mxu0 0.0
      %1805 = vmatpush1.msra.mxu0 %v1776
      %1806 = vmatprep.subr.mxu0 0.0
      %1807 = vmatpush1.msra.mxu0 %v1775
      %1808 = vmatprep.subr.mxu0 0.0
      %1809 = vmatpush1.msra.mxu0 %v1774
      %1810 = vmatprep.subr.mxu0 0.0
      %1811 = vmatpush1.msra.mxu0 %v1773
      %1812 = vmatprep.subr.mxu0 0.0
      %1813 = vmatpush2.msra.mxu0 0.0
      %1814 = vmatprep.subr.mxu0 0.0
      %1815 = vmatpush2.msra.mxu0 0.0
      %1816 = vmatprep.subr.mxu0 0.0
      %1817 = vmatpush2.msra.mxu0 0.0
      %1818 = vmatprep.subr.mxu0 0.0
      %1819 = vmatpush2.msra.mxu0 0.0
      %1820 = vmatprep.subr.mxu0 0.0
      %1821 = vmatpush2.msra.mxu0 0.0
      %1822 = vmatprep.subr.mxu0 0.0
      %1823 = vmatpush2.msra.mxu0 0.0
      %1824 = vmatprep.subr.mxu0 0.0
      %1825 = vmatpush2.msra.mxu0 0.0
      %1826 = vmatprep.subr.mxu0 0.0
      %1827 = vmatpush2.msra.mxu0 0.0
      %1828 = vmatprep.subr.mxu0 0.0
      %1829 = vmatpush2.msra.mxu0 0.0
      %1830 = vmatprep.subr.mxu0 0.0
      %1831 = vmatpush2.msra.mxu0 0.0
      %1832 = vmatprep.subr.mxu0 0.0
      %1833 = vmatpush2.msra.mxu0 0.0
      %1834 = vmatprep.subr.mxu0 0.0
      %1835 = vmatpush2.msra.mxu0 0.0
      %1836 = vmatprep.subr.mxu0 0.0
      %1837 = vmatpush2.msra.mxu0 0.0
      %1838 = vmatprep.subr.mxu0 0.0
      %1839 = vmatpush2.msra.mxu0 0.0
      %1840 = vmatprep.subr.mxu0 0.0
      %1841 = vmatpush2.msra.mxu0 0.0
      %1842 = vmatprep.subr.mxu0 0.0
      %1843 = vmatpush2.msra.mxu0 0.0
      %1844 = vmatprep.mubr.f32.mxu0 0.0
      %1845 = vmatmul.mubr.f32.gmra.mxu0 %v1778
      %v1846 = vpop.f32.mrf.mxu0
      %v1847 = vadd.f32 0.0, %v1846
      %v1848 = vpop.f32.mrf.mxu0
      %1849 = vdwg.mxu0
      %s1850 = scalar_lea.vmem %s4, 96
      %v1851 = vld [vmem:[%s1850] sm:$0xff]
      %v1852 = vld [vmem:[%s1850 + $0x8] sm:$0xff]
      %v1853 = vld [vmem:[%s1850 + $0x10] sm:$0xff]
      %v1854 = vld [vmem:[%s1850 + $0x18] sm:$0xff]
      %v1856 = vsel %vm486, %v1847, 0
      %1858 = vmatprep.subr.mxu0 0.0
      %1859 = vmatpush1.msra.mxu0 0.0
      %1860 = vmatprep.subr.mxu0 0.0
      %1861 = vmatpush1.msra.mxu0 0.0
      %1862 = vmatprep.subr.mxu0 0.0
      %1863 = vmatpush1.msra.mxu0 0.0
      %1864 = vmatprep.subr.mxu0 0.0
      %1865 = vmatpush1.msra.mxu0 0.0
      %1866 = vmatprep.subr.mxu0 0.0
      %1867 = vmatpush1.msra.mxu0 0.0
      %1868 = vmatprep.subr.mxu0 0.0
      %1869 = vmatpush1.msra.mxu0 0.0
      %1870 = vmatprep.subr.mxu0 0.0
      %1871 = vmatpush1.msra.mxu0 0.0
      %1872 = vmatprep.subr.mxu0 0.0
      %1873 = vmatpush1.msra.mxu0 0.0
      %1874 = vmatprep.subr.mxu0 0.0
      %1875 = vmatpush1.msra.mxu0 0.0
      %1876 = vmatprep.subr.mxu0 0.0
      %1877 = vmatpush1.msra.mxu0 0.0
      %1878 = vmatprep.subr.mxu0 0.0
      %1879 = vmatpush1.msra.mxu0 0.0
      %1880 = vmatprep.subr.mxu0 0.0
      %1881 = vmatpush1.msra.mxu0 0.0
      %1882 = vmatprep.subr.mxu0 0.0
      %1883 = vmatpush1.msra.mxu0 %v1854
      %1884 = vmatprep.subr.mxu0 0.0
      %1885 = vmatpush1.msra.mxu0 %v1853
      %1886 = vmatprep.subr.mxu0 0.0
      %1887 = vmatpush1.msra.mxu0 %v1852
      %1888 = vmatprep.subr.mxu0 0.0
      %1889 = vmatpush1.msra.mxu0 %v1851
      %1890 = vmatprep.subr.mxu0 0.0
      %1891 = vmatpush2.msra.mxu0 0.0
      %1892 = vmatprep.subr.mxu0 0.0
      %1893 = vmatpush2.msra.mxu0 0.0
      %1894 = vmatprep.subr.mxu0 0.0
      %1895 = vmatpush2.msra.mxu0 0.0
      %1896 = vmatprep.subr.mxu0 0.0
      %1897 = vmatpush2.msra.mxu0 0.0
      %1898 = vmatprep.subr.mxu0 0.0
      %1899 = vmatpush2.msra.mxu0 0.0
      %1900 = vmatprep.subr.mxu0 0.0
      %1901 = vmatpush2.msra.mxu0 0.0
      %1902 = vmatprep.subr.mxu0 0.0
      %1903 = vmatpush2.msra.mxu0 0.0
      %1904 = vmatprep.subr.mxu0 0.0
      %1905 = vmatpush2.msra.mxu0 0.0
      %1906 = vmatprep.subr.mxu0 0.0
      %1907 = vmatpush2.msra.mxu0 0.0
      %1908 = vmatprep.subr.mxu0 0.0
      %1909 = vmatpush2.msra.mxu0 0.0
      %1910 = vmatprep.subr.mxu0 0.0
      %1911 = vmatpush2.msra.mxu0 0.0
      %1912 = vmatprep.subr.mxu0 0.0
      %1913 = vmatpush2.msra.mxu0 0.0
      %1914 = vmatprep.subr.mxu0 0.0
      %1915 = vmatpush2.msra.mxu0 0.0
      %1916 = vmatprep.subr.mxu0 0.0
      %1917 = vmatpush2.msra.mxu0 0.0
      %1918 = vmatprep.subr.mxu0 0.0
      %1919 = vmatpush2.msra.mxu0 0.0
      %1920 = vmatprep.subr.mxu0 0.0
      %1921 = vmatpush2.msra.mxu0 0.0
      %1922 = vmatprep.mubr.f32.mxu0 0.0
      %1923 = vmatmul.mubr.f32.gmra.mxu0 %v1856
      %v1924 = vpop.f32.mrf.mxu0
      %v1925 = vadd.f32 0.0, %v1924
      %v1926 = vpop.f32.mrf.mxu0
      %1927 = vdwg.mxu0
      %1929 = vset.pattern.permute.xlu0 0
      %1930 = vperm.xlu0 %1929, %v1925
      %v1931 = vpop.permute.xlu0 %1930
      %v1933 = vmul.f32 %v1931, %v474
      %1934 = vrot.lane.b32.xlu0 %v1847, 96
      %v1935 = vpop.permute.xlu0 %1934
      %v1936 = vsel %vm486, %v1935, 0
      %1938 = vmatprep.subr.mxu0 0.0
      %1939 = vmatpush1.xpose.msra.mxu0 0.0
      %1940 = vmatprep.subr.mxu0 0.0
      %1941 = vmatpush1.xpose.msra.mxu0 0.0
      %1942 = vmatprep.subr.mxu0 0.0
      %1943 = vmatpush1.xpose.msra.mxu0 0.0
      %1944 = vmatprep.subr.mxu0 0.0
      %1945 = vmatpush1.xpose.msra.mxu0 0.0
      %1946 = vmatprep.subr.mxu0 0.0
      %1947 = vmatpush1.xpose.msra.mxu0 0.0
      %1948 = vmatprep.subr.mxu0 0.0
      %1949 = vmatpush1.xpose.msra.mxu0 0.0
      %1950 = vmatprep.subr.mxu0 0.0
      %1951 = vmatpush1.xpose.msra.mxu0 0.0
      %1952 = vmatprep.subr.mxu0 0.0
      %1953 = vmatpush1.xpose.msra.mxu0 0.0
      %1954 = vmatprep.subr.mxu0 0.0
      %1955 = vmatpush1.xpose.msra.mxu0 0.0
      %1956 = vmatprep.subr.mxu0 0.0
      %1957 = vmatpush1.xpose.msra.mxu0 0.0
      %1958 = vmatprep.subr.mxu0 0.0
      %1959 = vmatpush1.xpose.msra.mxu0 0.0
      %1960 = vmatprep.subr.mxu0 0.0
      %1961 = vmatpush1.xpose.msra.mxu0 0.0
      %1962 = vmatprep.subr.mxu0 0.0
      %1963 = vmatpush1.xpose.msra.mxu0 0.0
      %1964 = vmatprep.subr.mxu0 0.0
      %1965 = vmatpush1.xpose.msra.mxu0 0.0
      %1966 = vmatprep.subr.mxu0 0.0
      %1967 = vmatpush1.xpose.msra.mxu0 0.0
      %1968 = vmatprep.subr.mxu0 0.0
      %1969 = vmatpush1.xpose.msra.mxu0 %v1936
      %1970 = vmatprep.subr.mxu0 0.0
      %1971 = vmatpush2.xpose.msra.mxu0 0.0
      %1972 = vmatprep.subr.mxu0 0.0
      %1973 = vmatpush2.xpose.msra.mxu0 0.0
      %1974 = vmatprep.subr.mxu0 0.0
      %1975 = vmatpush2.xpose.msra.mxu0 0.0
      %1976 = vmatprep.subr.mxu0 0.0
      %1977 = vmatpush2.xpose.msra.mxu0 0.0
      %1978 = vmatprep.subr.mxu0 0.0
      %1979 = vmatpush2.xpose.msra.mxu0 0.0
      %1980 = vmatprep.subr.mxu0 0.0
      %1981 = vmatpush2.xpose.msra.mxu0 0.0
      %1982 = vmatprep.subr.mxu0 0.0
      %1983 = vmatpush2.xpose.msra.mxu0 0.0
      %1984 = vmatprep.subr.mxu0 0.0
      %1985 = vmatpush2.xpose.msra.mxu0 0.0
      %1986 = vmatprep.subr.mxu0 0.0
      %1987 = vmatpush2.xpose.msra.mxu0 0.0
      %1988 = vmatprep.subr.mxu0 0.0
      %1989 = vmatpush2.xpose.msra.mxu0 0.0
      %1990 = vmatprep.subr.mxu0 0.0
      %1991 = vmatpush2.xpose.msra.mxu0 0.0
      %1992 = vmatprep.subr.mxu0 0.0
      %1993 = vmatpush2.xpose.msra.mxu0 0.0
      %1994 = vmatprep.subr.mxu0 0.0
      %1995 = vmatpush2.xpose.msra.mxu0 0.0
      %1996 = vmatprep.subr.mxu0 0.0
      %1997 = vmatpush2.xpose.msra.mxu0 0.0
      %1998 = vmatprep.subr.mxu0 0.0
      %1999 = vmatpush2.xpose.msra.mxu0 0.0
      %2000 = vmatprep.subr.mxu0 0.0
      %2001 = vmatpush2.xpose.msra.mxu0 0.0
      %2002 = vmatprep.mubr.f32.mxu0 0.0
      %2003 = vmatmul.mubr.f32.gmra.mxu0 %v1856
      %v2004 = vpop.f32.mrf.mxu0
      %v2005 = vadd.f32 %v1933, %v2004
      %v2006 = vpop.f32.mrf.mxu0
      %2007 = vdwg.mxu0
      %2008 = vset.pattern.permute.xlu0 1
      %2009 = vperm.xlu0 %2008, %v1925
      %v2010 = vpop.permute.xlu0 %2009
      %v2012 = vmul.f32 %v2010, %v475
      %v2013 = vadd.f32 %v2005, %v2012
      %2014 = vset.pattern.permute.xlu0 2
      %2015 = vperm.xlu0 %2014, %v1925
      %v2016 = vpop.permute.xlu0 %2015
      %v2018 = vmul.f32 %v2016, %v476
      %v2019 = vadd.f32 %v2013, %v2018
      %2020 = vset.pattern.permute.xlu0 3
      %2021 = vperm.xlu0 %2020, %v1925
      %v2022 = vpop.permute.xlu0 %2021
      %v2024 = vmul.f32 %v2022, %v477
      %v2025 = vadd.f32 %v2019, %v2024
      %2026 = vset.pattern.permute.xlu0 4
      %2027 = vperm.xlu0 %2026, %v1925
      %v2028 = vpop.permute.xlu0 %2027
      %v2030 = vmul.f32 %v2028, %v478
      %v2031 = vadd.f32 %v2025, %v2030
      %v2032 = vmul.f32 %v2031, 0.17677669
      %v2033 = vadd.f32 %v2032, %v481
      %v2034 = vsel %vm743, %v2033, -inf
      %2035 = vmax.xlane.f32.xlu0 %v2034
      %v2036 = vpop.xlane.xlu0 %2035
      %v2037 = vsub.f32 %v2033, %v2036
      %v2038 = vmul.f32 %v2037, 1.442695
      %v2039 = vpow.pop %v2038
      %v2040 = vmul.f32 %v2039, %v479
      %v2041 = vsel %vm743, %v2040, 0.0
      %2042 = vadd.xlane.f32.xlu0 %v2041
      %v2043 = vpop.xlane.xlu0 %2042
      %v2044 = vadd.f32 %v2043, 1e-12
      %v2045 = vrcp.pop %v2044
      %v2046 = vmul.f32 %v2040, %v2045
      %s2047 = scalar_lea.vmem %s5, 24
      %v2048 = vld [vmem:[%s2047] sm:$0x1f]
      %v2049 = vmul.f32 %v2046, %v474
      %v2050 = vsel %vm743, %v2049, 0.0
      %2051 = vadd.xlane.f32.xlu0 %v2050
      %v2052 = vpop.xlane.xlu0 %2051
      %v2053 = vlaneseq
      %v2054 = vshrl.u32 %v2053, 7
      %v2055 = vsub.s32 0, %v2054
      %v2056 = vrot.slane %v2048, %v2055
      %v2057 = vmul.f32 %v2052, %v2056
      %2058 = vrot.lane.b32.xlu0 %v1847, 64
      %v2059 = vpop.permute.xlu0 %2058
      %v2062 = vsel %vm743, %v2046, 0
      %2064 = vmatprep.subr.mxu0 0.0
      %2065 = vmatpush1.msra.mxu0 0.0
      %2066 = vmatprep.subr.mxu0 0.0
      %2067 = vmatpush1.msra.mxu0 0.0
      %2068 = vmatprep.subr.mxu0 0.0
      %2069 = vmatpush1.msra.mxu0 0.0
      %2070 = vmatprep.subr.mxu0 0.0
      %2071 = vmatpush1.msra.mxu0 0.0
      %2072 = vmatprep.subr.mxu0 0.0
      %2073 = vmatpush1.msra.mxu0 0.0
      %2074 = vmatprep.subr.mxu0 0.0
      %2075 = vmatpush1.msra.mxu0 0.0
      %2076 = vmatprep.subr.mxu0 0.0
      %2077 = vmatpush1.msra.mxu0 0.0
      %2078 = vmatprep.subr.mxu0 0.0
      %2079 = vmatpush1.msra.mxu0 0.0
      %2080 = vmatprep.subr.mxu0 0.0
      %2081 = vmatpush1.msra.mxu0 0.0
      %2082 = vmatprep.subr.mxu0 0.0
      %2083 = vmatpush1.msra.mxu0 0.0
      %2084 = vmatprep.subr.mxu0 0.0
      %2085 = vmatpush1.msra.mxu0 0.0
      %2086 = vmatprep.subr.mxu0 0.0
      %2087 = vmatpush1.msra.mxu0 0.0
      %2088 = vmatprep.subr.mxu0 0.0
      %2089 = vmatpush1.msra.mxu0 0.0
      %2090 = vmatprep.subr.mxu0 0.0
      %2091 = vmatpush1.msra.mxu0 0.0
      %2092 = vmatprep.subr.mxu0 0.0
      %2093 = vmatpush1.msra.mxu0 0.0
      %2094 = vmatprep.subr.mxu0 0.0
      %2095 = vmatpush1.msra.mxu0 %v2059
      %2096 = vmatprep.subr.mxu0 0.0
      %2097 = vmatpush2.msra.mxu0 0.0
      %2098 = vmatprep.subr.mxu0 0.0
      %2099 = vmatpush2.msra.mxu0 0.0
      %2100 = vmatprep.subr.mxu0 0.0
      %2101 = vmatpush2.msra.mxu0 0.0
      %2102 = vmatprep.subr.mxu0 0.0
      %2103 = vmatpush2.msra.mxu0 0.0
      %2104 = vmatprep.subr.mxu0 0.0
      %2105 = vmatpush2.msra.mxu0 0.0
      %2106 = vmatprep.subr.mxu0 0.0
      %2107 = vmatpush2.msra.mxu0 0.0
      %2108 = vmatprep.subr.mxu0 0.0
      %2109 = vmatpush2.msra.mxu0 0.0
      %2110 = vmatprep.subr.mxu0 0.0
      %2111 = vmatpush2.msra.mxu0 0.0
      %2112 = vmatprep.subr.mxu0 0.0
      %2113 = vmatpush2.msra.mxu0 0.0
      %2114 = vmatprep.subr.mxu0 0.0
      %2115 = vmatpush2.msra.mxu0 0.0
      %2116 = vmatprep.subr.mxu0 0.0
      %2117 = vmatpush2.msra.mxu0 0.0
      %2118 = vmatprep.subr.mxu0 0.0
      %2119 = vmatpush2.msra.mxu0 0.0
      %2120 = vmatprep.subr.mxu0 0.0
      %2121 = vmatpush2.msra.mxu0 0.0
      %2122 = vmatprep.subr.mxu0 0.0
      %2123 = vmatpush2.msra.mxu0 0.0
      %2124 = vmatprep.subr.mxu0 0.0
      %2125 = vmatpush2.msra.mxu0 0.0
      %2126 = vmatprep.subr.mxu0 0.0
      %2127 = vmatpush2.msra.mxu0 0.0
      %2128 = vmatprep.mubr.f32.mxu0 0.0
      %2129 = vmatmul.mubr.f32.gmra.mxu0 %v2062
      %v2130 = vpop.f32.mrf.mxu0
      %v2131 = vadd.f32 %v2057, %v2130
      %v2132 = vpop.f32.mrf.mxu0
      %2133 = vdwg.mxu0
      %v2134 = vmul.f32 %v2046, %v475
      %v2135 = vsel %vm743, %v2134, 0.0
      %2136 = vadd.xlane.f32.xlu0 %v2135
      %v2137 = vpop.xlane.xlu0 %2136
      %v2138 = vlaneseq
      %v2139 = vshrl.u32 %v2138, 7
      %v2140 = vsub.s32 1, %v2139
      %v2141 = vrot.slane %v2048, %v2140
      %v2142 = vmul.f32 %v2137, %v2141
      %v2143 = vadd.f32 %v2131, %v2142
      %v2144 = vmul.f32 %v2046, %v476
      %v2145 = vsel %vm743, %v2144, 0.0
      %2146 = vadd.xlane.f32.xlu0 %v2145
      %v2147 = vpop.xlane.xlu0 %2146
      %v2148 = vlaneseq
      %v2149 = vshrl.u32 %v2148, 7
      %v2150 = vsub.s32 2, %v2149
      %v2151 = vrot.slane %v2048, %v2150
      %v2152 = vmul.f32 %v2147, %v2151
      %v2153 = vadd.f32 %v2143, %v2152
      %v2154 = vmul.f32 %v2046, %v477
      %v2155 = vsel %vm743, %v2154, 0.0
      %2156 = vadd.xlane.f32.xlu0 %v2155
      %v2157 = vpop.xlane.xlu0 %2156
      %v2158 = vlaneseq
      %v2159 = vshrl.u32 %v2158, 7
      %v2160 = vsub.s32 3, %v2159
      %v2161 = vrot.slane %v2048, %v2160
      %v2162 = vmul.f32 %v2157, %v2161
      %v2163 = vadd.f32 %v2153, %v2162
      %v2164 = vmul.f32 %v2046, %v478
      %v2165 = vsel %vm743, %v2164, 0.0
      %2166 = vadd.xlane.f32.xlu0 %v2165
      %v2167 = vpop.xlane.xlu0 %2166
      %v2168 = vlaneseq
      %v2169 = vshrl.u32 %v2168, 7
      %v2170 = vsub.s32 4, %v2169
      %v2171 = vrot.slane %v2048, %v2170
      %v2172 = vmul.f32 %v2167, %v2171
      %v2173 = vadd.f32 %v2163, %v2172
      %2174 = vrot.lane.b32.xlu0 %v1847, 32
      %v2175 = vpop.permute.xlu0 %2174
      %v2177 = vadd.f32 %v2173, %v2175
      %vm2178 = vcmp.gt.f32.partialorder %v2177, 0.0
      %vm2179 = vcmp.lt.f32.partialorder %v2177, 0.0
      %v2180 = vsel %vm2179, -1.0, 0.0
      %v2181 = vsel %vm2178, 1.0, %v2180
      %v2182 = vand.u32 2147483647, %v2177
      %s2183 = scalar_lea.vmem %s6, 3
      %v2184 = vld [vmem:[%s2183] sm:$0x1]
      %v2186 = vlaneseq
      %v2187 = vshrl.u32 %v2186, 7
      %v2188 = vsub.s32 0, %v2187
      %v2189 = vrot.slane %v2184, %v2188
      %v2191 = vmul.f32 %v2182, %v2189
      %s2192 = scalar_lea.vmem %s7, 3
      %v2193 = vld [vmem:[%s2192] sm:$0x1]
      %v2195 = vlaneseq
      %v2196 = vshrl.u32 %v2195, 7
      %v2197 = vsub.s32 0, %v2196
      %v2198 = vrot.slane %v2193, %v2197
      %v2200 = vadd.f32 %v2191, %v2198
      %v2201 = vmax.f32 %v2200, 0.0
      %v2202 = vmul.f32 %v2181, %v2201
      %s2203 = scalar_lea.vmem %s3, 128
      %v2204 = vld [vmem:[%s2203] sm:$0xff]
      %v2205 = vld [vmem:[%s2203 + $0x8] sm:$0xff]
      %v2206 = vld [vmem:[%s2203 + $0x10] sm:$0xff]
      %v2207 = vld [vmem:[%s2203 + $0x18] sm:$0xff]
      %v2209 = vsel %vm486, %v2202, 0
      %2211 = vmatprep.subr.mxu0 0.0
      %2212 = vmatpush1.msra.mxu0 0.0
      %2213 = vmatprep.subr.mxu0 0.0
      %2214 = vmatpush1.msra.mxu0 0.0
      %2215 = vmatprep.subr.mxu0 0.0
      %2216 = vmatpush1.msra.mxu0 0.0
      %2217 = vmatprep.subr.mxu0 0.0
      %2218 = vmatpush1.msra.mxu0 0.0
      %2219 = vmatprep.subr.mxu0 0.0
      %2220 = vmatpush1.msra.mxu0 0.0
      %2221 = vmatprep.subr.mxu0 0.0
      %2222 = vmatpush1.msra.mxu0 0.0
      %2223 = vmatprep.subr.mxu0 0.0
      %2224 = vmatpush1.msra.mxu0 0.0
      %2225 = vmatprep.subr.mxu0 0.0
      %2226 = vmatpush1.msra.mxu0 0.0
      %2227 = vmatprep.subr.mxu0 0.0
      %2228 = vmatpush1.msra.mxu0 0.0
      %2229 = vmatprep.subr.mxu0 0.0
      %2230 = vmatpush1.msra.mxu0 0.0
      %2231 = vmatprep.subr.mxu0 0.0
      %2232 = vmatpush1.msra.mxu0 0.0
      %2233 = vmatprep.subr.mxu0 0.0
      %2234 = vmatpush1.msra.mxu0 0.0
      %2235 = vmatprep.subr.mxu0 0.0
      %2236 = vmatpush1.msra.mxu0 %v2207
      %2237 = vmatprep.subr.mxu0 0.0
      %2238 = vmatpush1.msra.mxu0 %v2206
      %2239 = vmatprep.subr.mxu0 0.0
      %2240 = vmatpush1.msra.mxu0 %v2205
      %2241 = vmatprep.subr.mxu0 0.0
      %2242 = vmatpush1.msra.mxu0 %v2204
      %2243 = vmatprep.subr.mxu0 0.0
      %2244 = vmatpush2.msra.mxu0 0.0
      %2245 = vmatprep.subr.mxu0 0.0
      %2246 = vmatpush2.msra.mxu0 0.0
      %2247 = vmatprep.subr.mxu0 0.0
      %2248 = vmatpush2.msra.mxu0 0.0
      %2249 = vmatprep.subr.mxu0 0.0
      %2250 = vmatpush2.msra.mxu0 0.0
      %2251 = vmatprep.subr.mxu0 0.0
      %2252 = vmatpush2.msra.mxu0 0.0
      %2253 = vmatprep.subr.mxu0 0.0
      %2254 = vmatpush2.msra.mxu0 0.0
      %2255 = vmatprep.subr.mxu0 0.0
      %2256 = vmatpush2.msra.mxu0 0.0
      %2257 = vmatprep.subr.mxu0 0.0
      %2258 = vmatpush2.msra.mxu0 0.0
      %2259 = vmatprep.subr.mxu0 0.0
      %2260 = vmatpush2.msra.mxu0 0.0
      %2261 = vmatprep.subr.mxu0 0.0
      %2262 = vmatpush2.msra.mxu0 0.0
      %2263 = vmatprep.subr.mxu0 0.0
      %2264 = vmatpush2.msra.mxu0 0.0
      %2265 = vmatprep.subr.mxu0 0.0
      %2266 = vmatpush2.msra.mxu0 0.0
      %2267 = vmatprep.subr.mxu0 0.0
      %2268 = vmatpush2.msra.mxu0 0.0
      %2269 = vmatprep.subr.mxu0 0.0
      %2270 = vmatpush2.msra.mxu0 0.0
      %2271 = vmatprep.subr.mxu0 0.0
      %2272 = vmatpush2.msra.mxu0 0.0
      %2273 = vmatprep.subr.mxu0 0.0
      %2274 = vmatpush2.msra.mxu0 0.0
      %2275 = vmatprep.mubr.f32.mxu0 0.0
      %2276 = vmatmul.mubr.f32.gmra.mxu0 %v2209
      %v2277 = vpop.f32.mrf.mxu0
      %v2278 = vadd.f32 0.0, %v2277
      %v2279 = vpop.f32.mrf.mxu0
      %2280 = vdwg.mxu0
      %s2281 = scalar_lea.vmem %s4, 128
      %v2282 = vld [vmem:[%s2281] sm:$0xff]
      %v2283 = vld [vmem:[%s2281 + $0x8] sm:$0xff]
      %v2284 = vld [vmem:[%s2281 + $0x10] sm:$0xff]
      %v2285 = vld [vmem:[%s2281 + $0x18] sm:$0xff]
      %v2287 = vsel %vm486, %v2278, 0
      %2289 = vmatprep.subr.mxu0 0.0
      %2290 = vmatpush1.msra.mxu0 0.0
      %2291 = vmatprep.subr.mxu0 0.0
      %2292 = vmatpush1.msra.mxu0 0.0
      %2293 = vmatprep.subr.mxu0 0.0
      %2294 = vmatpush1.msra.mxu0 0.0
      %2295 = vmatprep.subr.mxu0 0.0
      %2296 = vmatpush1.msra.mxu0 0.0
      %2297 = vmatprep.subr.mxu0 0.0
      %2298 = vmatpush1.msra.mxu0 0.0
      %2299 = vmatprep.subr.mxu0 0.0
      %2300 = vmatpush1.msra.mxu0 0.0
      %2301 = vmatprep.subr.mxu0 0.0
      %2302 = vmatpush1.msra.mxu0 0.0
      %2303 = vmatprep.subr.mxu0 0.0
      %2304 = vmatpush1.msra.mxu0 0.0
      %2305 = vmatprep.subr.mxu0 0.0
      %2306 = vmatpush1.msra.mxu0 0.0
      %2307 = vmatprep.subr.mxu0 0.0
      %2308 = vmatpush1.msra.mxu0 0.0
      %2309 = vmatprep.subr.mxu0 0.0
      %2310 = vmatpush1.msra.mxu0 0.0
      %2311 = vmatprep.subr.mxu0 0.0
      %2312 = vmatpush1.msra.mxu0 0.0
      %2313 = vmatprep.subr.mxu0 0.0
      %2314 = vmatpush1.msra.mxu0 %v2285
      %2315 = vmatprep.subr.mxu0 0.0
      %2316 = vmatpush1.msra.mxu0 %v2284
      %2317 = vmatprep.subr.mxu0 0.0
      %2318 = vmatpush1.msra.mxu0 %v2283
      %2319 = vmatprep.subr.mxu0 0.0
      %2320 = vmatpush1.msra.mxu0 %v2282
      %2321 = vmatprep.subr.mxu0 0.0
      %2322 = vmatpush2.msra.mxu0 0.0
      %2323 = vmatprep.subr.mxu0 0.0
      %2324 = vmatpush2.msra.mxu0 0.0
      %2325 = vmatprep.subr.mxu0 0.0
      %2326 = vmatpush2.msra.mxu0 0.0
      %2327 = vmatprep.subr.mxu0 0.0
      %2328 = vmatpush2.msra.mxu0 0.0
      %2329 = vmatprep.subr.mxu0 0.0
      %2330 = vmatpush2.msra.mxu0 0.0
      %2331 = vmatprep.subr.mxu0 0.0
      %2332 = vmatpush2.msra.mxu0 0.0
      %2333 = vmatprep.subr.mxu0 0.0
      %2334 = vmatpush2.msra.mxu0 0.0
      %2335 = vmatprep.subr.mxu0 0.0
      %2336 = vmatpush2.msra.mxu0 0.0
      %2337 = vmatprep.subr.mxu0 0.0
      %2338 = vmatpush2.msra.mxu0 0.0
      %2339 = vmatprep.subr.mxu0 0.0
      %2340 = vmatpush2.msra.mxu0 0.0
      %2341 = vmatprep.subr.mxu0 0.0
      %2342 = vmatpush2.msra.mxu0 0.0
      %2343 = vmatprep.subr.mxu0 0.0
      %2344 = vmatpush2.msra.mxu0 0.0
      %2345 = vmatprep.subr.mxu0 0.0
      %2346 = vmatpush2.msra.mxu0 0.0
      %2347 = vmatprep.subr.mxu0 0.0
      %2348 = vmatpush2.msra.mxu0 0.0
      %2349 = vmatprep.subr.mxu0 0.0
      %2350 = vmatpush2.msra.mxu0 0.0
      %2351 = vmatprep.subr.mxu0 0.0
      %2352 = vmatpush2.msra.mxu0 0.0
      %2353 = vmatprep.mubr.f32.mxu0 0.0
      %2354 = vmatmul.mubr.f32.gmra.mxu0 %v2287
      %v2355 = vpop.f32.mrf.mxu0
      %v2356 = vadd.f32 0.0, %v2355
      %v2357 = vpop.f32.mrf.mxu0
      %2358 = vdwg.mxu0
      %2360 = vset.pattern.permute.xlu0 0
      %2361 = vperm.xlu0 %2360, %v2356
      %v2362 = vpop.permute.xlu0 %2361
      %v2364 = vmul.f32 %v2362, %v474
      %2365 = vrot.lane.b32.xlu0 %v2278, 96
      %v2366 = vpop.permute.xlu0 %2365
      %v2367 = vsel %vm486, %v2366, 0
      %2369 = vmatprep.subr.mxu0 0.0
      %2370 = vmatpush1.xpose.msra.mxu0 0.0
      %2371 = vmatprep.subr.mxu0 0.0
      %2372 = vmatpush1.xpose.msra.mxu0 0.0
      %2373 = vmatprep.subr.mxu0 0.0
      %2374 = vmatpush1.xpose.msra.mxu0 0.0
      %2375 = vmatprep.subr.mxu0 0.0
      %2376 = vmatpush1.xpose.msra.mxu0 0.0
      %2377 = vmatprep.subr.mxu0 0.0
      %2378 = vmatpush1.xpose.msra.mxu0 0.0
      %2379 = vmatprep.subr.mxu0 0.0
      %2380 = vmatpush1.xpose.msra.mxu0 0.0
      %2381 = vmatprep.subr.mxu0 0.0
      %2382 = vmatpush1.xpose.msra.mxu0 0.0
      %2383 = vmatprep.subr.mxu0 0.0
      %2384 = vmatpush1.xpose.msra.mxu0 0.0
      %2385 = vmatprep.subr.mxu0 0.0
      %2386 = vmatpush1.xpose.msra.mxu0 0.0
      %2387 = vmatprep.subr.mxu0 0.0
      %2388 = vmatpush1.xpose.msra.mxu0 0.0
      %2389 = vmatprep.subr.mxu0 0.0
      %2390 = vmatpush1.xpose.msra.mxu0 0.0
      %2391 = vmatprep.subr.mxu0 0.0
      %2392 = vmatpush1.xpose.msra.mxu0 0.0
      %2393 = vmatprep.subr.mxu0 0.0
      %2394 = vmatpush1.xpose.msra.mxu0 0.0
      %2395 = vmatprep.subr.mxu0 0.0
      %2396 = vmatpush1.xpose.msra.mxu0 0.0
      %2397 = vmatprep.subr.mxu0 0.0
      %2398 = vmatpush1.xpose.msra.mxu0 0.0
      %2399 = vmatprep.subr.mxu0 0.0
      %2400 = vmatpush1.xpose.msra.mxu0 %v2367
      %2401 = vmatprep.subr.mxu0 0.0
      %2402 = vmatpush2.xpose.msra.mxu0 0.0
      %2403 = vmatprep.subr.mxu0 0.0
      %2404 = vmatpush2.xpose.msra.mxu0 0.0
      %2405 = vmatprep.subr.mxu0 0.0
      %2406 = vmatpush2.xpose.msra.mxu0 0.0
      %2407 = vmatprep.subr.mxu0 0.0
      %2408 = vmatpush2.xpose.msra.mxu0 0.0
      %2409 = vmatprep.subr.mxu0 0.0
      %2410 = vmatpush2.xpose.msra.mxu0 0.0
      %2411 = vmatprep.subr.mxu0 0.0
      %2412 = vmatpush2.xpose.msra.mxu0 0.0
      %2413 = vmatprep.subr.mxu0 0.0
      %2414 = vmatpush2.xpose.msra.mxu0 0.0
      %2415 = vmatprep.subr.mxu0 0.0
      %2416 = vmatpush2.xpose.msra.mxu0 0.0
      %2417 = vmatprep.subr.mxu0 0.0
      %2418 = vmatpush2.xpose.msra.mxu0 0.0
      %2419 = vmatprep.subr.mxu0 0.0
      %2420 = vmatpush2.xpose.msra.mxu0 0.0
      %2421 = vmatprep.subr.mxu0 0.0
      %2422 = vmatpush2.xpose.msra.mxu0 0.0
      %2423 = vmatprep.subr.mxu0 0.0
      %2424 = vmatpush2.xpose.msra.mxu0 0.0
      %2425 = vmatprep.subr.mxu0 0.0
      %2426 = vmatpush2.xpose.msra.mxu0 0.0
      %2427 = vmatprep.subr.mxu0 0.0
      %2428 = vmatpush2.xpose.msra.mxu0 0.0
      %2429 = vmatprep.subr.mxu0 0.0
      %2430 = vmatpush2.xpose.msra.mxu0 0.0
      %2431 = vmatprep.subr.mxu0 0.0
      %2432 = vmatpush2.xpose.msra.mxu0 0.0
      %2433 = vmatprep.mubr.f32.mxu0 0.0
      %2434 = vmatmul.mubr.f32.gmra.mxu0 %v2287
      %v2435 = vpop.f32.mrf.mxu0
      %v2436 = vadd.f32 %v2364, %v2435
      %v2437 = vpop.f32.mrf.mxu0
      %2438 = vdwg.mxu0
      %2439 = vset.pattern.permute.xlu0 1
      %2440 = vperm.xlu0 %2439, %v2356
      %v2441 = vpop.permute.xlu0 %2440
      %v2443 = vmul.f32 %v2441, %v475
      %v2444 = vadd.f32 %v2436, %v2443
      %2445 = vset.pattern.permute.xlu0 2
      %2446 = vperm.xlu0 %2445, %v2356
      %v2447 = vpop.permute.xlu0 %2446
      %v2449 = vmul.f32 %v2447, %v476
      %v2450 = vadd.f32 %v2444, %v2449
      %2451 = vset.pattern.permute.xlu0 3
      %2452 = vperm.xlu0 %2451, %v2356
      %v2453 = vpop.permute.xlu0 %2452
      %v2455 = vmul.f32 %v2453, %v477
      %v2456 = vadd.f32 %v2450, %v2455
      %2457 = vset.pattern.permute.xlu0 4
      %2458 = vperm.xlu0 %2457, %v2356
      %v2459 = vpop.permute.xlu0 %2458
      %v2461 = vmul.f32 %v2459, %v478
      %v2462 = vadd.f32 %v2456, %v2461
      %v2463 = vmul.f32 %v2462, 0.17677669
      %v2464 = vadd.f32 %v2463, %v481
      %v2465 = vsel %vm743, %v2464, -inf
      %2466 = vmax.xlane.f32.xlu0 %v2465
      %v2467 = vpop.xlane.xlu0 %2466
      %v2468 = vsub.f32 %v2464, %v2467
      %v2469 = vmul.f32 %v2468, 1.442695
      %v2470 = vpow.pop %v2469
      %v2471 = vmul.f32 %v2470, %v479
      %v2472 = vsel %vm743, %v2471, 0.0
      %2473 = vadd.xlane.f32.xlu0 %v2472
      %v2474 = vpop.xlane.xlu0 %2473
      %v2475 = vadd.f32 %v2474, 1e-12
      %v2476 = vrcp.pop %v2475
      %v2477 = vmul.f32 %v2471, %v2476
      %s2478 = scalar_lea.vmem %s5, 32
      %v2479 = vld [vmem:[%s2478] sm:$0x1f]
      %v2480 = vmul.f32 %v2477, %v474
      %v2481 = vsel %vm743, %v2480, 0.0
      %2482 = vadd.xlane.f32.xlu0 %v2481
      %v2483 = vpop.xlane.xlu0 %2482
      %v2484 = vlaneseq
      %v2485 = vshrl.u32 %v2484, 7
      %v2486 = vsub.s32 0, %v2485
      %v2487 = vrot.slane %v2479, %v2486
      %v2488 = vmul.f32 %v2483, %v2487
      %2489 = vrot.lane.b32.xlu0 %v2278, 64
      %v2490 = vpop.permute.xlu0 %2489
      %v2493 = vsel %vm743, %v2477, 0
      %2495 = vmatprep.subr.mxu0 0.0
      %2496 = vmatpush1.msra.mxu0 0.0
      %2497 = vmatprep.subr.mxu0 0.0
      %2498 = vmatpush1.msra.mxu0 0.0
      %2499 = vmatprep.subr.mxu0 0.0
      %2500 = vmatpush1.msra.mxu0 0.0
      %2501 = vmatprep.subr.mxu0 0.0
      %2502 = vmatpush1.msra.mxu0 0.0
      %2503 = vmatprep.subr.mxu0 0.0
      %2504 = vmatpush1.msra.mxu0 0.0
      %2505 = vmatprep.subr.mxu0 0.0
      %2506 = vmatpush1.msra.mxu0 0.0
      %2507 = vmatprep.subr.mxu0 0.0
      %2508 = vmatpush1.msra.mxu0 0.0
      %2509 = vmatprep.subr.mxu0 0.0
      %2510 = vmatpush1.msra.mxu0 0.0
      %2511 = vmatprep.subr.mxu0 0.0
      %2512 = vmatpush1.msra.mxu0 0.0
      %2513 = vmatprep.subr.mxu0 0.0
      %2514 = vmatpush1.msra.mxu0 0.0
      %2515 = vmatprep.subr.mxu0 0.0
      %2516 = vmatpush1.msra.mxu0 0.0
      %2517 = vmatprep.subr.mxu0 0.0
      %2518 = vmatpush1.msra.mxu0 0.0
      %2519 = vmatprep.subr.mxu0 0.0
      %2520 = vmatpush1.msra.mxu0 0.0
      %2521 = vmatprep.subr.mxu0 0.0
      %2522 = vmatpush1.msra.mxu0 0.0
      %2523 = vmatprep.subr.mxu0 0.0
      %2524 = vmatpush1.msra.mxu0 0.0
      %2525 = vmatprep.subr.mxu0 0.0
      %2526 = vmatpush1.msra.mxu0 %v2490
      %2527 = vmatprep.subr.mxu0 0.0
      %2528 = vmatpush2.msra.mxu0 0.0
      %2529 = vmatprep.subr.mxu0 0.0
      %2530 = vmatpush2.msra.mxu0 0.0
      %2531 = vmatprep.subr.mxu0 0.0
      %2532 = vmatpush2.msra.mxu0 0.0
      %2533 = vmatprep.subr.mxu0 0.0
      %2534 = vmatpush2.msra.mxu0 0.0
      %2535 = vmatprep.subr.mxu0 0.0
      %2536 = vmatpush2.msra.mxu0 0.0
      %2537 = vmatprep.subr.mxu0 0.0
      %2538 = vmatpush2.msra.mxu0 0.0
      %2539 = vmatprep.subr.mxu0 0.0
      %2540 = vmatpush2.msra.mxu0 0.0
      %2541 = vmatprep.subr.mxu0 0.0
      %2542 = vmatpush2.msra.mxu0 0.0
      %2543 = vmatprep.subr.mxu0 0.0
      %2544 = vmatpush2.msra.mxu0 0.0
      %2545 = vmatprep.subr.mxu0 0.0
      %2546 = vmatpush2.msra.mxu0 0.0
      %2547 = vmatprep.subr.mxu0 0.0
      %2548 = vmatpush2.msra.mxu0 0.0
      %2549 = vmatprep.subr.mxu0 0.0
      %2550 = vmatpush2.msra.mxu0 0.0
      %2551 = vmatprep.subr.mxu0 0.0
      %2552 = vmatpush2.msra.mxu0 0.0
      %2553 = vmatprep.subr.mxu0 0.0
      %2554 = vmatpush2.msra.mxu0 0.0
      %2555 = vmatprep.subr.mxu0 0.0
      %2556 = vmatpush2.msra.mxu0 0.0
      %2557 = vmatprep.subr.mxu0 0.0
      %2558 = vmatpush2.msra.mxu0 0.0
      %2559 = vmatprep.mubr.f32.mxu0 0.0
      %2560 = vmatmul.mubr.f32.gmra.mxu0 %v2493
      %v2561 = vpop.f32.mrf.mxu0
      %v2562 = vadd.f32 %v2488, %v2561
      %v2563 = vpop.f32.mrf.mxu0
      %2564 = vdwg.mxu0
      %v2565 = vmul.f32 %v2477, %v475
      %v2566 = vsel %vm743, %v2565, 0.0
      %2567 = vadd.xlane.f32.xlu0 %v2566
      %v2568 = vpop.xlane.xlu0 %2567
      %v2569 = vlaneseq
      %v2570 = vshrl.u32 %v2569, 7
      %v2571 = vsub.s32 1, %v2570
      %v2572 = vrot.slane %v2479, %v2571
      %v2573 = vmul.f32 %v2568, %v2572
      %v2574 = vadd.f32 %v2562, %v2573
      %v2575 = vmul.f32 %v2477, %v476
      %v2576 = vsel %vm743, %v2575, 0.0
      %2577 = vadd.xlane.f32.xlu0 %v2576
      %v2578 = vpop.xlane.xlu0 %2577
      %v2579 = vlaneseq
      %v2580 = vshrl.u32 %v2579, 7
      %v2581 = vsub.s32 2, %v2580
      %v2582 = vrot.slane %v2479, %v2581
      %v2583 = vmul.f32 %v2578, %v2582
      %v2584 = vadd.f32 %v2574, %v2583
      %v2585 = vmul.f32 %v2477, %v477
      %v2586 = vsel %vm743, %v2585, 0.0
      %2587 = vadd.xlane.f32.xlu0 %v2586
      %v2588 = vpop.xlane.xlu0 %2587
      %v2589 = vlaneseq
      %v2590 = vshrl.u32 %v2589, 7
      %v2591 = vsub.s32 3, %v2590
      %v2592 = vrot.slane %v2479, %v2591
      %v2593 = vmul.f32 %v2588, %v2592
      %v2594 = vadd.f32 %v2584, %v2593
      %v2595 = vmul.f32 %v2477, %v478
      %v2596 = vsel %vm743, %v2595, 0.0
      %2597 = vadd.xlane.f32.xlu0 %v2596
      %v2598 = vpop.xlane.xlu0 %2597
      %v2599 = vlaneseq
      %v2600 = vshrl.u32 %v2599, 7
      %v2601 = vsub.s32 4, %v2600
      %v2602 = vrot.slane %v2479, %v2601
      %v2603 = vmul.f32 %v2598, %v2602
      %v2604 = vadd.f32 %v2594, %v2603
      %2605 = vrot.lane.b32.xlu0 %v2278, 32
      %v2606 = vpop.permute.xlu0 %2605
      %v2608 = vadd.f32 %v2604, %v2606
      %vm2609 = vcmp.gt.f32.partialorder %v2608, 0.0
      %vm2610 = vcmp.lt.f32.partialorder %v2608, 0.0
      %v2611 = vsel %vm2610, -1.0, 0.0
      %v2612 = vsel %vm2609, 1.0, %v2611
      %v2613 = vand.u32 2147483647, %v2608
      %s2614 = scalar_lea.vmem %s6, 4
      %v2615 = vld [vmem:[%s2614] sm:$0x1]
      %v2617 = vlaneseq
      %v2618 = vshrl.u32 %v2617, 7
      %v2619 = vsub.s32 0, %v2618
      %v2620 = vrot.slane %v2615, %v2619
      %v2622 = vmul.f32 %v2613, %v2620
      %s2623 = scalar_lea.vmem %s7, 4
      %v2624 = vld [vmem:[%s2623] sm:$0x1]
      %v2626 = vlaneseq
      %v2627 = vshrl.u32 %v2626, 7
      %v2628 = vsub.s32 0, %v2627
      %v2629 = vrot.slane %v2624, %v2628
      %v2631 = vadd.f32 %v2622, %v2629
      %v2632 = vmax.f32 %v2631, 0.0
      %v2633 = vmul.f32 %v2612, %v2632
      %s2634 = scalar_lea.vmem %s3, 160
      %v2635 = vld [vmem:[%s2634] sm:$0xff]
      %v2636 = vld [vmem:[%s2634 + $0x8] sm:$0xff]
      %v2637 = vld [vmem:[%s2634 + $0x10] sm:$0xff]
      %v2638 = vld [vmem:[%s2634 + $0x18] sm:$0xff]
      %v2640 = vsel %vm486, %v2633, 0
      %2642 = vmatprep.subr.mxu0 0.0
      %2643 = vmatpush1.msra.mxu0 0.0
      %2644 = vmatprep.subr.mxu0 0.0
      %2645 = vmatpush1.msra.mxu0 0.0
      %2646 = vmatprep.subr.mxu0 0.0
      %2647 = vmatpush1.msra.mxu0 0.0
      %2648 = vmatprep.subr.mxu0 0.0
      %2649 = vmatpush1.msra.mxu0 0.0
      %2650 = vmatprep.subr.mxu0 0.0
      %2651 = vmatpush1.msra.mxu0 0.0
      %2652 = vmatprep.subr.mxu0 0.0
      %2653 = vmatpush1.msra.mxu0 0.0
      %2654 = vmatprep.subr.mxu0 0.0
      %2655 = vmatpush1.msra.mxu0 0.0
      %2656 = vmatprep.subr.mxu0 0.0
      %2657 = vmatpush1.msra.mxu0 0.0
      %2658 = vmatprep.subr.mxu0 0.0
      %2659 = vmatpush1.msra.mxu0 0.0
      %2660 = vmatprep.subr.mxu0 0.0
      %2661 = vmatpush1.msra.mxu0 0.0
      %2662 = vmatprep.subr.mxu0 0.0
      %2663 = vmatpush1.msra.mxu0 0.0
      %2664 = vmatprep.subr.mxu0 0.0
      %2665 = vmatpush1.msra.mxu0 0.0
      %2666 = vmatprep.subr.mxu0 0.0
      %2667 = vmatpush1.msra.mxu0 %v2638
      %2668 = vmatprep.subr.mxu0 0.0
      %2669 = vmatpush1.msra.mxu0 %v2637
      %2670 = vmatprep.subr.mxu0 0.0
      %2671 = vmatpush1.msra.mxu0 %v2636
      %2672 = vmatprep.subr.mxu0 0.0
      %2673 = vmatpush1.msra.mxu0 %v2635
      %2674 = vmatprep.subr.mxu0 0.0
      %2675 = vmatpush2.msra.mxu0 0.0
      %2676 = vmatprep.subr.mxu0 0.0
      %2677 = vmatpush2.msra.mxu0 0.0
      %2678 = vmatprep.subr.mxu0 0.0
      %2679 = vmatpush2.msra.mxu0 0.0
      %2680 = vmatprep.subr.mxu0 0.0
      %2681 = vmatpush2.msra.mxu0 0.0
      %2682 = vmatprep.subr.mxu0 0.0
      %2683 = vmatpush2.msra.mxu0 0.0
      %2684 = vmatprep.subr.mxu0 0.0
      %2685 = vmatpush2.msra.mxu0 0.0
      %2686 = vmatprep.subr.mxu0 0.0
      %2687 = vmatpush2.msra.mxu0 0.0
      %2688 = vmatprep.subr.mxu0 0.0
      %2689 = vmatpush2.msra.mxu0 0.0
      %2690 = vmatprep.subr.mxu0 0.0
      %2691 = vmatpush2.msra.mxu0 0.0
      %2692 = vmatprep.subr.mxu0 0.0
      %2693 = vmatpush2.msra.mxu0 0.0
      %2694 = vmatprep.subr.mxu0 0.0
      %2695 = vmatpush2.msra.mxu0 0.0
      %2696 = vmatprep.subr.mxu0 0.0
      %2697 = vmatpush2.msra.mxu0 0.0
      %2698 = vmatprep.subr.mxu0 0.0
      %2699 = vmatpush2.msra.mxu0 0.0
      %2700 = vmatprep.subr.mxu0 0.0
      %2701 = vmatpush2.msra.mxu0 0.0
      %2702 = vmatprep.subr.mxu0 0.0
      %2703 = vmatpush2.msra.mxu0 0.0
      %2704 = vmatprep.subr.mxu0 0.0
      %2705 = vmatpush2.msra.mxu0 0.0
      %2706 = vmatprep.mubr.f32.mxu0 0.0
      %2707 = vmatmul.mubr.f32.gmra.mxu0 %v2640
      %v2708 = vpop.f32.mrf.mxu0
      %v2709 = vadd.f32 0.0, %v2708
      %v2710 = vpop.f32.mrf.mxu0
      %2711 = vdwg.mxu0
      %s2712 = scalar_lea.vmem %s4, 160
      %v2713 = vld [vmem:[%s2712] sm:$0xff]
      %v2714 = vld [vmem:[%s2712 + $0x8] sm:$0xff]
      %v2715 = vld [vmem:[%s2712 + $0x10] sm:$0xff]
      %v2716 = vld [vmem:[%s2712 + $0x18] sm:$0xff]
      %v2718 = vsel %vm486, %v2709, 0
      %2720 = vmatprep.subr.mxu0 0.0
      %2721 = vmatpush1.msra.mxu0 0.0
      %2722 = vmatprep.subr.mxu0 0.0
      %2723 = vmatpush1.msra.mxu0 0.0
      %2724 = vmatprep.subr.mxu0 0.0
      %2725 = vmatpush1.msra.mxu0 0.0
      %2726 = vmatprep.subr.mxu0 0.0
      %2727 = vmatpush1.msra.mxu0 0.0
      %2728 = vmatprep.subr.mxu0 0.0
      %2729 = vmatpush1.msra.mxu0 0.0
      %2730 = vmatprep.subr.mxu0 0.0
      %2731 = vmatpush1.msra.mxu0 0.0
      %2732 = vmatprep.subr.mxu0 0.0
      %2733 = vmatpush1.msra.mxu0 0.0
      %2734 = vmatprep.subr.mxu0 0.0
      %2735 = vmatpush1.msra.mxu0 0.0
      %2736 = vmatprep.subr.mxu0 0.0
      %2737 = vmatpush1.msra.mxu0 0.0
      %2738 = vmatprep.subr.mxu0 0.0
      %2739 = vmatpush1.msra.mxu0 0.0
      %2740 = vmatprep.subr.mxu0 0.0
      %2741 = vmatpush1.msra.mxu0 0.0
      %2742 = vmatprep.subr.mxu0 0.0
      %2743 = vmatpush1.msra.mxu0 0.0
      %2744 = vmatprep.subr.mxu0 0.0
      %2745 = vmatpush1.msra.mxu0 %v2716
      %2746 = vmatprep.subr.mxu0 0.0
      %2747 = vmatpush1.msra.mxu0 %v2715
      %2748 = vmatprep.subr.mxu0 0.0
      %2749 = vmatpush1.msra.mxu0 %v2714
      %2750 = vmatprep.subr.mxu0 0.0
      %2751 = vmatpush1.msra.mxu0 %v2713
      %2752 = vmatprep.subr.mxu0 0.0
      %2753 = vmatpush2.msra.mxu0 0.0
      %2754 = vmatprep.subr.mxu0 0.0
      %2755 = vmatpush2.msra.mxu0 0.0
      %2756 = vmatprep.subr.mxu0 0.0
      %2757 = vmatpush2.msra.mxu0 0.0
      %2758 = vmatprep.subr.mxu0 0.0
      %2759 = vmatpush2.msra.mxu0 0.0
      %2760 = vmatprep.subr.mxu0 0.0
      %2761 = vmatpush2.msra.mxu0 0.0
      %2762 = vmatprep.subr.mxu0 0.0
      %2763 = vmatpush2.msra.mxu0 0.0
      %2764 = vmatprep.subr.mxu0 0.0
      %2765 = vmatpush2.msra.mxu0 0.0
      %2766 = vmatprep.subr.mxu0 0.0
      %2767 = vmatpush2.msra.mxu0 0.0
      %2768 = vmatprep.subr.mxu0 0.0
      %2769 = vmatpush2.msra.mxu0 0.0
      %2770 = vmatprep.subr.mxu0 0.0
      %2771 = vmatpush2.msra.mxu0 0.0
      %2772 = vmatprep.subr.mxu0 0.0
      %2773 = vmatpush2.msra.mxu0 0.0
      %2774 = vmatprep.subr.mxu0 0.0
      %2775 = vmatpush2.msra.mxu0 0.0
      %2776 = vmatprep.subr.mxu0 0.0
      %2777 = vmatpush2.msra.mxu0 0.0
      %2778 = vmatprep.subr.mxu0 0.0
      %2779 = vmatpush2.msra.mxu0 0.0
      %2780 = vmatprep.subr.mxu0 0.0
      %2781 = vmatpush2.msra.mxu0 0.0
      %2782 = vmatprep.subr.mxu0 0.0
      %2783 = vmatpush2.msra.mxu0 0.0
      %2784 = vmatprep.mubr.f32.mxu0 0.0
      %2785 = vmatmul.mubr.f32.gmra.mxu0 %v2718
      %v2786 = vpop.f32.mrf.mxu0
      %v2787 = vadd.f32 0.0, %v2786
      %v2788 = vpop.f32.mrf.mxu0
      %2789 = vdwg.mxu0
      %2791 = vset.pattern.permute.xlu0 0
      %2792 = vperm.xlu0 %2791, %v2787
      %v2793 = vpop.permute.xlu0 %2792
      %v2795 = vmul.f32 %v2793, %v474
      %2796 = vrot.lane.b32.xlu0 %v2709, 96
      %v2797 = vpop.permute.xlu0 %2796
      %v2798 = vsel %vm486, %v2797, 0
      %2800 = vmatprep.subr.mxu0 0.0
      %2801 = vmatpush1.xpose.msra.mxu0 0.0
      %2802 = vmatprep.subr.mxu0 0.0
      %2803 = vmatpush1.xpose.msra.mxu0 0.0
      %2804 = vmatprep.subr.mxu0 0.0
      %2805 = vmatpush1.xpose.msra.mxu0 0.0
      %2806 = vmatprep.subr.mxu0 0.0
      %2807 = vmatpush1.xpose.msra.mxu0 0.0
      %2808 = vmatprep.subr.mxu0 0.0
      %2809 = vmatpush1.xpose.msra.mxu0 0.0
      %2810 = vmatprep.subr.mxu0 0.0
      %2811 = vmatpush1.xpose.msra.mxu0 0.0
      %2812 = vmatprep.subr.mxu0 0.0
      %2813 = vmatpush1.xpose.msra.mxu0 0.0
      %2814 = vmatprep.subr.mxu0 0.0
      %2815 = vmatpush1.xpose.msra.mxu0 0.0
      %2816 = vmatprep.subr.mxu0 0.0
      %2817 = vmatpush1.xpose.msra.mxu0 0.0
      %2818 = vmatprep.subr.mxu0 0.0
      %2819 = vmatpush1.xpose.msra.mxu0 0.0
      %2820 = vmatprep.subr.mxu0 0.0
      %2821 = vmatpush1.xpose.msra.mxu0 0.0
      %2822 = vmatprep.subr.mxu0 0.0
      %2823 = vmatpush1.xpose.msra.mxu0 0.0
      %2824 = vmatprep.subr.mxu0 0.0
      %2825 = vmatpush1.xpose.msra.mxu0 0.0
      %2826 = vmatprep.subr.mxu0 0.0
      %2827 = vmatpush1.xpose.msra.mxu0 0.0
      %2828 = vmatprep.subr.mxu0 0.0
      %2829 = vmatpush1.xpose.msra.mxu0 0.0
      %2830 = vmatprep.subr.mxu0 0.0
      %2831 = vmatpush1.xpose.msra.mxu0 %v2798
      %2832 = vmatprep.subr.mxu0 0.0
      %2833 = vmatpush2.xpose.msra.mxu0 0.0
      %2834 = vmatprep.subr.mxu0 0.0
      %2835 = vmatpush2.xpose.msra.mxu0 0.0
      %2836 = vmatprep.subr.mxu0 0.0
      %2837 = vmatpush2.xpose.msra.mxu0 0.0
      %2838 = vmatprep.subr.mxu0 0.0
      %2839 = vmatpush2.xpose.msra.mxu0 0.0
      %2840 = vmatprep.subr.mxu0 0.0
      %2841 = vmatpush2.xpose.msra.mxu0 0.0
      %2842 = vmatprep.subr.mxu0 0.0
      %2843 = vmatpush2.xpose.msra.mxu0 0.0
      %2844 = vmatprep.subr.mxu0 0.0
      %2845 = vmatpush2.xpose.msra.mxu0 0.0
      %2846 = vmatprep.subr.mxu0 0.0
      %2847 = vmatpush2.xpose.msra.mxu0 0.0
      %2848 = vmatprep.subr.mxu0 0.0
      %2849 = vmatpush2.xpose.msra.mxu0 0.0
      %2850 = vmatprep.subr.mxu0 0.0
      %2851 = vmatpush2.xpose.msra.mxu0 0.0
      %2852 = vmatprep.subr.mxu0 0.0
      %2853 = vmatpush2.xpose.msra.mxu0 0.0
      %2854 = vmatprep.subr.mxu0 0.0
      %2855 = vmatpush2.xpose.msra.mxu0 0.0
      %2856 = vmatprep.subr.mxu0 0.0
      %2857 = vmatpush2.xpose.msra.mxu0 0.0
      %2858 = vmatprep.subr.mxu0 0.0
      %2859 = vmatpush2.xpose.msra.mxu0 0.0
      %2860 = vmatprep.subr.mxu0 0.0
      %2861 = vmatpush2.xpose.msra.mxu0 0.0
      %2862 = vmatprep.subr.mxu0 0.0
      %2863 = vmatpush2.xpose.msra.mxu0 0.0
      %2864 = vmatprep.mubr.f32.mxu0 0.0
      %2865 = vmatmul.mubr.f32.gmra.mxu0 %v2718
      %v2866 = vpop.f32.mrf.mxu0
      %v2867 = vadd.f32 %v2795, %v2866
      %v2868 = vpop.f32.mrf.mxu0
      %2869 = vdwg.mxu0
      %2870 = vset.pattern.permute.xlu0 1
      %2871 = vperm.xlu0 %2870, %v2787
      %v2872 = vpop.permute.xlu0 %2871
      %v2874 = vmul.f32 %v2872, %v475
      %v2875 = vadd.f32 %v2867, %v2874
      %2876 = vset.pattern.permute.xlu0 2
      %2877 = vperm.xlu0 %2876, %v2787
      %v2878 = vpop.permute.xlu0 %2877
      %v2880 = vmul.f32 %v2878, %v476
      %v2881 = vadd.f32 %v2875, %v2880
      %2882 = vset.pattern.permute.xlu0 3
      %2883 = vperm.xlu0 %2882, %v2787
      %v2884 = vpop.permute.xlu0 %2883
      %v2886 = vmul.f32 %v2884, %v477
      %v2887 = vadd.f32 %v2881, %v2886
      %2888 = vset.pattern.permute.xlu0 4
      %2889 = vperm.xlu0 %2888, %v2787
      %v2890 = vpop.permute.xlu0 %2889
      %v2892 = vmul.f32 %v2890, %v478
      %v2893 = vadd.f32 %v2887, %v2892
      %v2894 = vmul.f32 %v2893, 0.17677669
      %v2895 = vadd.f32 %v2894, %v481
      %v2896 = vsel %vm743, %v2895, -inf
      %2897 = vmax.xlane.f32.xlu0 %v2896
      %v2898 = vpop.xlane.xlu0 %2897
      %v2899 = vsub.f32 %v2895, %v2898
      %v2900 = vmul.f32 %v2899, 1.442695
      %v2901 = vpow.pop %v2900
      %v2902 = vmul.f32 %v2901, %v479
      %v2903 = vsel %vm743, %v2902, 0.0
      %2904 = vadd.xlane.f32.xlu0 %v2903
      %v2905 = vpop.xlane.xlu0 %2904
      %v2906 = vadd.f32 %v2905, 1e-12
      %v2907 = vrcp.pop %v2906
      %v2908 = vmul.f32 %v2902, %v2907
      %s2909 = scalar_lea.vmem %s5, 40
      %v2910 = vld [vmem:[%s2909] sm:$0x1f]
      %v2911 = vmul.f32 %v2908, %v474
      %v2912 = vsel %vm743, %v2911, 0.0
      %2913 = vadd.xlane.f32.xlu0 %v2912
      %v2914 = vpop.xlane.xlu0 %2913
      %v2915 = vlaneseq
      %v2916 = vshrl.u32 %v2915, 7
      %v2917 = vsub.s32 0, %v2916
      %v2918 = vrot.slane %v2910, %v2917
      %v2919 = vmul.f32 %v2914, %v2918
      %2920 = vrot.lane.b32.xlu0 %v2709, 64
      %v2921 = vpop.permute.xlu0 %2920
      %v2924 = vsel %vm743, %v2908, 0
      %2926 = vmatprep.subr.mxu0 0.0
      %2927 = vmatpush1.msra.mxu0 0.0
      %2928 = vmatprep.subr.mxu0 0.0
      %2929 = vmatpush1.msra.mxu0 0.0
      %2930 = vmatprep.subr.mxu0 0.0
      %2931 = vmatpush1.msra.mxu0 0.0
      %2932 = vmatprep.subr.mxu0 0.0
      %2933 = vmatpush1.msra.mxu0 0.0
      %2934 = vmatprep.subr.mxu0 0.0
      %2935 = vmatpush1.msra.mxu0 0.0
      %2936 = vmatprep.subr.mxu0 0.0
      %2937 = vmatpush1.msra.mxu0 0.0
      %2938 = vmatprep.subr.mxu0 0.0
      %2939 = vmatpush1.msra.mxu0 0.0
      %2940 = vmatprep.subr.mxu0 0.0
      %2941 = vmatpush1.msra.mxu0 0.0
      %2942 = vmatprep.subr.mxu0 0.0
      %2943 = vmatpush1.msra.mxu0 0.0
      %2944 = vmatprep.subr.mxu0 0.0
      %2945 = vmatpush1.msra.mxu0 0.0
      %2946 = vmatprep.subr.mxu0 0.0
      %2947 = vmatpush1.msra.mxu0 0.0
      %2948 = vmatprep.subr.mxu0 0.0
      %2949 = vmatpush1.msra.mxu0 0.0
      %2950 = vmatprep.subr.mxu0 0.0
      %2951 = vmatpush1.msra.mxu0 0.0
      %2952 = vmatprep.subr.mxu0 0.0
      %2953 = vmatpush1.msra.mxu0 0.0
      %2954 = vmatprep.subr.mxu0 0.0
      %2955 = vmatpush1.msra.mxu0 0.0
      %2956 = vmatprep.subr.mxu0 0.0
      %2957 = vmatpush1.msra.mxu0 %v2921
      %2958 = vmatprep.subr.mxu0 0.0
      %2959 = vmatpush2.msra.mxu0 0.0
      %2960 = vmatprep.subr.mxu0 0.0
      %2961 = vmatpush2.msra.mxu0 0.0
      %2962 = vmatprep.subr.mxu0 0.0
      %2963 = vmatpush2.msra.mxu0 0.0
      %2964 = vmatprep.subr.mxu0 0.0
      %2965 = vmatpush2.msra.mxu0 0.0
      %2966 = vmatprep.subr.mxu0 0.0
      %2967 = vmatpush2.msra.mxu0 0.0
      %2968 = vmatprep.subr.mxu0 0.0
      %2969 = vmatpush2.msra.mxu0 0.0
      %2970 = vmatprep.subr.mxu0 0.0
      %2971 = vmatpush2.msra.mxu0 0.0
      %2972 = vmatprep.subr.mxu0 0.0
      %2973 = vmatpush2.msra.mxu0 0.0
      %2974 = vmatprep.subr.mxu0 0.0
      %2975 = vmatpush2.msra.mxu0 0.0
      %2976 = vmatprep.subr.mxu0 0.0
      %2977 = vmatpush2.msra.mxu0 0.0
      %2978 = vmatprep.subr.mxu0 0.0
      %2979 = vmatpush2.msra.mxu0 0.0
      %2980 = vmatprep.subr.mxu0 0.0
      %2981 = vmatpush2.msra.mxu0 0.0
      %2982 = vmatprep.subr.mxu0 0.0
      %2983 = vmatpush2.msra.mxu0 0.0
      %2984 = vmatprep.subr.mxu0 0.0
      %2985 = vmatpush2.msra.mxu0 0.0
      %2986 = vmatprep.subr.mxu0 0.0
      %2987 = vmatpush2.msra.mxu0 0.0
      %2988 = vmatprep.subr.mxu0 0.0
      %2989 = vmatpush2.msra.mxu0 0.0
      %2990 = vmatprep.mubr.f32.mxu0 0.0
      %2991 = vmatmul.mubr.f32.gmra.mxu0 %v2924
      %v2992 = vpop.f32.mrf.mxu0
      %v2993 = vadd.f32 %v2919, %v2992
      %v2994 = vpop.f32.mrf.mxu0
      %2995 = vdwg.mxu0
      %v2996 = vmul.f32 %v2908, %v475
      %v2997 = vsel %vm743, %v2996, 0.0
      %2998 = vadd.xlane.f32.xlu0 %v2997
      %v2999 = vpop.xlane.xlu0 %2998
      %v3000 = vlaneseq
      %v3001 = vshrl.u32 %v3000, 7
      %v3002 = vsub.s32 1, %v3001
      %v3003 = vrot.slane %v2910, %v3002
      %v3004 = vmul.f32 %v2999, %v3003
      %v3005 = vadd.f32 %v2993, %v3004
      %v3006 = vmul.f32 %v2908, %v476
      %v3007 = vsel %vm743, %v3006, 0.0
      %3008 = vadd.xlane.f32.xlu0 %v3007
      %v3009 = vpop.xlane.xlu0 %3008
      %v3010 = vlaneseq
      %v3011 = vshrl.u32 %v3010, 7
      %v3012 = vsub.s32 2, %v3011
      %v3013 = vrot.slane %v2910, %v3012
      %v3014 = vmul.f32 %v3009, %v3013
      %v3015 = vadd.f32 %v3005, %v3014
      %v3016 = vmul.f32 %v2908, %v477
      %v3017 = vsel %vm743, %v3016, 0.0
      %3018 = vadd.xlane.f32.xlu0 %v3017
      %v3019 = vpop.xlane.xlu0 %3018
      %v3020 = vlaneseq
      %v3021 = vshrl.u32 %v3020, 7
      %v3022 = vsub.s32 3, %v3021
      %v3023 = vrot.slane %v2910, %v3022
      %v3024 = vmul.f32 %v3019, %v3023
      %v3025 = vadd.f32 %v3015, %v3024
      %v3026 = vmul.f32 %v2908, %v478
      %v3027 = vsel %vm743, %v3026, 0.0
      %3028 = vadd.xlane.f32.xlu0 %v3027
      %v3029 = vpop.xlane.xlu0 %3028
      %v3030 = vlaneseq
      %v3031 = vshrl.u32 %v3030, 7
      %v3032 = vsub.s32 4, %v3031
      %v3033 = vrot.slane %v2910, %v3032
      %v3034 = vmul.f32 %v3029, %v3033
      %v3035 = vadd.f32 %v3025, %v3034
      %3036 = vrot.lane.b32.xlu0 %v2709, 32
      %v3037 = vpop.permute.xlu0 %3036
      %v3039 = vadd.f32 %v3035, %v3037
      %vm3040 = vcmp.gt.f32.partialorder %v3039, 0.0
      %vm3041 = vcmp.lt.f32.partialorder %v3039, 0.0
      %v3042 = vsel %vm3041, -1.0, 0.0
      %v3043 = vsel %vm3040, 1.0, %v3042
      %v3044 = vand.u32 2147483647, %v3039
      %s3045 = scalar_lea.vmem %s6, 5
      %v3046 = vld [vmem:[%s3045] sm:$0x1]
      %v3048 = vlaneseq
      %v3049 = vshrl.u32 %v3048, 7
      %v3050 = vsub.s32 0, %v3049
      %v3051 = vrot.slane %v3046, %v3050
      %v3053 = vmul.f32 %v3044, %v3051
      %s3054 = scalar_lea.vmem %s7, 5
      %v3055 = vld [vmem:[%s3054] sm:$0x1]
      %v3057 = vlaneseq
      %v3058 = vshrl.u32 %v3057, 7
      %v3059 = vsub.s32 0, %v3058
      %v3060 = vrot.slane %v3055, %v3059
      %v3062 = vadd.f32 %v3053, %v3060
      %v3063 = vmax.f32 %v3062, 0.0
      %v3064 = vmul.f32 %v3043, %v3063
      %s3065 = scalar_lea.vmem %s3, 192
      %v3066 = vld [vmem:[%s3065] sm:$0xff]
      %v3067 = vld [vmem:[%s3065 + $0x8] sm:$0xff]
      %v3068 = vld [vmem:[%s3065 + $0x10] sm:$0xff]
      %v3069 = vld [vmem:[%s3065 + $0x18] sm:$0xff]
      %v3071 = vsel %vm486, %v3064, 0
      %3073 = vmatprep.subr.mxu0 0.0
      %3074 = vmatpush1.msra.mxu0 0.0
      %3075 = vmatprep.subr.mxu0 0.0
      %3076 = vmatpush1.msra.mxu0 0.0
      %3077 = vmatprep.subr.mxu0 0.0
      %3078 = vmatpush1.msra.mxu0 0.0
      %3079 = vmatprep.subr.mxu0 0.0
      %3080 = vmatpush1.msra.mxu0 0.0
      %3081 = vmatprep.subr.mxu0 0.0
      %3082 = vmatpush1.msra.mxu0 0.0
      %3083 = vmatprep.subr.mxu0 0.0
      %3084 = vmatpush1.msra.mxu0 0.0
      %3085 = vmatprep.subr.mxu0 0.0
      %3086 = vmatpush1.msra.mxu0 0.0
      %3087 = vmatprep.subr.mxu0 0.0
      %3088 = vmatpush1.msra.mxu0 0.0
      %3089 = vmatprep.subr.mxu0 0.0
      %3090 = vmatpush1.msra.mxu0 0.0
      %3091 = vmatprep.subr.mxu0 0.0
      %3092 = vmatpush1.msra.mxu0 0.0
      %3093 = vmatprep.subr.mxu0 0.0
      %3094 = vmatpush1.msra.mxu0 0.0
      %3095 = vmatprep.subr.mxu0 0.0
      %3096 = vmatpush1.msra.mxu0 0.0
      %3097 = vmatprep.subr.mxu0 0.0
      %3098 = vmatpush1.msra.mxu0 %v3069
      %3099 = vmatprep.subr.mxu0 0.0
      %3100 = vmatpush1.msra.mxu0 %v3068
      %3101 = vmatprep.subr.mxu0 0.0
      %3102 = vmatpush1.msra.mxu0 %v3067
      %3103 = vmatprep.subr.mxu0 0.0
      %3104 = vmatpush1.msra.mxu0 %v3066
      %3105 = vmatprep.subr.mxu0 0.0
      %3106 = vmatpush2.msra.mxu0 0.0
      %3107 = vmatprep.subr.mxu0 0.0
      %3108 = vmatpush2.msra.mxu0 0.0
      %3109 = vmatprep.subr.mxu0 0.0
      %3110 = vmatpush2.msra.mxu0 0.0
      %3111 = vmatprep.subr.mxu0 0.0
      %3112 = vmatpush2.msra.mxu0 0.0
      %3113 = vmatprep.subr.mxu0 0.0
      %3114 = vmatpush2.msra.mxu0 0.0
      %3115 = vmatprep.subr.mxu0 0.0
      %3116 = vmatpush2.msra.mxu0 0.0
      %3117 = vmatprep.subr.mxu0 0.0
      %3118 = vmatpush2.msra.mxu0 0.0
      %3119 = vmatprep.subr.mxu0 0.0
      %3120 = vmatpush2.msra.mxu0 0.0
      %3121 = vmatprep.subr.mxu0 0.0
      %3122 = vmatpush2.msra.mxu0 0.0
      %3123 = vmatprep.subr.mxu0 0.0
      %3124 = vmatpush2.msra.mxu0 0.0
      %3125 = vmatprep.subr.mxu0 0.0
      %3126 = vmatpush2.msra.mxu0 0.0
      %3127 = vmatprep.subr.mxu0 0.0
      %3128 = vmatpush2.msra.mxu0 0.0
      %3129 = vmatprep.subr.mxu0 0.0
      %3130 = vmatpush2.msra.mxu0 0.0
      %3131 = vmatprep.subr.mxu0 0.0
      %3132 = vmatpush2.msra.mxu0 0.0
      %3133 = vmatprep.subr.mxu0 0.0
      %3134 = vmatpush2.msra.mxu0 0.0
      %3135 = vmatprep.subr.mxu0 0.0
      %3136 = vmatpush2.msra.mxu0 0.0
      %3137 = vmatprep.mubr.f32.mxu0 0.0
      %3138 = vmatmul.mubr.f32.gmra.mxu0 %v3071
      %v3139 = vpop.f32.mrf.mxu0
      %v3140 = vadd.f32 0.0, %v3139
      %v3141 = vpop.f32.mrf.mxu0
      %3142 = vdwg.mxu0
      %s3143 = scalar_lea.vmem %s4, 192
      %v3144 = vld [vmem:[%s3143] sm:$0xff]
      %v3145 = vld [vmem:[%s3143 + $0x8] sm:$0xff]
      %v3146 = vld [vmem:[%s3143 + $0x10] sm:$0xff]
      %v3147 = vld [vmem:[%s3143 + $0x18] sm:$0xff]
      %v3149 = vsel %vm486, %v3140, 0
      %3151 = vmatprep.subr.mxu0 0.0
      %3152 = vmatpush1.msra.mxu0 0.0
      %3153 = vmatprep.subr.mxu0 0.0
      %3154 = vmatpush1.msra.mxu0 0.0
      %3155 = vmatprep.subr.mxu0 0.0
      %3156 = vmatpush1.msra.mxu0 0.0
      %3157 = vmatprep.subr.mxu0 0.0
      %3158 = vmatpush1.msra.mxu0 0.0
      %3159 = vmatprep.subr.mxu0 0.0
      %3160 = vmatpush1.msra.mxu0 0.0
      %3161 = vmatprep.subr.mxu0 0.0
      %3162 = vmatpush1.msra.mxu0 0.0
      %3163 = vmatprep.subr.mxu0 0.0
      %3164 = vmatpush1.msra.mxu0 0.0
      %3165 = vmatprep.subr.mxu0 0.0
      %3166 = vmatpush1.msra.mxu0 0.0
      %3167 = vmatprep.subr.mxu0 0.0
      %3168 = vmatpush1.msra.mxu0 0.0
      %3169 = vmatprep.subr.mxu0 0.0
      %3170 = vmatpush1.msra.mxu0 0.0
      %3171 = vmatprep.subr.mxu0 0.0
      %3172 = vmatpush1.msra.mxu0 0.0
      %3173 = vmatprep.subr.mxu0 0.0
      %3174 = vmatpush1.msra.mxu0 0.0
      %3175 = vmatprep.subr.mxu0 0.0
      %3176 = vmatpush1.msra.mxu0 %v3147
      %3177 = vmatprep.subr.mxu0 0.0
      %3178 = vmatpush1.msra.mxu0 %v3146
      %3179 = vmatprep.subr.mxu0 0.0
      %3180 = vmatpush1.msra.mxu0 %v3145
      %3181 = vmatprep.subr.mxu0 0.0
      %3182 = vmatpush1.msra.mxu0 %v3144
      %3183 = vmatprep.subr.mxu0 0.0
      %3184 = vmatpush2.msra.mxu0 0.0
      %3185 = vmatprep.subr.mxu0 0.0
      %3186 = vmatpush2.msra.mxu0 0.0
      %3187 = vmatprep.subr.mxu0 0.0
      %3188 = vmatpush2.msra.mxu0 0.0
      %3189 = vmatprep.subr.mxu0 0.0
      %3190 = vmatpush2.msra.mxu0 0.0
      %3191 = vmatprep.subr.mxu0 0.0
      %3192 = vmatpush2.msra.mxu0 0.0
      %3193 = vmatprep.subr.mxu0 0.0
      %3194 = vmatpush2.msra.mxu0 0.0
      %3195 = vmatprep.subr.mxu0 0.0
      %3196 = vmatpush2.msra.mxu0 0.0
      %3197 = vmatprep.subr.mxu0 0.0
      %3198 = vmatpush2.msra.mxu0 0.0
      %3199 = vmatprep.subr.mxu0 0.0
      %3200 = vmatpush2.msra.mxu0 0.0
      %3201 = vmatprep.subr.mxu0 0.0
      %3202 = vmatpush2.msra.mxu0 0.0
      %3203 = vmatprep.subr.mxu0 0.0
      %3204 = vmatpush2.msra.mxu0 0.0
      %3205 = vmatprep.subr.mxu0 0.0
      %3206 = vmatpush2.msra.mxu0 0.0
      %3207 = vmatprep.subr.mxu0 0.0
      %3208 = vmatpush2.msra.mxu0 0.0
      %3209 = vmatprep.subr.mxu0 0.0
      %3210 = vmatpush2.msra.mxu0 0.0
      %3211 = vmatprep.subr.mxu0 0.0
      %3212 = vmatpush2.msra.mxu0 0.0
      %3213 = vmatprep.subr.mxu0 0.0
      %3214 = vmatpush2.msra.mxu0 0.0
      %3215 = vmatprep.mubr.f32.mxu0 0.0
      %3216 = vmatmul.mubr.f32.gmra.mxu0 %v3149
      %v3217 = vpop.f32.mrf.mxu0
      %v3218 = vadd.f32 0.0, %v3217
      %v3219 = vpop.f32.mrf.mxu0
      %3220 = vdwg.mxu0
      %3222 = vset.pattern.permute.xlu0 0
      %3223 = vperm.xlu0 %3222, %v3218
      %v3224 = vpop.permute.xlu0 %3223
      %v3226 = vmul.f32 %v3224, %v474
      %3227 = vrot.lane.b32.xlu0 %v3140, 96
      %v3228 = vpop.permute.xlu0 %3227
      %v3229 = vsel %vm486, %v3228, 0
      %3231 = vmatprep.subr.mxu0 0.0
      %3232 = vmatpush1.xpose.msra.mxu0 0.0
      %3233 = vmatprep.subr.mxu0 0.0
      %3234 = vmatpush1.xpose.msra.mxu0 0.0
      %3235 = vmatprep.subr.mxu0 0.0
      %3236 = vmatpush1.xpose.msra.mxu0 0.0
      %3237 = vmatprep.subr.mxu0 0.0
      %3238 = vmatpush1.xpose.msra.mxu0 0.0
      %3239 = vmatprep.subr.mxu0 0.0
      %3240 = vmatpush1.xpose.msra.mxu0 0.0
      %3241 = vmatprep.subr.mxu0 0.0
      %3242 = vmatpush1.xpose.msra.mxu0 0.0
      %3243 = vmatprep.subr.mxu0 0.0
      %3244 = vmatpush1.xpose.msra.mxu0 0.0
      %3245 = vmatprep.subr.mxu0 0.0
      %3246 = vmatpush1.xpose.msra.mxu0 0.0
      %3247 = vmatprep.subr.mxu0 0.0
      %3248 = vmatpush1.xpose.msra.mxu0 0.0
      %3249 = vmatprep.subr.mxu0 0.0
      %3250 = vmatpush1.xpose.msra.mxu0 0.0
      %3251 = vmatprep.subr.mxu0 0.0
      %3252 = vmatpush1.xpose.msra.mxu0 0.0
      %3253 = vmatprep.subr.mxu0 0.0
      %3254 = vmatpush1.xpose.msra.mxu0 0.0
      %3255 = vmatprep.subr.mxu0 0.0
      %3256 = vmatpush1.xpose.msra.mxu0 0.0
      %3257 = vmatprep.subr.mxu0 0.0
      %3258 = vmatpush1.xpose.msra.mxu0 0.0
      %3259 = vmatprep.subr.mxu0 0.0
      %3260 = vmatpush1.xpose.msra.mxu0 0.0
      %3261 = vmatprep.subr.mxu0 0.0
      %3262 = vmatpush1.xpose.msra.mxu0 %v3229
      %3263 = vmatprep.subr.mxu0 0.0
      %3264 = vmatpush2.xpose.msra.mxu0 0.0
      %3265 = vmatprep.subr.mxu0 0.0
      %3266 = vmatpush2.xpose.msra.mxu0 0.0
      %3267 = vmatprep.subr.mxu0 0.0
      %3268 = vmatpush2.xpose.msra.mxu0 0.0
      %3269 = vmatprep.subr.mxu0 0.0
      %3270 = vmatpush2.xpose.msra.mxu0 0.0
      %3271 = vmatprep.subr.mxu0 0.0
      %3272 = vmatpush2.xpose.msra.mxu0 0.0
      %3273 = vmatprep.subr.mxu0 0.0
      %3274 = vmatpush2.xpose.msra.mxu0 0.0
      %3275 = vmatprep.subr.mxu0 0.0
      %3276 = vmatpush2.xpose.msra.mxu0 0.0
      %3277 = vmatprep.subr.mxu0 0.0
      %3278 = vmatpush2.xpose.msra.mxu0 0.0
      %3279 = vmatprep.subr.mxu0 0.0
      %3280 = vmatpush2.xpose.msra.mxu0 0.0
      %3281 = vmatprep.subr.mxu0 0.0
      %3282 = vmatpush2.xpose.msra.mxu0 0.0
      %3283 = vmatprep.subr.mxu0 0.0
      %3284 = vmatpush2.xpose.msra.mxu0 0.0
      %3285 = vmatprep.subr.mxu0 0.0
      %3286 = vmatpush2.xpose.msra.mxu0 0.0
      %3287 = vmatprep.subr.mxu0 0.0
      %3288 = vmatpush2.xpose.msra.mxu0 0.0
      %3289 = vmatprep.subr.mxu0 0.0
      %3290 = vmatpush2.xpose.msra.mxu0 0.0
      %3291 = vmatprep.subr.mxu0 0.0
      %3292 = vmatpush2.xpose.msra.mxu0 0.0
      %3293 = vmatprep.subr.mxu0 0.0
      %3294 = vmatpush2.xpose.msra.mxu0 0.0
      %3295 = vmatprep.mubr.f32.mxu0 0.0
      %3296 = vmatmul.mubr.f32.gmra.mxu0 %v3149
      %v3297 = vpop.f32.mrf.mxu0
      %v3298 = vadd.f32 %v3226, %v3297
      %v3299 = vpop.f32.mrf.mxu0
      %3300 = vdwg.mxu0
      %3301 = vset.pattern.permute.xlu0 1
      %3302 = vperm.xlu0 %3301, %v3218
      %v3303 = vpop.permute.xlu0 %3302
      %v3305 = vmul.f32 %v3303, %v475
      %v3306 = vadd.f32 %v3298, %v3305
      %3307 = vset.pattern.permute.xlu0 2
      %3308 = vperm.xlu0 %3307, %v3218
      %v3309 = vpop.permute.xlu0 %3308
      %v3311 = vmul.f32 %v3309, %v476
      %v3312 = vadd.f32 %v3306, %v3311
      %3313 = vset.pattern.permute.xlu0 3
      %3314 = vperm.xlu0 %3313, %v3218
      %v3315 = vpop.permute.xlu0 %3314
      %v3317 = vmul.f32 %v3315, %v477
      %v3318 = vadd.f32 %v3312, %v3317
      %3319 = vset.pattern.permute.xlu0 4
      %3320 = vperm.xlu0 %3319, %v3218
      %v3321 = vpop.permute.xlu0 %3320
      %v3323 = vmul.f32 %v3321, %v478
      %v3324 = vadd.f32 %v3318, %v3323
      %v3325 = vmul.f32 %v3324, 0.17677669
      %v3326 = vadd.f32 %v3325, %v481
      %v3327 = vsel %vm743, %v3326, -inf
      %3328 = vmax.xlane.f32.xlu0 %v3327
      %v3329 = vpop.xlane.xlu0 %3328
      %v3330 = vsub.f32 %v3326, %v3329
      %v3331 = vmul.f32 %v3330, 1.442695
      %v3332 = vpow.pop %v3331
      %v3333 = vmul.f32 %v3332, %v479
      %v3334 = vsel %vm743, %v3333, 0.0
      %3335 = vadd.xlane.f32.xlu0 %v3334
      %v3336 = vpop.xlane.xlu0 %3335
      %v3337 = vadd.f32 %v3336, 1e-12
      %v3338 = vrcp.pop %v3337
      %v3339 = vmul.f32 %v3333, %v3338
      %s3340 = scalar_lea.vmem %s5, 48
      %v3341 = vld [vmem:[%s3340] sm:$0x1f]
      %v3342 = vmul.f32 %v3339, %v474
      %v3343 = vsel %vm743, %v3342, 0.0
      %3344 = vadd.xlane.f32.xlu0 %v3343
      %v3345 = vpop.xlane.xlu0 %3344
      %v3346 = vlaneseq
      %v3347 = vshrl.u32 %v3346, 7
      %v3348 = vsub.s32 0, %v3347
      %v3349 = vrot.slane %v3341, %v3348
      %v3350 = vmul.f32 %v3345, %v3349
      %3351 = vrot.lane.b32.xlu0 %v3140, 64
      %v3352 = vpop.permute.xlu0 %3351
      %v3355 = vsel %vm743, %v3339, 0
      %3357 = vmatprep.subr.mxu0 0.0
      %3358 = vmatpush1.msra.mxu0 0.0
      %3359 = vmatprep.subr.mxu0 0.0
      %3360 = vmatpush1.msra.mxu0 0.0
      %3361 = vmatprep.subr.mxu0 0.0
      %3362 = vmatpush1.msra.mxu0 0.0
      %3363 = vmatprep.subr.mxu0 0.0
      %3364 = vmatpush1.msra.mxu0 0.0
      %3365 = vmatprep.subr.mxu0 0.0
      %3366 = vmatpush1.msra.mxu0 0.0
      %3367 = vmatprep.subr.mxu0 0.0
      %3368 = vmatpush1.msra.mxu0 0.0
      %3369 = vmatprep.subr.mxu0 0.0
      %3370 = vmatpush1.msra.mxu0 0.0
      %3371 = vmatprep.subr.mxu0 0.0
      %3372 = vmatpush1.msra.mxu0 0.0
      %3373 = vmatprep.subr.mxu0 0.0
      %3374 = vmatpush1.msra.mxu0 0.0
      %3375 = vmatprep.subr.mxu0 0.0
      %3376 = vmatpush1.msra.mxu0 0.0
      %3377 = vmatprep.subr.mxu0 0.0
      %3378 = vmatpush1.msra.mxu0 0.0
      %3379 = vmatprep.subr.mxu0 0.0
      %3380 = vmatpush1.msra.mxu0 0.0
      %3381 = vmatprep.subr.mxu0 0.0
      %3382 = vmatpush1.msra.mxu0 0.0
      %3383 = vmatprep.subr.mxu0 0.0
      %3384 = vmatpush1.msra.mxu0 0.0
      %3385 = vmatprep.subr.mxu0 0.0
      %3386 = vmatpush1.msra.mxu0 0.0
      %3387 = vmatprep.subr.mxu0 0.0
      %3388 = vmatpush1.msra.mxu0 %v3352
      %3389 = vmatprep.subr.mxu0 0.0
      %3390 = vmatpush2.msra.mxu0 0.0
      %3391 = vmatprep.subr.mxu0 0.0
      %3392 = vmatpush2.msra.mxu0 0.0
      %3393 = vmatprep.subr.mxu0 0.0
      %3394 = vmatpush2.msra.mxu0 0.0
      %3395 = vmatprep.subr.mxu0 0.0
      %3396 = vmatpush2.msra.mxu0 0.0
      %3397 = vmatprep.subr.mxu0 0.0
      %3398 = vmatpush2.msra.mxu0 0.0
      %3399 = vmatprep.subr.mxu0 0.0
      %3400 = vmatpush2.msra.mxu0 0.0
      %3401 = vmatprep.subr.mxu0 0.0
      %3402 = vmatpush2.msra.mxu0 0.0
      %3403 = vmatprep.subr.mxu0 0.0
      %3404 = vmatpush2.msra.mxu0 0.0
      %3405 = vmatprep.subr.mxu0 0.0
      %3406 = vmatpush2.msra.mxu0 0.0
      %3407 = vmatprep.subr.mxu0 0.0
      %3408 = vmatpush2.msra.mxu0 0.0
      %3409 = vmatprep.subr.mxu0 0.0
      %3410 = vmatpush2.msra.mxu0 0.0
      %3411 = vmatprep.subr.mxu0 0.0
      %3412 = vmatpush2.msra.mxu0 0.0
      %3413 = vmatprep.subr.mxu0 0.0
      %3414 = vmatpush2.msra.mxu0 0.0
      %3415 = vmatprep.subr.mxu0 0.0
      %3416 = vmatpush2.msra.mxu0 0.0
      %3417 = vmatprep.subr.mxu0 0.0
      %3418 = vmatpush2.msra.mxu0 0.0
      %3419 = vmatprep.subr.mxu0 0.0
      %3420 = vmatpush2.msra.mxu0 0.0
      %3421 = vmatprep.mubr.f32.mxu0 0.0
      %3422 = vmatmul.mubr.f32.gmra.mxu0 %v3355
      %v3423 = vpop.f32.mrf.mxu0
      %v3424 = vadd.f32 %v3350, %v3423
      %v3425 = vpop.f32.mrf.mxu0
      %3426 = vdwg.mxu0
      %v3427 = vmul.f32 %v3339, %v475
      %v3428 = vsel %vm743, %v3427, 0.0
      %3429 = vadd.xlane.f32.xlu0 %v3428
      %v3430 = vpop.xlane.xlu0 %3429
      %v3431 = vlaneseq
      %v3432 = vshrl.u32 %v3431, 7
      %v3433 = vsub.s32 1, %v3432
      %v3434 = vrot.slane %v3341, %v3433
      %v3435 = vmul.f32 %v3430, %v3434
      %v3436 = vadd.f32 %v3424, %v3435
      %v3437 = vmul.f32 %v3339, %v476
      %v3438 = vsel %vm743, %v3437, 0.0
      %3439 = vadd.xlane.f32.xlu0 %v3438
      %v3440 = vpop.xlane.xlu0 %3439
      %v3441 = vlaneseq
      %v3442 = vshrl.u32 %v3441, 7
      %v3443 = vsub.s32 2, %v3442
      %v3444 = vrot.slane %v3341, %v3443
      %v3445 = vmul.f32 %v3440, %v3444
      %v3446 = vadd.f32 %v3436, %v3445
      %v3447 = vmul.f32 %v3339, %v477
      %v3448 = vsel %vm743, %v3447, 0.0
      %3449 = vadd.xlane.f32.xlu0 %v3448
      %v3450 = vpop.xlane.xlu0 %3449
      %v3451 = vlaneseq
      %v3452 = vshrl.u32 %v3451, 7
      %v3453 = vsub.s32 3, %v3452
      %v3454 = vrot.slane %v3341, %v3453
      %v3455 = vmul.f32 %v3450, %v3454
      %v3456 = vadd.f32 %v3446, %v3455
      %v3457 = vmul.f32 %v3339, %v478
      %v3458 = vsel %vm743, %v3457, 0.0
      %3459 = vadd.xlane.f32.xlu0 %v3458
      %v3460 = vpop.xlane.xlu0 %3459
      %v3461 = vlaneseq
      %v3462 = vshrl.u32 %v3461, 7
      %v3463 = vsub.s32 4, %v3462
      %v3464 = vrot.slane %v3341, %v3463
      %v3465 = vmul.f32 %v3460, %v3464
      %v3466 = vadd.f32 %v3456, %v3465
      %3467 = vrot.lane.b32.xlu0 %v3140, 32
      %v3468 = vpop.permute.xlu0 %3467
      %v3470 = vadd.f32 %v3466, %v3468
      %vm3471 = vcmp.gt.f32.partialorder %v3470, 0.0
      %vm3472 = vcmp.lt.f32.partialorder %v3470, 0.0
      %v3473 = vsel %vm3472, -1.0, 0.0
      %v3474 = vsel %vm3471, 1.0, %v3473
      %v3475 = vand.u32 2147483647, %v3470
      %s3476 = scalar_lea.vmem %s6, 6
      %v3477 = vld [vmem:[%s3476] sm:$0x1]
      %v3479 = vlaneseq
      %v3480 = vshrl.u32 %v3479, 7
      %v3481 = vsub.s32 0, %v3480
      %v3482 = vrot.slane %v3477, %v3481
      %v3484 = vmul.f32 %v3475, %v3482
      %s3485 = scalar_lea.vmem %s7, 6
      %v3486 = vld [vmem:[%s3485] sm:$0x1]
      %v3488 = vlaneseq
      %v3489 = vshrl.u32 %v3488, 7
      %v3490 = vsub.s32 0, %v3489
      %v3491 = vrot.slane %v3486, %v3490
      %v3493 = vadd.f32 %v3484, %v3491
      %v3494 = vmax.f32 %v3493, 0.0
      %v3495 = vmul.f32 %v3474, %v3494
      %v3496 = vsel %vm743, %v479, 0.0
      %3497 = vadd.xlane.f32.xlu0 %v3496
      %v3498 = vpop.xlane.xlu0 %3497
      %v3500 = vsel %vm743, %v479, 0
      %3502 = vmatprep.subr.mxu0 0.0
      %3503 = vmatpush1.msra.mxu0 0.0
      %3504 = vmatprep.subr.mxu0 0.0
      %3505 = vmatpush1.msra.mxu0 0.0
      %3506 = vmatprep.subr.mxu0 0.0
      %3507 = vmatpush1.msra.mxu0 0.0
      %3508 = vmatprep.subr.mxu0 0.0
      %3509 = vmatpush1.msra.mxu0 0.0
      %3510 = vmatprep.subr.mxu0 0.0
      %3511 = vmatpush1.msra.mxu0 0.0
      %3512 = vmatprep.subr.mxu0 0.0
      %3513 = vmatpush1.msra.mxu0 0.0
      %3514 = vmatprep.subr.mxu0 0.0
      %3515 = vmatpush1.msra.mxu0 0.0
      %3516 = vmatprep.subr.mxu0 0.0
      %3517 = vmatpush1.msra.mxu0 0.0
      %3518 = vmatprep.subr.mxu0 0.0
      %3519 = vmatpush1.msra.mxu0 0.0
      %3520 = vmatprep.subr.mxu0 0.0
      %3521 = vmatpush1.msra.mxu0 0.0
      %3522 = vmatprep.subr.mxu0 0.0
      %3523 = vmatpush1.msra.mxu0 0.0
      %3524 = vmatprep.subr.mxu0 0.0
      %3525 = vmatpush1.msra.mxu0 0.0
      %3526 = vmatprep.subr.mxu0 0.0
      %3527 = vmatpush1.msra.mxu0 0.0
      %3528 = vmatprep.subr.mxu0 0.0
      %3529 = vmatpush1.msra.mxu0 0.0
      %3530 = vmatprep.subr.mxu0 0.0
      %3531 = vmatpush1.msra.mxu0 0.0
      %3532 = vmatprep.subr.mxu0 0.0
      %3533 = vmatpush1.msra.mxu0 %v3495
      %3534 = vmatprep.subr.mxu0 0.0
      %3535 = vmatpush2.msra.mxu0 0.0
      %3536 = vmatprep.subr.mxu0 0.0
      %3537 = vmatpush2.msra.mxu0 0.0
      %3538 = vmatprep.subr.mxu0 0.0
      %3539 = vmatpush2.msra.mxu0 0.0
      %3540 = vmatprep.subr.mxu0 0.0
      %3541 = vmatpush2.msra.mxu0 0.0
      %3542 = vmatprep.subr.mxu0 0.0
      %3543 = vmatpush2.msra.mxu0 0.0
      %3544 = vmatprep.subr.mxu0 0.0
      %3545 = vmatpush2.msra.mxu0 0.0
      %3546 = vmatprep.subr.mxu0 0.0
      %3547 = vmatpush2.msra.mxu0 0.0
      %3548 = vmatprep.subr.mxu0 0.0
      %3549 = vmatpush2.msra.mxu0 0.0
      %3550 = vmatprep.subr.mxu0 0.0
      %3551 = vmatpush2.msra.mxu0 0.0
      %3552 = vmatprep.subr.mxu0 0.0
      %3553 = vmatpush2.msra.mxu0 0.0
      %3554 = vmatprep.subr.mxu0 0.0
      %3555 = vmatpush2.msra.mxu0 0.0
      %3556 = vmatprep.subr.mxu0 0.0
      %3557 = vmatpush2.msra.mxu0 0.0
      %3558 = vmatprep.subr.mxu0 0.0
      %3559 = vmatpush2.msra.mxu0 0.0
      %3560 = vmatprep.subr.mxu0 0.0
      %3561 = vmatpush2.msra.mxu0 0.0
      %3562 = vmatprep.subr.mxu0 0.0
      %3563 = vmatpush2.msra.mxu0 0.0
      %3564 = vmatprep.subr.mxu0 0.0
      %3565 = vmatpush2.msra.mxu0 0.0
      %3566 = vmatprep.mubr.f32.mxu0 0.0
      %3567 = vmatmul.mubr.f32.gmra.mxu0 %v3500
      %v3568 = vpop.f32.mrf.mxu0
      %v3569 = vadd.f32 0.0, %v3568
      %v3570 = vpop.f32.mrf.mxu0
      %3571 = vdwg.mxu0
      %v3572 = vadd.f32 %v3498, 1e-12
      %v3573 = vrcp.pop %v3572
      %v3574 = vmul.f32 %v3569, %v3573
      %v3575 = vld [vmem:[%s8] sm:$0xff]
      %v3576 = vld [vmem:[%s8 + $0x8] sm:$0xff]
      %v3577 = vld [vmem:[%s8 + $0x10] sm:$0xff]
      %v3578 = vld [vmem:[%s8 + $0x18] sm:$0xff]
      %v3579 = vld [vmem:[%s8 + $0x20] sm:$0xff]
      %v3580 = vld [vmem:[%s8 + $0x28] sm:$0xff]
      %v3581 = vld [vmem:[%s8 + $0x30] sm:$0xff]
      %v3582 = vld [vmem:[%s8 + $0x38] sm:$0xff]
      %v3584 = vsel %vm486, %v3574, 0
      %3586 = vmatprep.subr.mxu0 0.0
      %3587 = vmatpush1.msra.mxu0 0.0
      %3588 = vmatprep.subr.mxu0 0.0
      %3589 = vmatpush1.msra.mxu0 0.0
      %3590 = vmatprep.subr.mxu0 0.0
      %3591 = vmatpush1.msra.mxu0 0.0
      %3592 = vmatprep.subr.mxu0 0.0
      %3593 = vmatpush1.msra.mxu0 0.0
      %3594 = vmatprep.subr.mxu0 0.0
      %3595 = vmatpush1.msra.mxu0 0.0
      %3596 = vmatprep.subr.mxu0 0.0
      %3597 = vmatpush1.msra.mxu0 0.0
      %3598 = vmatprep.subr.mxu0 0.0
      %3599 = vmatpush1.msra.mxu0 0.0
      %3600 = vmatprep.subr.mxu0 0.0
      %3601 = vmatpush1.msra.mxu0 0.0
      %3602 = vmatprep.subr.mxu0 0.0
      %3603 = vmatpush1.msra.mxu0 0.0
      %3604 = vmatprep.subr.mxu0 0.0
      %3605 = vmatpush1.msra.mxu0 0.0
      %3606 = vmatprep.subr.mxu0 0.0
      %3607 = vmatpush1.msra.mxu0 0.0
      %3608 = vmatprep.subr.mxu0 0.0
      %3609 = vmatpush1.msra.mxu0 0.0
      %3610 = vmatprep.subr.mxu0 0.0
      %3611 = vmatpush1.msra.mxu0 %v3582
      %3612 = vmatprep.subr.mxu0 0.0
      %3613 = vmatpush1.msra.mxu0 %v3581
      %3614 = vmatprep.subr.mxu0 0.0
      %3615 = vmatpush1.msra.mxu0 %v3580
      %3616 = vmatprep.subr.mxu0 0.0
      %3617 = vmatpush1.msra.mxu0 %v3579
      %3618 = vmatprep.subr.mxu0 0.0
      %3619 = vmatpush2.msra.mxu0 0.0
      %3620 = vmatprep.subr.mxu0 0.0
      %3621 = vmatpush2.msra.mxu0 0.0
      %3622 = vmatprep.subr.mxu0 0.0
      %3623 = vmatpush2.msra.mxu0 0.0
      %3624 = vmatprep.subr.mxu0 0.0
      %3625 = vmatpush2.msra.mxu0 0.0
      %3626 = vmatprep.subr.mxu0 0.0
      %3627 = vmatpush2.msra.mxu0 0.0
      %3628 = vmatprep.subr.mxu0 0.0
      %3629 = vmatpush2.msra.mxu0 0.0
      %3630 = vmatprep.subr.mxu0 0.0
      %3631 = vmatpush2.msra.mxu0 0.0
      %3632 = vmatprep.subr.mxu0 0.0
      %3633 = vmatpush2.msra.mxu0 0.0
      %3634 = vmatprep.subr.mxu0 0.0
      %3635 = vmatpush2.msra.mxu0 0.0
      %3636 = vmatprep.subr.mxu0 0.0
      %3637 = vmatpush2.msra.mxu0 0.0
      %3638 = vmatprep.subr.mxu0 0.0
      %3639 = vmatpush2.msra.mxu0 0.0
      %3640 = vmatprep.subr.mxu0 0.0
      %3641 = vmatpush2.msra.mxu0 0.0
      %3642 = vmatprep.subr.mxu0 0.0
      %3643 = vmatpush2.msra.mxu0 0.0
      %3644 = vmatprep.subr.mxu0 0.0
      %3645 = vmatpush2.msra.mxu0 0.0
      %3646 = vmatprep.subr.mxu0 0.0
      %3647 = vmatpush2.msra.mxu0 0.0
      %3648 = vmatprep.subr.mxu0 0.0
      %3649 = vmatpush2.msra.mxu0 0.0
      %3650 = vmatprep.mubr.f32.mxu0 0.0
      %3651 = vmatmul.mubr.f32.gmra.mxu0 %v3584
      %v3652 = vpop.f32.mrf.mxu0
      %v3653 = vadd.f32 0.0, %v3652
      %v3654 = vpop.f32.mrf.mxu0
      %3655 = vdwg.mxu0
      %v3657 = vsel %vm486, %v3495, 0
      %3659 = vmatprep.subr.mxu0 0.0
      %3660 = vmatpush1.msra.mxu0 0.0
      %3661 = vmatprep.subr.mxu0 0.0
      %3662 = vmatpush1.msra.mxu0 0.0
      %3663 = vmatprep.subr.mxu0 0.0
      %3664 = vmatpush1.msra.mxu0 0.0
      %3665 = vmatprep.subr.mxu0 0.0
      %3666 = vmatpush1.msra.mxu0 0.0
      %3667 = vmatprep.subr.mxu0 0.0
      %3668 = vmatpush1.msra.mxu0 0.0
      %3669 = vmatprep.subr.mxu0 0.0
      %3670 = vmatpush1.msra.mxu0 0.0
      %3671 = vmatprep.subr.mxu0 0.0
      %3672 = vmatpush1.msra.mxu0 0.0
      %3673 = vmatprep.subr.mxu0 0.0
      %3674 = vmatpush1.msra.mxu0 0.0
      %3675 = vmatprep.subr.mxu0 0.0
      %3676 = vmatpush1.msra.mxu0 0.0
      %3677 = vmatprep.subr.mxu0 0.0
      %3678 = vmatpush1.msra.mxu0 0.0
      %3679 = vmatprep.subr.mxu0 0.0
      %3680 = vmatpush1.msra.mxu0 0.0
      %3681 = vmatprep.subr.mxu0 0.0
      %3682 = vmatpush1.msra.mxu0 0.0
      %3683 = vmatprep.subr.mxu0 0.0
      %3684 = vmatpush1.msra.mxu0 %v3578
      %3685 = vmatprep.subr.mxu0 0.0
      %3686 = vmatpush1.msra.mxu0 %v3577
      %3687 = vmatprep.subr.mxu0 0.0
      %3688 = vmatpush1.msra.mxu0 %v3576
      %3689 = vmatprep.subr.mxu0 0.0
      %3690 = vmatpush1.msra.mxu0 %v3575
      %3691 = vmatprep.subr.mxu0 0.0
      %3692 = vmatpush2.msra.mxu0 0.0
      %3693 = vmatprep.subr.mxu0 0.0
      %3694 = vmatpush2.msra.mxu0 0.0
      %3695 = vmatprep.subr.mxu0 0.0
      %3696 = vmatpush2.msra.mxu0 0.0
      %3697 = vmatprep.subr.mxu0 0.0
      %3698 = vmatpush2.msra.mxu0 0.0
      %3699 = vmatprep.subr.mxu0 0.0
      %3700 = vmatpush2.msra.mxu0 0.0
      %3701 = vmatprep.subr.mxu0 0.0
      %3702 = vmatpush2.msra.mxu0 0.0
      %3703 = vmatprep.subr.mxu0 0.0
      %3704 = vmatpush2.msra.mxu0 0.0
      %3705 = vmatprep.subr.mxu0 0.0
      %3706 = vmatpush2.msra.mxu0 0.0
      %3707 = vmatprep.subr.mxu0 0.0
      %3708 = vmatpush2.msra.mxu0 0.0
      %3709 = vmatprep.subr.mxu0 0.0
      %3710 = vmatpush2.msra.mxu0 0.0
      %3711 = vmatprep.subr.mxu0 0.0
      %3712 = vmatpush2.msra.mxu0 0.0
      %3713 = vmatprep.subr.mxu0 0.0
      %3714 = vmatpush2.msra.mxu0 0.0
      %3715 = vmatprep.subr.mxu0 0.0
      %3716 = vmatpush2.msra.mxu0 0.0
      %3717 = vmatprep.subr.mxu0 0.0
      %3718 = vmatpush2.msra.mxu0 0.0
      %3719 = vmatprep.subr.mxu0 0.0
      %3720 = vmatpush2.msra.mxu0 0.0
      %3721 = vmatprep.subr.mxu0 0.0
      %3722 = vmatpush2.msra.mxu0 0.0
      %3723 = vmatprep.mubr.f32.mxu0 0.0
      %3724 = vmatmul.mubr.f32.gmra.mxu0 %v3657
      %v3725 = vpop.f32.mrf.mxu0
      %v3726 = vadd.f32 %v3653, %v3725
      %v3727 = vpop.f32.mrf.mxu0
      %3728 = vdwg.mxu0
      %v3729 = vrot.slane %v3726, 4
      %v3730 = vmax.f32 %v3726, %v3729
      %v3731 = vrot.slane %v3730, 2
      %v3732 = vmax.f32 %v3730, %v3731
      %v3733 = vrot.slane %v3732, 1
      %v3734 = vmax.f32 %v3732, %v3733
      %v3735 = vld [vmem:[%s9] sm:$0xff]
      %v3736 = vld [vmem:[%s9 + $0x8] sm:$0xff]
      %v3737 = vld [vmem:[%s9 + $0x10] sm:$0xff]
      %v3738 = vld [vmem:[%s9 + $0x18] sm:$0xff]
      %v3739 = vld [vmem:[%s9 + $0x20] sm:$0xff]
      %v3740 = vld [vmem:[%s9 + $0x28] sm:$0xff]
      %v3741 = vld [vmem:[%s9 + $0x30] sm:$0xff]
      %v3742 = vld [vmem:[%s9 + $0x38] sm:$0xff]
      %v3743 = vld [vmem:[%s9 + $0x40] sm:$0xff]
      %v3744 = vld [vmem:[%s9 + $0x48] sm:$0xff]
      %v3745 = vld [vmem:[%s9 + $0x50] sm:$0xff]
      %v3746 = vld [vmem:[%s9 + $0x58] sm:$0xff]
      %v3747 = vld [vmem:[%s9 + $0x60] sm:$0xff]
      %v3748 = vld [vmem:[%s9 + $0x68] sm:$0xff]
      %v3749 = vld [vmem:[%s9 + $0x70] sm:$0xff]
      %v3750 = vld [vmem:[%s9 + $0x78] sm:$0xff]
      %v3751 = vld [vmem:[%s10] sm:$0x1]
      %3752 = vmatprep.subr.mxu0 0.0
      %3753 = vmatpush1.msra.mxu0 %v3750
      %3754 = vmatprep.subr.mxu0 0.0
      %3755 = vmatpush1.msra.mxu0 %v3749
      %3756 = vmatprep.subr.mxu0 0.0
      %3757 = vmatpush1.msra.mxu0 %v3748
      %3758 = vmatprep.subr.mxu0 0.0
      %3759 = vmatpush1.msra.mxu0 %v3747
      %3760 = vmatprep.subr.mxu0 0.0
      %3761 = vmatpush1.msra.mxu0 %v3746
      %3762 = vmatprep.subr.mxu0 0.0
      %3763 = vmatpush1.msra.mxu0 %v3745
      %3764 = vmatprep.subr.mxu0 0.0
      %3765 = vmatpush1.msra.mxu0 %v3744
      %3766 = vmatprep.subr.mxu0 0.0
      %3767 = vmatpush1.msra.mxu0 %v3743
      %3768 = vmatprep.subr.mxu0 0.0
      %3769 = vmatpush1.msra.mxu0 %v3742
      %3770 = vmatprep.subr.mxu0 0.0
      %3771 = vmatpush1.msra.mxu0 %v3741
      %3772 = vmatprep.subr.mxu0 0.0
      %3773 = vmatpush1.msra.mxu0 %v3740
      %3774 = vmatprep.subr.mxu0 0.0
      %3775 = vmatpush1.msra.mxu0 %v3739
      %3776 = vmatprep.subr.mxu0 0.0
      %3777 = vmatpush1.msra.mxu0 %v3738
      %3778 = vmatprep.subr.mxu0 0.0
      %3779 = vmatpush1.msra.mxu0 %v3737
      %3780 = vmatprep.subr.mxu0 0.0
      %3781 = vmatpush1.msra.mxu0 %v3736
      %3782 = vmatprep.subr.mxu0 0.0
      %3783 = vmatpush1.msra.mxu0 %v3735
      %3784 = vmatprep.subr.mxu0 0.0
      %3785 = vmatpush2.msra.mxu0 0.0
      %3786 = vmatprep.subr.mxu0 0.0
      %3787 = vmatpush2.msra.mxu0 0.0
      %3788 = vmatprep.subr.mxu0 0.0
      %3789 = vmatpush2.msra.mxu0 0.0
      %3790 = vmatprep.subr.mxu0 0.0
      %3791 = vmatpush2.msra.mxu0 0.0
      %3792 = vmatprep.subr.mxu0 0.0
      %3793 = vmatpush2.msra.mxu0 0.0
      %3794 = vmatprep.subr.mxu0 0.0
      %3795 = vmatpush2.msra.mxu0 0.0
      %3796 = vmatprep.subr.mxu0 0.0
      %3797 = vmatpush2.msra.mxu0 0.0
      %3798 = vmatprep.subr.mxu0 0.0
      %3799 = vmatpush2.msra.mxu0 0.0
      %3800 = vmatprep.subr.mxu0 0.0
      %3801 = vmatpush2.msra.mxu0 0.0
      %3802 = vmatprep.subr.mxu0 0.0
      %3803 = vmatpush2.msra.mxu0 0.0
      %3804 = vmatprep.subr.mxu0 0.0
      %3805 = vmatpush2.msra.mxu0 0.0
      %3806 = vmatprep.subr.mxu0 0.0
      %3807 = vmatpush2.msra.mxu0 0.0
      %3808 = vmatprep.subr.mxu0 0.0
      %3809 = vmatpush2.msra.mxu0 0.0
      %3810 = vmatprep.subr.mxu0 0.0
      %3811 = vmatpush2.msra.mxu0 0.0
      %3812 = vmatprep.subr.mxu0 0.0
      %3813 = vmatpush2.msra.mxu0 0.0
      %3814 = vmatprep.subr.mxu0 0.0
      %3815 = vmatpush2.msra.mxu0 0.0
      %3816 = vmatprep.mubr.f32.mxu0 0.0
      %3817 = vmatmul.mubr.f32.gmra.mxu0 %v3734
      %v3818 = vpop.f32.mrf.mxu0
      %v3819 = vadd.f32 %v3751, %v3818
      %v3820 = vpop.f32.mrf.mxu0
      %3821 = vdwg.mxu0
      %v3822 = vmax.f32 %v3819, 0.0
      %v3823 = vld [vmem:[%s11] sm:$0xff]
      %v3824 = vld [vmem:[%s11 + $0x8] sm:$0xff]
      %v3825 = vld [vmem:[%s11 + $0x10] sm:$0xff]
      %v3826 = vld [vmem:[%s11 + $0x18] sm:$0xff]
      %v3827 = vld [vmem:[%s11 + $0x20] sm:$0xff]
      %v3828 = vld [vmem:[%s11 + $0x28] sm:$0xff]
      %v3829 = vld [vmem:[%s11 + $0x30] sm:$0xff]
      %v3830 = vld [vmem:[%s11 + $0x38] sm:$0xff]
      %v3831 = vld [vmem:[%s11 + $0x40] sm:$0xff]
      %v3832 = vld [vmem:[%s11 + $0x48] sm:$0xff]
      %v3833 = vld [vmem:[%s11 + $0x50] sm:$0xff]
      %v3834 = vld [vmem:[%s11 + $0x58] sm:$0xff]
      %v3835 = vld [vmem:[%s11 + $0x60] sm:$0xff]
      %v3836 = vld [vmem:[%s11 + $0x68] sm:$0xff]
      %v3837 = vld [vmem:[%s11 + $0x70] sm:$0xff]
      %v3838 = vld [vmem:[%s11 + $0x78] sm:$0xff]
      %v3839 = vld [vmem:[#allocation2] sm:$0x1]
      %3840 = vmatprep.subr.mxu0 0.0
      %3841 = vmatpush1.msra.mxu0 %v3838
      %3842 = vmatprep.subr.mxu0 0.0
      %3843 = vmatpush1.msra.mxu0 %v3837
      %3844 = vmatprep.subr.mxu0 0.0
      %3845 = vmatpush1.msra.mxu0 %v3836
      %3846 = vmatprep.subr.mxu0 0.0
      %3847 = vmatpush1.msra.mxu0 %v3835
      %3848 = vmatprep.subr.mxu0 0.0
      %3849 = vmatpush1.msra.mxu0 %v3834
      %3850 = vmatprep.subr.mxu0 0.0
      %3851 = vmatpush1.msra.mxu0 %v3833
      %3852 = vmatprep.subr.mxu0 0.0
      %3853 = vmatpush1.msra.mxu0 %v3832
      %3854 = vmatprep.subr.mxu0 0.0
      %3855 = vmatpush1.msra.mxu0 %v3831
      %3856 = vmatprep.subr.mxu0 0.0
      %3857 = vmatpush1.msra.mxu0 %v3830
      %3858 = vmatprep.subr.mxu0 0.0
      %3859 = vmatpush1.msra.mxu0 %v3829
      %3860 = vmatprep.subr.mxu0 0.0
      %3861 = vmatpush1.msra.mxu0 %v3828
      %3862 = vmatprep.subr.mxu0 0.0
      %3863 = vmatpush1.msra.mxu0 %v3827
      %3864 = vmatprep.subr.mxu0 0.0
      %3865 = vmatpush1.msra.mxu0 %v3826
      %3866 = vmatprep.subr.mxu0 0.0
      %3867 = vmatpush1.msra.mxu0 %v3825
      %3868 = vmatprep.subr.mxu0 0.0
      %3869 = vmatpush1.msra.mxu0 %v3824
      %3870 = vmatprep.subr.mxu0 0.0
      %3871 = vmatpush1.msra.mxu0 %v3823
      %3872 = vmatprep.subr.mxu0 0.0
      %3873 = vmatpush2.msra.mxu0 0.0
      %3874 = vmatprep.subr.mxu0 0.0
      %3875 = vmatpush2.msra.mxu0 0.0
      %3876 = vmatprep.subr.mxu0 0.0
      %3877 = vmatpush2.msra.mxu0 0.0
      %3878 = vmatprep.subr.mxu0 0.0
      %3879 = vmatpush2.msra.mxu0 0.0
      %3880 = vmatprep.subr.mxu0 0.0
      %3881 = vmatpush2.msra.mxu0 0.0
      %3882 = vmatprep.subr.mxu0 0.0
      %3883 = vmatpush2.msra.mxu0 0.0
      %3884 = vmatprep.subr.mxu0 0.0
      %3885 = vmatpush2.msra.mxu0 0.0
      %3886 = vmatprep.subr.mxu0 0.0
      %3887 = vmatpush2.msra.mxu0 0.0
      %3888 = vmatprep.subr.mxu0 0.0
      %3889 = vmatpush2.msra.mxu0 0.0
      %3890 = vmatprep.subr.mxu0 0.0
      %3891 = vmatpush2.msra.mxu0 0.0
      %3892 = vmatprep.subr.mxu0 0.0
      %3893 = vmatpush2.msra.mxu0 0.0
      %3894 = vmatprep.subr.mxu0 0.0
      %3895 = vmatpush2.msra.mxu0 0.0
      %3896 = vmatprep.subr.mxu0 0.0
      %3897 = vmatpush2.msra.mxu0 0.0
      %3898 = vmatprep.subr.mxu0 0.0
      %3899 = vmatpush2.msra.mxu0 0.0
      %3900 = vmatprep.subr.mxu0 0.0
      %3901 = vmatpush2.msra.mxu0 0.0
      %3902 = vmatprep.subr.mxu0 0.0
      %3903 = vmatpush2.msra.mxu0 0.0
      %3904 = vmatprep.mubr.f32.mxu0 0.0
      %3905 = vmatmul.mubr.f32.gmra.mxu0 %v3822
      %v3906 = vpop.f32.mrf.mxu0
      %v3907 = vadd.f32 %v3839, %v3906
      %v3908 = vpop.f32.mrf.mxu0
      %3909 = vdwg.mxu0
      %vm3910 = vcmask 0
      %3911 = vst.msk [vmem:[%s472] sm:$0x1] %vm3910, %v3907
      %p3912 = scmp.lt.s32.totalorder %s26, 1
      %s3913 = scalar_select %p3912, %s26, 1
      %s3914 = scalar_lea.vmem %s13, %s3913
      // Predicated region
      $region73: #{se3_transformer_forward.1} parent=71 // pred_check
        %p3915 = pneg %p332
      $region74: #{se3_transformer_forward.1} parent=71 // pred_check_branch
        %3917 = sbr.rel (%p3915) target = $region76
      $region75: #{se3_transformer_forward.1} parent=71 // pred_region
        _
      $region76: #{se3_transformer_forward.1} parent=71 // pred_fallthru
        _
    $region72: #{se3_transformer_forward.1} parent=5 // pred_fallthru
      _
    %p3918 = scmp.le.s32.totalorder 2, %s21
    // Predicated region
    $region77: #{se3_transformer_forward.1} parent=5 // pred_check
      %p3919 = pneg %p3918
    $region78: #{se3_transformer_forward.1} parent=5 // pred_check_branch
      %3921 = sbr.rel (%p3919) target = $region80
    $region79: #{se3_transformer_forward.1} parent=5 // pred_region
      %s3922 = ssub.s32 %s21, 2
      // Predicated region
      $region81: #{se3_transformer_forward.1} parent=79 // pred_check
        %p3923 = pneg %p338
      $region82: #{se3_transformer_forward.1} parent=79 // pred_check_branch
        %3925 = sbr.rel (%p3923) target = $region84
      $region83: #{se3_transformer_forward.1} parent=79 // pred_region
        %p3926 = scmp.lt.s32.totalorder %s27, 1
        %s3927 = scalar_select %p3926, %s27, 1
        %s3928 = scalar_lea.vmem %s13, %s3927
      $region84: #{se3_transformer_forward.1} parent=79 // pred_fallthru
        _
    $region80: #{se3_transformer_forward.1} parent=5 // pred_fallthru
      _
  $region6: #{se3_transformer_forward.1} parent=0 // loop_footer
    %s25 = sadd.s32 1, %s21
  $region7: #{se3_transformer_forward.1} parent=0 // loop_footer_branch
    %20 = sbr.rel target = $region3
  $region8: #{se3_transformer_forward.1} parent=0 // loop_exit
    _

</llo_original>
